<compile_context>
chip_gen: v6e
topology: v6e:2x2x1
jax: 0.10.0
libtpu: 0.0.40
codegen_flags: <defaults>
</compile_context>

<pallas_src>
import jax
import jax.numpy as jnp
import numpy as np
from jax import lax
from jax.experimental import pallas as pl
from jax.experimental.pallas import tpu as pltpu


def half_dslayer_kernel(x_ref, w1_ref, b1_ref, w2_ref, b2_ref, out_ref,
                        xpad_ref):
    # x_ref   : (B, H, W, Cin)       input block (bf16)
    # w1_ref  : (9, Cin, Cmid)       3x3 conv weights, tap-major (bf16)
    # b1_ref  : (1, Cmid)            3x3 conv bias (f32)
    # w2_ref  : (1, Cmid)            1x1 conv weights (f32)
    # b2_ref  : (1,)                 1x1 conv bias (f32, SMEM)
    # out_ref : (1, 1, B*H*W)        lane-dense prediction row (f32)
    # xpad_ref: (B, H+2, W+2, Cin)   VMEM scratch: zero-haloed input copy
    B, H, W, Cin = x_ref.shape
    Cmid = w1_ref.shape[2]
    M = B * H * W

    # --- zero only the 1-pixel halo strips (never the whole buffer) --------
    zrow = jnp.zeros((B, 1, W + 2, Cin), xpad_ref.dtype)
    xpad_ref[:, 0:1, :, :] = zrow
    xpad_ref[:, H + 1:H + 2, :, :] = zrow
    zcol = jnp.zeros((B, H, 1, Cin), xpad_ref.dtype)
    xpad_ref[:, 1:H + 1, 0:1, :] = zcol
    xpad_ref[:, 1:H + 1, W + 1:W + 2, :] = zcol

    # --- interior copy: the only large VMEM store in the kernel ------------
    xpad_ref[:, 1:H + 1, 1:W + 1, :] = x_ref[...]

    # --- 3x3 conv: nine accumulated lane-aligned MXU dots, f32 accumulation -
    acc = jnp.zeros((M, Cmid), jnp.float32)
    for dy in range(3):
        for dx in range(3):
            k = dy * 3 + dx
            xwin = xpad_ref[:, dy:dy + H, dx:dx + W, :].reshape(M, Cin)
            acc = acc + jnp.dot(xwin, w1_ref[k],
                                preferred_element_type=jnp.float32)

    h = jnp.maximum(acc + b1_ref[...], 0.0)                 # bias + ReLU (f32)

    # --- 1x1 conv: one small dot producing the lane-dense (1, M) row --------
    pred = lax.dot_general(
        w2_ref[...], h,
        dimension_numbers=(((1,), (1,)), ((), ())),         # contract Cmid
        preferred_element_type=jnp.float32)                  # (1, M)

    out_ref[...] = (pred + b2_ref[0]).reshape(1, 1, M)


def _vmem_capacity_bytes():
    try:
        cap = getattr(pltpu.get_tpu_info(), "vmem_capacity_bytes", None)
        if cap:
            return int(cap)
    except Exception:
        pass
    return 64 << 20  # conservative default (v7x per-TensorCore VMEM)


def _pick_block_n(n, per_image_bytes, budget_bytes):
    """Largest divisor of n whose VMEM footprint fits the budget, preferring
    an even number of grid steps >= 2 (v7x two-TensorCore sharding)."""
    divisors = [d for d in range(1, n + 1) if n % d == 0]
    fits = [d for d in divisors if d * per_image_bytes <= budget_bytes]
    if not fits:
        # TODO(synk): add an H-tile grid axis so one oversized image can be
        # split; for now fall back to one image per step.
        return 1
    even = [d for d in fits if (n // d) >= 2 and (n // d) % 2 == 0]
    pool = even if even else fits
    return max(pool)


def half_dslayer(x_nchw, w1, b1, w2, b2, *, block_n=None,
                 compute_dtype=jnp.bfloat16):
    """x_nchw: (N, Cin, H, W) f32.
    w1: (3, 3, Cin, Cmid) HWIO (PyTorch OIHW weights: .permute(2, 3, 1, 0)).
    b1: (Cmid,), w2: (Cmid,), b2: (1,).  Returns (N, 1, H, W) f32."""
    N, Cin, H, W = x_nchw.shape
    assert w1.ndim == 4 and tuple(w1.shape[:3]) == (3, 3, Cin), (
        "w1 must be HWIO (3,3,Cin,Cmid); permute PyTorch OIHW with (2,3,1,0)")
    Cmid = w1.shape[3]

    # Per-generation VMEM budget for picking the batch tile.
    vmem_cap = _vmem_capacity_bytes()
    budget = int(vmem_cap * 0.5)                 # headroom for compiler temps
    bf = jnp.dtype(compute_dtype).itemsize
    per_img = (2 * H * W * Cin * bf              # x block, double-buffered
               + (H + 2) * (W + 2) * Cin * bf    # zero-haloed scratch
               + 2 * H * W * 4                   # out row, double-buffered
               + 3 * H * W * Cmid * 4)           # f32 acc / h temporaries
    if block_n is None:
        block_n = _pick_block_n(N, per_img, budget)
    assert N % block_n == 0, (N, block_n)
    G = N // block_n
    M = block_n * H * W

    # bf16 cast BEFORE the NCHW->NHWC transpose: halves that extra HBM pass.
    # TODO(synk): accepting NHWC activations upstream would remove it fully.
    x_nhwc = jnp.transpose(x_nchw.astype(compute_dtype), (0, 2, 3, 1))
    w1_flat = w1.reshape(9, Cin, Cmid).astype(compute_dtype)
    b1_2d = b1.reshape(1, Cmid).astype(jnp.float32)
    w2_2d = w2.reshape(1, Cmid).astype(jnp.float32)
    b2_1d = b2.reshape(1).astype(jnp.float32)

    cost = pl.CostEstimate(
        flops=int(2 * N * H * W * (9 * Cin * Cmid + Cmid)),
        transcendentals=0,
        bytes_accessed=int(N * H * W * Cin * bf + 9 * Cin * Cmid * bf
                           + (2 * Cmid + 1) * 4 + N * H * W * 4),
    )

    vmem_limit = max(32 << 20, min(int(vmem_cap * 3 // 4), 100 << 20))

    out = pl.pallas_call(
        half_dslayer_kernel,
        out_shape=jax.ShapeDtypeStruct((G, 1, M), jnp.float32),
        grid_spec=pltpu.PrefetchScalarGridSpec(
            num_scalar_prefetch=0,
            grid=(G,),
            in_specs=[
                pl.BlockSpec((block_n, H, W, Cin), lambda g: (g, 0, 0, 0)),
                pl.BlockSpec((9, Cin, Cmid), lambda g: (0, 0, 0)),
                pl.BlockSpec((1, Cmid), lambda g: (0, 0)),
                pl.BlockSpec((1, Cmid), lambda g: (0, 0)),
                pl.BlockSpec(memory_space=pltpu.MemorySpace.SMEM),
            ],
            out_specs=pl.BlockSpec((1, 1, M), lambda g: (g, 0, 0)),
            scratch_shapes=[
                pltpu.VMEM((block_n, H + 2, W + 2, Cin), compute_dtype)],
        ),
        compiler_params=pltpu.CompilerParams(
            dimension_semantics=("parallel",),
            vmem_limit_bytes=vmem_limit),
        cost_estimate=cost,
    )(x_nhwc, w1_flat, b1_2d, w2_2d, b2_1d)

    # Free metadata reshape back to NCHW (N, 1, H, W).
    return out.reshape(N, 1, H, W)


def reference(x_nchw, w1, b1, w2, b2):
    """Pure-JAX f32 reference using lax.conv (matches PyTorch semantics)."""
    Cmid = w1.shape[3]
    x = jnp.transpose(x_nchw, (0, 2, 3, 1))  # NHWC
    y = lax.conv_general_dilated(
        x, w1, window_strides=(1, 1), padding="SAME",
        dimension_numbers=("NHWC", "HWIO", "NHWC")) + b1
    y = jnp.maximum(y, 0.0)
    z = lax.conv_general_dilated(
        y, w2.reshape(1, 1, Cmid, 1), window_strides=(1, 1), padding="SAME",
        dimension_numbers=("NHWC", "HWIO", "NHWC")) + b2
    return jnp.transpose(z, (0, 3, 1, 2))  # NCHW


if __name__ == "__main__":
    # Small shapes consistent with the module (in_channel must be /4-able).
    N, Cin, H, W = 2, 32, 16, 16
    Cmid = Cin // 4

    key = jax.random.PRNGKey(0)
    k_x, k_w1, k_b1, k_w2, k_b2 = jax.random.split(key, 5)

    x = jax.random.normal(k_x, (N, Cin, H, W), dtype=jnp.float32)
    # Deterministic synthetic parameters (HWIO layout for conv weights).
    w1 = jax.random.normal(k_w1, (3, 3, Cin, Cmid), dtype=jnp.float32) * 0.05
    b1 = jax.random.normal(k_b1, (Cmid,), dtype=jnp.float32) * 0.05
    w2 = jax.random.normal(k_w2, (Cmid,), dtype=jnp.float32) * 0.05
    b2 = jax.random.normal(k_b2, (1,), dtype=jnp.float32) * 0.05

    out = jax.block_until_ready(half_dslayer(x, w1, b1, w2, b2))
    ref = jax.block_until_ready(reference(x, w1, b1, w2, b2))

    assert out.shape == (N, 1, H, W), out.shape
    # bf16 inputs to the MXU -> slightly loosened tolerance vs. the f32 ref.
    np.testing.assert_allclose(np.asarray(out), np.asarray(ref),
                               rtol=2e-2, atol=2e-2)
    print("KERNEL_OK")
</pallas_src>

<mosaic_0001>
module attributes {stable_mosaic.version = 11 : i64} {
  func.func @half_dslayer_kernel(%arg0: i32, %arg1: memref<1x16x16x32xbf16, #tpu.memory_space<vmem>>, %arg2: memref<9x32x8xbf16, #tpu.memory_space<vmem>>, %arg3: memref<1x8xf32, #tpu.memory_space<vmem>>, %arg4: memref<1x8xf32, #tpu.memory_space<vmem>>, %arg5: memref<1xf32, #tpu.memory_space<smem>>, %arg6: memref<1x1x256xf32, #tpu.memory_space<vmem>>, %arg7: memref<1x18x18x32xbf16, #tpu.memory_space<vmem>>) attributes {dimension_semantics = [#tpu.dimension_semantics<parallel>], iteration_bounds = array<i64: 2>, scalar_prefetch = 0 : i64, scratch_operands = 1 : i64, tpu.core_type = #tpu.core_type<tc>, window_params = [{transform_indices = @transform_0, window_bounds = array<i64: 1, 16, 16, 32>}, {pipeline_mode = #tpu.pipeline_mode<synchronous>, transform_indices = @transform_1, window_bounds = array<i64: 9, 32, 8>}, {pipeline_mode = #tpu.pipeline_mode<synchronous>, transform_indices = @transform_2, window_bounds = array<i64: 1, 8>}, {pipeline_mode = #tpu.pipeline_mode<synchronous>, transform_indices = @transform_3, window_bounds = array<i64: 1, 8>}, {transform_indices = @transform_4, window_bounds = array<i64: 1>}, {transform_indices = @transform_5, window_bounds = array<i64: 1, 1, 256>}]} {
    %cst = arith.constant 0.000000e+00 : bf16
    %0 = vector.broadcast %cst : bf16 to vector<1x1x18x32xbf16>
    %c0 = arith.constant 0 : index
    %c0_0 = arith.constant 0 : index
    %c0_1 = arith.constant 0 : index
    %c0_2 = arith.constant 0 : index
    %1 = vector.load %arg7[%c0, %c0_0, %c0_1, %c0_2] : memref<1x18x18x32xbf16, #tpu.memory_space<vmem>>, vector<1x1x18x32xbf16>
    tpu.vector_store %arg7[%c0, %c0_0, %c0_1, %c0_2], %0 {strides = array<i32>} : memref<1x18x18x32xbf16, #tpu.memory_space<vmem>>, vector<1x1x18x32xbf16>,
    %c0_3 = arith.constant 0 : index
    %c17 = arith.constant 17 : index
    %c0_4 = arith.constant 0 : index
    %c0_5 = arith.constant 0 : index
    %2 = vector.load %arg7[%c0_3, %c17, %c0_4, %c0_5] : memref<1x18x18x32xbf16, #tpu.memory_space<vmem>>, vector<1x1x18x32xbf16>
    tpu.vector_store %arg7[%c0_3, %c17, %c0_4, %c0_5], %0 {strides = array<i32>} : memref<1x18x18x32xbf16, #tpu.memory_space<vmem>>, vector<1x1x18x32xbf16>,
    %cst_6 = arith.constant 0.000000e+00 : bf16
    %3 = vector.broadcast %cst_6 : bf16 to vector<1x16x1x32xbf16>
    %c0_7 = arith.constant 0 : index
    %c1 = arith.constant 1 : index
    %c0_8 = arith.constant 0 : index
    %c0_9 = arith.constant 0 : index
    %4 = vector.load %arg7[%c0_7, %c1, %c0_8, %c0_9] : memref<1x18x18x32xbf16, #tpu.memory_space<vmem>>, vector<1x16x1x32xbf16>
    tpu.vector_store %arg7[%c0_7, %c1, %c0_8, %c0_9], %3 {strides = array<i32>} : memref<1x18x18x32xbf16, #tpu.memory_space<vmem>>, vector<1x16x1x32xbf16>,
    %c0_10 = arith.constant 0 : index
    %c1_11 = arith.constant 1 : index
    %c17_12 = arith.constant 17 : index
    %c0_13 = arith.constant 0 : index
    %5 = vector.load %arg7[%c0_10, %c1_11, %c17_12, %c0_13] : memref<1x18x18x32xbf16, #tpu.memory_space<vmem>>, vector<1x16x1x32xbf16>
    tpu.vector_store %arg7[%c0_10, %c1_11, %c17_12, %c0_13], %3 {strides = array<i32>} : memref<1x18x18x32xbf16, #tpu.memory_space<vmem>>, vector<1x16x1x32xbf16>,
    %c0_14 = arith.constant 0 : index
    %c0_15 = arith.constant 0 : index
    %c0_16 = arith.constant 0 : index
    %c0_17 = arith.constant 0 : index
    %6 = vector.load %arg1[%c0_14, %c0_15, %c0_16, %c0_17] : memref<1x16x16x32xbf16, #tpu.memory_space<vmem>>, vector<1x16x16x32xbf16>
    %c0_18 = arith.constant 0 : index
    %c1_19 = arith.constant 1 : index
    %c1_20 = arith.constant 1 : index
    %c0_21 = arith.constant 0 : index
    %7 = vector.load %arg7[%c0_18, %c1_19, %c1_20, %c0_21] : memref<1x18x18x32xbf16, #tpu.memory_space<vmem>>, vector<1x16x16x32xbf16>
    tpu.vector_store %arg7[%c0_18, %c1_19, %c1_20, %c0_21], %6 {strides = array<i32>} : memref<1x18x18x32xbf16, #tpu.memory_space<vmem>>, vector<1x16x16x32xbf16>,
    %cst_22 = arith.constant 0.000000e+00 : f32
    %8 = vector.broadcast %cst_22 : f32 to vector<256x8xf32>
    %c0_23 = arith.constant 0 : index
    %c0_24 = arith.constant 0 : index
    %c0_25 = arith.constant 0 : index
    %c0_26 = arith.constant 0 : index
    %9 = vector.load %arg7[%c0_23, %c0_24, %c0_25, %c0_26] : memref<1x18x18x32xbf16, #tpu.memory_space<vmem>>, vector<1x16x16x32xbf16>
    %10 = vector.shape_cast %9 : vector<1x16x16x32xbf16> to vector<256x32xbf16>
    %c0_27 = arith.constant 0 : index
    %c0_28 = arith.constant 0 : index
    %c0_29 = arith.constant 0 : index
    %11 = vector.load %arg2[%c0_27, %c0_28, %c0_29] : memref<9x32x8xbf16, #tpu.memory_space<vmem>>, vector<1x32x8xbf16>
    %12 = vector.shape_cast %11 : vector<1x32x8xbf16> to vector<32x8xbf16>
    %cst_30 = arith.constant dense<0.000000e+00> : vector<256x8xf32>
    %13 = tpu.matmul %10, %12, %cst_30 {dimension_numbers = #tpu.dot_dimension_numbers<[1], [0], [0], [1], [0, 0, 1, 1], [], []>} : vector<256x32xbf16>, vector<32x8xbf16>, vector<256x8xf32> -> vector<256x8xf32>
    %14 = arith.addf %8, %13 : vector<256x8xf32>
    %c0_31 = arith.constant 0 : index
    %c0_32 = arith.constant 0 : index
    %c1_33 = arith.constant 1 : index
    %c0_34 = arith.constant 0 : index
    %15 = vector.load %arg7[%c0_31, %c0_32, %c1_33, %c0_34] : memref<1x18x18x32xbf16, #tpu.memory_space<vmem>>, vector<1x16x16x32xbf16>
    %16 = vector.shape_cast %15 : vector<1x16x16x32xbf16> to vector<256x32xbf16>
    %c1_35 = arith.constant 1 : index
    %c0_36 = arith.constant 0 : index
    %c0_37 = arith.constant 0 : index
    %17 = vector.load %arg2[%c1_35, %c0_36, %c0_37] : memref<9x32x8xbf16, #tpu.memory_space<vmem>>, vector<1x32x8xbf16>
    %18 = vector.shape_cast %17 : vector<1x32x8xbf16> to vector<32x8xbf16>
    %cst_38 = arith.constant dense<0.000000e+00> : vector<256x8xf32>
    %19 = tpu.matmul %16, %18, %cst_38 {dimension_numbers = #tpu.dot_dimension_numbers<[1], [0], [0], [1], [0, 0, 1, 1], [], []>} : vector<256x32xbf16>, vector<32x8xbf16>, vector<256x8xf32> -> vector<256x8xf32>
    %20 = arith.addf %14, %19 : vector<256x8xf32>
    %c0_39 = arith.constant 0 : index
    %c0_40 = arith.constant 0 : index
    %c2 = arith.constant 2 : index
    %c0_41 = arith.constant 0 : index
    %21 = vector.load %arg7[%c0_39, %c0_40, %c2, %c0_41] : memref<1x18x18x32xbf16, #tpu.memory_space<vmem>>, vector<1x16x16x32xbf16>
    %22 = vector.shape_cast %21 : vector<1x16x16x32xbf16> to vector<256x32xbf16>
    %c2_42 = arith.constant 2 : index
    %c0_43 = arith.constant 0 : index
    %c0_44 = arith.constant 0 : index
    %23 = vector.load %arg2[%c2_42, %c0_43, %c0_44] : memref<9x32x8xbf16, #tpu.memory_space<vmem>>, vector<1x32x8xbf16>
    %24 = vector.shape_cast %23 : vector<1x32x8xbf16> to vector<32x8xbf16>
    %cst_45 = arith.constant dense<0.000000e+00> : vector<256x8xf32>
    %25 = tpu.matmul %22, %24, %cst_45 {dimension_numbers = #tpu.dot_dimension_numbers<[1], [0], [0], [1], [0, 0, 1, 1], [], []>} : vector<256x32xbf16>, vector<32x8xbf16>, vector<256x8xf32> -> vector<256x8xf32>
    %26 = arith.addf %20, %25 : vector<256x8xf32>
    %c0_46 = arith.constant 0 : index
    %c1_47 = arith.constant 1 : index
    %c0_48 = arith.constant 0 : index
    %c0_49 = arith.constant 0 : index
    %27 = vector.load %arg7[%c0_46, %c1_47, %c0_48, %c0_49] : memref<1x18x18x32xbf16, #tpu.memory_space<vmem>>, vector<1x16x16x32xbf16>
    %28 = vector.shape_cast %27 : vector<1x16x16x32xbf16> to vector<256x32xbf16>
    %c3 = arith.constant 3 : index
    %c0_50 = arith.constant 0 : index
    %c0_51 = arith.constant 0 : index
    %29 = vector.load %arg2[%c3, %c0_50, %c0_51] : memref<9x32x8xbf16, #tpu.memory_space<vmem>>, vector<1x32x8xbf16>
    %30 = vector.shape_cast %29 : vector<1x32x8xbf16> to vector<32x8xbf16>
    %cst_52 = arith.constant dense<0.000000e+00> : vector<256x8xf32>
    %31 = tpu.matmul %28, %30, %cst_52 {dimension_numbers = #tpu.dot_dimension_numbers<[1], [0], [0], [1], [0, 0, 1, 1], [], []>} : vector<256x32xbf16>, vector<32x8xbf16>, vector<256x8xf32> -> vector<256x8xf32>
    %32 = arith.addf %26, %31 : vector<256x8xf32>
    %c0_53 = arith.constant 0 : index
    %c1_54 = arith.constant 1 : index
    %c1_55 = arith.constant 1 : index
    %c0_56 = arith.constant 0 : index
    %33 = vector.load %arg7[%c0_53, %c1_54, %c1_55, %c0_56] : memref<1x18x18x32xbf16, #tpu.memory_space<vmem>>, vector<1x16x16x32xbf16>
    %34 = vector.shape_cast %33 : vector<1x16x16x32xbf16> to vector<256x32xbf16>
    %c4 = arith.constant 4 : index
    %c0_57 = arith.constant 0 : index
    %c0_58 = arith.constant 0 : index
    %35 = vector.load %arg2[%c4, %c0_57, %c0_58] : memref<9x32x8xbf16, #tpu.memory_space<vmem>>, vector<1x32x8xbf16>
    %36 = vector.shape_cast %35 : vector<1x32x8xbf16> to vector<32x8xbf16>
    %cst_59 = arith.constant dense<0.000000e+00> : vector<256x8xf32>
    %37 = tpu.matmul %34, %36, %cst_59 {dimension_numbers = #tpu.dot_dimension_numbers<[1], [0], [0], [1], [0, 0, 1, 1], [], []>} : vector<256x32xbf16>, vector<32x8xbf16>, vector<256x8xf32> -> vector<256x8xf32>
    %38 = arith.addf %32, %37 : vector<256x8xf32>
    %c0_60 = arith.constant 0 : index
    %c1_61 = arith.constant 1 : index
    %c2_62 = arith.constant 2 : index
    %c0_63 = arith.constant 0 : index
    %39 = vector.load %arg7[%c0_60, %c1_61, %c2_62, %c0_63] : memref<1x18x18x32xbf16, #tpu.memory_space<vmem>>, vector<1x16x16x32xbf16>
    %40 = vector.shape_cast %39 : vector<1x16x16x32xbf16> to vector<256x32xbf16>
    %c5 = arith.constant 5 : index
    %c0_64 = arith.constant 0 : index
    %c0_65 = arith.constant 0 : index
    %41 = vector.load %arg2[%c5, %c0_64, %c0_65] : memref<9x32x8xbf16, #tpu.memory_space<vmem>>, vector<1x32x8xbf16>
    %42 = vector.shape_cast %41 : vector<1x32x8xbf16> to vector<32x8xbf16>
    %cst_66 = arith.constant dense<0.000000e+00> : vector<256x8xf32>
    %43 = tpu.matmul %40, %42, %cst_66 {dimension_numbers = #tpu.dot_dimension_numbers<[1], [0], [0], [1], [0, 0, 1, 1], [], []>} : vector<256x32xbf16>, vector<32x8xbf16>, vector<256x8xf32> -> vector<256x8xf32>
    %44 = arith.addf %38, %43 : vector<256x8xf32>
    %c0_67 = arith.constant 0 : index
    %c2_68 = arith.constant 2 : index
    %c0_69 = arith.constant 0 : index
    %c0_70 = arith.constant 0 : index
    %45 = vector.load %arg7[%c0_67, %c2_68, %c0_69, %c0_70] : memref<1x18x18x32xbf16, #tpu.memory_space<vmem>>, vector<1x16x16x32xbf16>
    %46 = vector.shape_cast %45 : vector<1x16x16x32xbf16> to vector<256x32xbf16>
    %c6 = arith.constant 6 : index
    %c0_71 = arith.constant 0 : index
    %c0_72 = arith.constant 0 : index
    %47 = vector.load %arg2[%c6, %c0_71, %c0_72] : memref<9x32x8xbf16, #tpu.memory_space<vmem>>, vector<1x32x8xbf16>
    %48 = vector.shape_cast %47 : vector<1x32x8xbf16> to vector<32x8xbf16>
    %cst_73 = arith.constant dense<0.000000e+00> : vector<256x8xf32>
    %49 = tpu.matmul %46, %48, %cst_73 {dimension_numbers = #tpu.dot_dimension_numbers<[1], [0], [0], [1], [0, 0, 1, 1], [], []>} : vector<256x32xbf16>, vector<32x8xbf16>, vector<256x8xf32> -> vector<256x8xf32>
    %50 = arith.addf %44, %49 : vector<256x8xf32>
    %c0_74 = arith.constant 0 : index
    %c2_75 = arith.constant 2 : index
    %c1_76 = arith.constant 1 : index
    %c0_77 = arith.constant 0 : index
    %51 = vector.load %arg7[%c0_74, %c2_75, %c1_76, %c0_77] : memref<1x18x18x32xbf16, #tpu.memory_space<vmem>>, vector<1x16x16x32xbf16>
    %52 = vector.shape_cast %51 : vector<1x16x16x32xbf16> to vector<256x32xbf16>
    %c7 = arith.constant 7 : index
    %c0_78 = arith.constant 0 : index
    %c0_79 = arith.constant 0 : index
    %53 = vector.load %arg2[%c7, %c0_78, %c0_79] : memref<9x32x8xbf16, #tpu.memory_space<vmem>>, vector<1x32x8xbf16>
    %54 = vector.shape_cast %53 : vector<1x32x8xbf16> to vector<32x8xbf16>
    %cst_80 = arith.constant dense<0.000000e+00> : vector<256x8xf32>
    %55 = tpu.matmul %52, %54, %cst_80 {dimension_numbers = #tpu.dot_dimension_numbers<[1], [0], [0], [1], [0, 0, 1, 1], [], []>} : vector<256x32xbf16>, vector<32x8xbf16>, vector<256x8xf32> -> vector<256x8xf32>
    %56 = arith.addf %50, %55 : vector<256x8xf32>
    %c0_81 = arith.constant 0 : index
    %c2_82 = arith.constant 2 : index
    %c2_83 = arith.constant 2 : index
    %c0_84 = arith.constant 0 : index
    %57 = vector.load %arg7[%c0_81, %c2_82, %c2_83, %c0_84] : memref<1x18x18x32xbf16, #tpu.memory_space<vmem>>, vector<1x16x16x32xbf16>
    %58 = vector.shape_cast %57 : vector<1x16x16x32xbf16> to vector<256x32xbf16>
    %c8 = arith.constant 8 : index
    %c0_85 = arith.constant 0 : index
    %c0_86 = arith.constant 0 : index
    %59 = vector.load %arg2[%c8, %c0_85, %c0_86] : memref<9x32x8xbf16, #tpu.memory_space<vmem>>, vector<1x32x8xbf16>
    %60 = vector.shape_cast %59 : vector<1x32x8xbf16> to vector<32x8xbf16>
    %cst_87 = arith.constant dense<0.000000e+00> : vector<256x8xf32>
    %61 = tpu.matmul %58, %60, %cst_87 {dimension_numbers = #tpu.dot_dimension_numbers<[1], [0], [0], [1], [0, 0, 1, 1], [], []>} : vector<256x32xbf16>, vector<32x8xbf16>, vector<256x8xf32> -> vector<256x8xf32>
    %62 = arith.addf %56, %61 : vector<256x8xf32>
    %c0_88 = arith.constant 0 : index
    %c0_89 = arith.constant 0 : index
    %63 = vector.load %arg3[%c0_88, %c0_89] : memref<1x8xf32, #tpu.memory_space<vmem>>, vector<1x8xf32>
    %64 = vector.broadcast %63 : vector<1x8xf32> to vector<256x8xf32>
    %65 = arith.addf %62, %64 : vector<256x8xf32>
    %cst_90 = arith.constant 0.000000e+00 : f32
    %66 = vector.broadcast %cst_90 : f32 to vector<256x8xf32>
    %67 = arith.maximumf %65, %66 : vector<256x8xf32>
    %c0_91 = arith.constant 0 : index
    %c0_92 = arith.constant 0 : index
    %68 = vector.load %arg4[%c0_91, %c0_92] : memref<1x8xf32, #tpu.memory_space<vmem>>, vector<1x8xf32>
    %cst_93 = arith.constant dense<0.000000e+00> : vector<1x256xf32>
    %69 = tpu.matmul %68, %67, %cst_93 {dimension_numbers = #tpu.dot_dimension_numbers<[1], [1], [0], [0], [0, 0, 1, 0], [], []>} : vector<1x8xf32>, vector<256x8xf32>, vector<1x256xf32> -> vector<1x256xf32>
    %c0_94 = arith.constant 0 : index
    %70 = memref.load %arg5[%c0_94] : memref<1xf32, #tpu.memory_space<smem>>
    %71 = vector.broadcast %70 : f32 to vector<1x256xf32>
    %72 = arith.addf %69, %71 : vector<1x256xf32>
    %73 = vector.shape_cast %72 : vector<1x256xf32> to vector<1x1x256xf32>
    %c0_95 = arith.constant 0 : index
    %c0_96 = arith.constant 0 : index
    %c0_97 = arith.constant 0 : index
    %74 = vector.load %arg6[%c0_95, %c0_96, %c0_97] : memref<1x1x256xf32, #tpu.memory_space<vmem>>, vector<1x1x256xf32>
    tpu.vector_store %arg6[%c0_95, %c0_96, %c0_97], %73 {strides = array<i32>} : memref<1x1x256xf32, #tpu.memory_space<vmem>>, vector<1x1x256xf32>,
    return
  }
  func.func @transform_0(%arg0: i32) -> (i32, i32, i32, i32) {
    %c0_i32 = arith.constant 0 : i32
    %c0_i32_0 = arith.constant 0 : i32
    %c0_i32_1 = arith.constant 0 : i32
    %c0_i32_2 = arith.constant 0 : i32
    return %arg0, %c0_i32, %c0_i32_0, %c0_i32_1 : i32, i32, i32, i32
  }
  func.func @transform_1(%arg0: i32) -> (i32, i32, i32) {
    %c0_i32 = arith.constant 0 : i32
    %c0_i32_0 = arith.constant 0 : i32
    %c0_i32_1 = arith.constant 0 : i32
    %c0_i32_2 = arith.constant 0 : i32
    return %c0_i32, %c0_i32_0, %c0_i32_1 : i32, i32, i32
  }
  func.func @transform_2(%arg0: i32) -> (i32, i32) {
    %c0_i32 = arith.constant 0 : i32
    %c0_i32_0 = arith.constant 0 : i32
    %c0_i32_1 = arith.constant 0 : i32
    return %c0_i32, %c0_i32_0 : i32, i32
  }
  func.func @transform_3(%arg0: i32) -> (i32, i32) {
    %c0_i32 = arith.constant 0 : i32
    %c0_i32_0 = arith.constant 0 : i32
    %c0_i32_1 = arith.constant 0 : i32
    return %c0_i32, %c0_i32_0 : i32, i32
  }
  func.func @transform_4(%arg0: i32) -> i32 {
    %c0_i32 = arith.constant 0 : i32
    %c0_i32_0 = arith.constant 0 : i32
    return %c0_i32 : i32
  }
  func.func @transform_5(%arg0: i32) -> (i32, i32, i32) {
    %c0_i32 = arith.constant 0 : i32
    %c0_i32_0 = arith.constant 0 : i32
    %c0_i32_1 = arith.constant 0 : i32
    return %arg0, %c0_i32, %c0_i32_0 : i32, i32, i32
  }
}

</mosaic_0001>

<llo_original>
// kernel: tpu_custom_call.1
$region0: #{tpu_custom_call.1}
  #allocation0 [shape = 'u32[]', space=smem, size = 0x4, offset = 0x4, fixed_abs, tag = 'smem constant byte address 0x4 - core index']
  #allocation1 [shape = 'u32[144,128]{1,0:T(1,128)}', space=vmem, size = 0x12000, scoped, tag = 'internal scratch']
  #allocation2 [shape = 'bf16[1,18,18,32]{3,2,1,0:T(8,128)(2,1)}', space=vmem, size = 0x1b000, scoped, tag = 'scratch operand']
  #allocation3 [shape = 'f32[1]{0:T(128)S(6)}', space=smem, size = 0x200, scoped, tag = 'scoped memory for tpu_custom_call.1']
  %s0 = inlined_call_operand.hbm [shape: bf16[2,16,16,32], index: 0, kind: input, shape index: {}]
  %s1 = inlined_call_operand.vmem [shape: bf16[9,32,8], index: 1, kind: input, shape index: {}]
  %s2 = inlined_call_operand.vmem [shape: f32[1,8], index: 2, kind: input, shape index: {}]
  %s3 = inlined_call_operand.vmem [shape: f32[1,8], index: 3, kind: input, shape index: {}]
  %s4 = inlined_call_operand.<no memory space> [shape: f32[1], index: 4, kind: input, shape index: {}]
  %s5 = inlined_call_operand.hbm [shape: f32[2,1,256], index: 5, kind: output, shape index: {}]
  %s6 = sld [smem:[#allocation0]]
  $region57: #{tpu_custom_call.1} parent=0
    _
  %s8 = ssub.s32 1, %s6
  %s9 = scalar_select 0, %s8, %s6
  %10 = sst [smem:[#allocation3]] %s4
  $region1: #{tpu_custom_call.1} parent=0
    #allocation4 [shape = 'u8[131072]{0}', space=vmem, size = 0x20000, scoped, tag = 'input window, operand 0']
    #allocation5 [shape = 's32[2]{0}', space=sflag, size = 0x8, scoped, tag = 'scoped memory for tpu_custom_call.1']
    #allocation6 [shape = 's32[2]{0}', space=sflag, size = 0x8, scoped, tag = 'scoped memory for tpu_custom_call.1']
    #allocation7 [shape = 'u8[2048]{0}', space=vmem, size = 0x800, scoped, tag = 'output window, operand 0']
    %11 = vsyncpa [#allocation5], 0
    %s12 = scalar_lea.sflag [#allocation5], 1
    %13 = vsyncpa %s12, 0
    %14 = vsyncpa [#allocation6], 0
    %s15 = scalar_lea.sflag [#allocation6], 1
    %16 = vsyncpa %s15, 0
    loop: start=0, step=1, limit=4
    $region2: #{tpu_custom_call.1} parent=1 // loop_pre_header
      _
    $region3: #{tpu_custom_call.1} parent=1 // loop_header
      %s18 = sphi 0, %s22
      %p19 = scmp.ge.s32.totalorder %s18, 4
      %s28 = sphi 0, %s30
      %s31 = sphi 0, %s28
      %s32 = sphi 0, %s31
      %s48 = sphi 0, %s32
      %s52 = sphi 0, %s52
      %s54 = sphi 0, %s52
      %s55 = sphi 0, %s54
      %s69 = sphi 0, %s55
      %s73 = sphi 0, %s73
      %s75 = sphi 0, %s73
      %s76 = sphi 0, %s75
      %s90 = sphi 0, %s76
      %s94 = sphi 0, %s94
      %s96 = sphi 0, %s94
      %s97 = sphi 0, %s96
      %s111 = sphi 0, %s97
      %s115 = sphi 0, %s115
      %s117 = sphi 0, %s115
      %s118 = sphi 0, %s117
      %s132 = sphi 0, %s118
      %s138 = sphi 0, %s140
      %s141 = sphi 0, %s138
      %s142 = sphi 0, %s141
      %s158 = sphi 0, %s142
    $region4: #{tpu_custom_call.1} parent=1 // loop_header_branch
      %21 = sbr.rel (%p19) target = $region8
    $region5: #{tpu_custom_call.1} parent=1 // loop_body
      %s23 = ssub.s32 %s18, 1
      %s24 = ssub.s32 %s18, 2
      %s25 = sadd.s32 %s18, 1
      %s26 = ssub.s32 %s18, %s25
      %p27 = scmp.eq.s32.totalorder %s26, 0
      %s29 = sadd.s32 %s28, 1
      %s30 = scalar_select %p27, %s28, %s29
      %p33 = pneg %p27
      %p34 = scmp.eq.s32.totalorder %s18, 1
      %p35 = por %p33, %p34
      %p36 = scmp.ne.s32.totalorder %s28, %s31
      %p37 = scmp.eq.s32.totalorder %s18, 0
      %p38 = por %p36, %p37
      %p39 = scmp.ne.s32.totalorder %s28, %s31
      %p40 = scmp.eq.s32.totalorder %s23, 1
      %p41 = por %p39, %p40
      %p42 = scmp.ne.s32.totalorder %s31, %s32
      %p43 = scmp.eq.s32.totalorder %s23, 0
      %p44 = por %p42, %p43
      %p45 = scmp.ne.s32.totalorder %s31, %s32
      %p46 = scmp.eq.s32.totalorder %s24, 1
      %p47 = por %p45, %p46
      %p49 = scmp.ne.s32.totalorder %s32, %s48
      %p50 = scmp.eq.s32.totalorder %s24, 0
      %p51 = por %p49, %p50
      %s53 = sadd.s32 %s52, 1
      %p56 = scmp.eq.s32.totalorder %s18, 1
      %p57 = scmp.ne.s32.totalorder %s52, %s54
      %p58 = scmp.eq.s32.totalorder %s18, 0
      %p59 = por %p57, %p58
      %p60 = scmp.ne.s32.totalorder %s52, %s54
      %p61 = scmp.eq.s32.totalorder %s23, 1
      %p62 = por %p60, %p61
      %p63 = scmp.ne.s32.totalorder %s54, %s55
      %p64 = scmp.eq.s32.totalorder %s23, 0
      %p65 = por %p63, %p64
      %p66 = scmp.ne.s32.totalorder %s54, %s55
      %p67 = scmp.eq.s32.totalorder %s24, 1
      %p68 = por %p66, %p67
      %p70 = scmp.ne.s32.totalorder %s55, %s69
      %p71 = scmp.eq.s32.totalorder %s24, 0
      %p72 = por %p70, %p71
      %s74 = sadd.s32 %s73, 1
      %p77 = scmp.eq.s32.totalorder %s18, 1
      %p78 = scmp.ne.s32.totalorder %s73, %s75
      %p79 = scmp.eq.s32.totalorder %s18, 0
      %p80 = por %p78, %p79
      %p81 = scmp.ne.s32.totalorder %s73, %s75
      %p82 = scmp.eq.s32.totalorder %s23, 1
      %p83 = por %p81, %p82
      %p84 = scmp.ne.s32.totalorder %s75, %s76
      %p85 = scmp.eq.s32.totalorder %s23, 0
      %p86 = por %p84, %p85
      %p87 = scmp.ne.s32.totalorder %s75, %s76
      %p88 = scmp.eq.s32.totalorder %s24, 1
      %p89 = por %p87, %p88
      %p91 = scmp.ne.s32.totalorder %s76, %s90
      %p92 = scmp.eq.s32.totalorder %s24, 0
      %p93 = por %p91, %p92
      %s95 = sadd.s32 %s94, 1
      %p98 = scmp.eq.s32.totalorder %s18, 1
      %p99 = scmp.ne.s32.totalorder %s94, %s96
      %p100 = scmp.eq.s32.totalorder %s18, 0
      %p101 = por %p99, %p100
      %p102 = scmp.ne.s32.totalorder %s94, %s96
      %p103 = scmp.eq.s32.totalorder %s23, 1
      %p104 = por %p102, %p103
      %p105 = scmp.ne.s32.totalorder %s96, %s97
      %p106 = scmp.eq.s32.totalorder %s23, 0
      %p107 = por %p105, %p106
      %p108 = scmp.ne.s32.totalorder %s96, %s97
      %p109 = scmp.eq.s32.totalorder %s24, 1
      %p110 = por %p108, %p109
      %p112 = scmp.ne.s32.totalorder %s97, %s111
      %p113 = scmp.eq.s32.totalorder %s24, 0
      %p114 = por %p112, %p113
      %s116 = sadd.s32 %s115, 1
      %p119 = scmp.eq.s32.totalorder %s18, 1
      %p120 = scmp.ne.s32.totalorder %s115, %s117
      %p121 = scmp.eq.s32.totalorder %s18, 0
      %p122 = por %p120, %p121
      %p123 = scmp.ne.s32.totalorder %s115, %s117
      %p124 = scmp.eq.s32.totalorder %s23, 1
      %p125 = por %p123, %p124
      %p126 = scmp.ne.s32.totalorder %s117, %s118
      %p127 = scmp.eq.s32.totalorder %s23, 0
      %p128 = por %p126, %p127
      %p129 = scmp.ne.s32.totalorder %s117, %s118
      %p130 = scmp.eq.s32.totalorder %s24, 1
      %p131 = por %p129, %p130
      %p133 = scmp.ne.s32.totalorder %s118, %s132
      %p134 = scmp.eq.s32.totalorder %s24, 0
      %p135 = por %p133, %p134
      %s136 = ssub.s32 %s18, %s25
      %p137 = scmp.eq.s32.totalorder %s136, 0
      %s139 = sadd.s32 %s138, 1
      %s140 = scalar_select %p137, %s138, %s139
      %p143 = pneg %p137
      %p144 = scmp.eq.s32.totalorder %s18, 1
      %p145 = por %p143, %p144
      %p146 = scmp.ne.s32.totalorder %s138, %s141
      %p147 = scmp.eq.s32.totalorder %s18, 0
      %p148 = por %p146, %p147
      %p149 = scmp.ne.s32.totalorder %s138, %s141
      %p150 = scmp.eq.s32.totalorder %s23, 1
      %p151 = por %p149, %p150
      %p152 = scmp.ne.s32.totalorder %s141, %s142
      %p153 = scmp.eq.s32.totalorder %s23, 0
      %p154 = por %p152, %p153
      %p155 = scmp.ne.s32.totalorder %s141, %s142
      %p156 = scmp.eq.s32.totalorder %s24, 1
      %p157 = por %p155, %p156
      %p159 = scmp.ne.s32.totalorder %s142, %s158
      %p160 = scmp.eq.s32.totalorder %s24, 0
      %p161 = por %p159, %p160
      %p162 = scmp.le.s32.totalorder 1, %s18
      %p163 = scmp.lt.s32.totalorder %s18, 3
      %p164 = pnand %p162, %p163
      %p165 = pneg %p164
      // Predicated region
      $region9: #{tpu_custom_call.1} parent=5 // pred_check
        _
      $region10: #{tpu_custom_call.1} parent=5 // pred_check_branch
        %167 = sbr.rel (%p164) target = $region12
      $region11: #{tpu_custom_call.1} parent=5 // pred_region
        %s168 = ssub.s32 %s18, 1
        // Predicated region
        $region13: #{tpu_custom_call.1} parent=11 // pred_check
          %p169 = pneg %p65
        $region14: #{tpu_custom_call.1} parent=11 // pred_check_branch
          %171 = sbr.rel (%p169) target = $region16
        $region15: #{tpu_custom_call.1} parent=11 // pred_region
          _
        $region16: #{tpu_custom_call.1} parent=11 // pred_fallthru
          _
        // Predicated region
        $region17: #{tpu_custom_call.1} parent=11 // pred_check
          %p172 = pneg %p86
        $region18: #{tpu_custom_call.1} parent=11 // pred_check_branch
          %174 = sbr.rel (%p172) target = $region20
        $region19: #{tpu_custom_call.1} parent=11 // pred_region
          _
        $region20: #{tpu_custom_call.1} parent=11 // pred_fallthru
          _
        // Predicated region
        $region21: #{tpu_custom_call.1} parent=11 // pred_check
          %p175 = pneg %p107
        $region22: #{tpu_custom_call.1} parent=11 // pred_check_branch
          %177 = sbr.rel (%p175) target = $region24
        $region23: #{tpu_custom_call.1} parent=11 // pred_region
          _
        $region24: #{tpu_custom_call.1} parent=11 // pred_fallthru
          _
        // Predicated region
        $region25: #{tpu_custom_call.1} parent=11 // pred_check
          %p178 = pneg %p128
        $region26: #{tpu_custom_call.1} parent=11 // pred_check_branch
          %180 = sbr.rel (%p178) target = $region28
        $region27: #{tpu_custom_call.1} parent=11 // pred_region
          _
        $region28: #{tpu_custom_call.1} parent=11 // pred_fallthru
          _
      $region12: #{tpu_custom_call.1} parent=5 // pred_fallthru
        _
      %p181 = scmp.lt.s32.totalorder %s18, 2
      // Predicated region
      $region29: #{tpu_custom_call.1} parent=5 // pred_check
        %p182 = pneg %p181
      $region30: #{tpu_custom_call.1} parent=5 // pred_check_branch
        %184 = sbr.rel (%p182) target = $region32
      $region31: #{tpu_custom_call.1} parent=5 // pred_region
        // Predicated region
        $region33: #{tpu_custom_call.1} parent=31 // pred_check
          %p185 = pneg %p38
        $region34: #{tpu_custom_call.1} parent=31 // pred_check_branch
          %187 = sbr.rel (%p185) target = $region36
        $region35: #{tpu_custom_call.1} parent=31 // pred_region
          %s188 = sand.u32 %s28, 1
          %s189 = scalar_lea.sflag [#allocation5], %s188
          %s190 = sand.u32 %s28, 1
          %s191 = smul.addr %s190, 128
          %s192 = scalar_lea.vmem [#allocation4], %s191
          %s194 = ssub.s32 2048, 2048
          %195 = vsyncadd %s189, %s194
          %s196 = smul.addr %s18, 32
          %s197 = smul.addr %s196, 64
          %s198 = scalar_lea.hbm %s0, %s197
          %s199 = sshll.u32 %s192, 4
          %s200 = int_to_ptr.vmem [resolvable:$true] %s199
          %205 = dma.hbm_to_vmem [thread:$0]  %s198, 2048, %s200, %s189, 64, 64, 4
        $region36: #{tpu_custom_call.1} parent=31 // pred_fallthru
          _
      $region32: #{tpu_custom_call.1} parent=5 // pred_fallthru
        _
      %p206 = scmp.le.s32.totalorder 1, %s18
      %p207 = scmp.lt.s32.totalorder %s18, 3
      %p208 = pnand %p206, %p207
      %p209 = pneg %p208
      // Predicated region
      $region37: #{tpu_custom_call.1} parent=5 // pred_check
        _
      $region38: #{tpu_custom_call.1} parent=5 // pred_check_branch
        %211 = sbr.rel (%p208) target = $region40
      $region39: #{tpu_custom_call.1} parent=5 // pred_region
        %s212 = ssub.s32 %s18, 1
        %s213 = sand.u32 %s31, 1
        %s214 = scalar_lea.sflag [#allocation5], %s213
        %s215 = sand.u32 %s31, 1
        %s216 = smul.addr %s215, 128
        %s217 = scalar_lea.vmem [#allocation4], %s216
        // Predicated region
        $region41: #{tpu_custom_call.1} parent=39 // pred_check
          %p218 = pneg %p44
        $region42: #{tpu_custom_call.1} parent=39 // pred_check_branch
          %220 = sbr.rel (%p218) target = $region44
        $region43: #{tpu_custom_call.1} parent=39 // pred_region
          %221 = dma.done %s214, 2048
        $region44: #{tpu_custom_call.1} parent=39 // pred_fallthru
          _
        %s222 = sand.u32 %s31, 1
        %s223 = scalar_lea.sflag [#allocation5], %s222
        %s224 = sand.u32 %s31, 1
        %s225 = smul.addr %s224, 128
        %s226 = scalar_lea.vmem [#allocation4], %s225
        %p227 = pneg %p44
        %p228 = pneg %p41
        %p229 = pneg %p65
        %p230 = pneg %p62
        %p231 = pneg %p86
        %p232 = pneg %p83
        %p233 = pneg %p107
        %p234 = pneg %p104
        %p235 = pneg %p128
        %p236 = pneg %p125
        %p237 = pneg %p154
        %p238 = pneg %p151
        %s239 = sand.u32 %s141, 1
        %s240 = scalar_lea.sflag [#allocation6], %s239
        %s241 = sand.u32 %s141, 1
        %s242 = smul.addr %s241, 2
        %s243 = scalar_lea.vmem [#allocation7], %s242
        %vm245 = vcmask 257024
        %246 = vst.msk [vmem:[#allocation2] sm:$0xf] %vm245, 0
        %247 = vst.msk [vmem:[#allocation2 + $0x4] sm:$0xf] %vm245, 0
        %vm248 = vcmask 253952
        %249 = vst.msk [vmem:[#allocation2 + $0x8] sm:$0x1] %vm248, 0
        %s250 = scalar_lea.vmem [#allocation2], 204
        %251 = vst.msk [vmem:[%s250] sm:$0xf] %vm245, 0
        %252 = vst.msk [vmem:[%s250 + $0x4] sm:$0xf] %vm245, 0
        %253 = vst.msk [vmem:[%s250 + $0x8] sm:$0x1] %vm248, 0
        %s254 = scalar_lea.vmem [#allocation2], 12
        %vm255 = vcmask 253952
        %vm256 = vsmask.f32 256
        %vm257 = vmand %vm255, %vm256
        %v258 = vld [vmem:[%s254] sm:$0x1]
        %v259 = vsel %vm257, 0, %v258
        %260 = vst [vmem:[%s254] sm:$0x1] %v259
        %v261 = vld [vmem:[%s254 + $0xc] sm:$0x1]
        %v262 = vsel %vm257, 0, %v261
        %263 = vst [vmem:[%s254 + $0xc] sm:$0x1] %v262
        %v264 = vld [vmem:[%s254 + $0x18] sm:$0x1]
        %v265 = vsel %vm257, 0, %v264
        %266 = vst [vmem:[%s254 + $0x18] sm:$0x1] %v265
        %v267 = vld [vmem:[%s254 + $0x24] sm:$0x1]
        %v268 = vsel %vm257, 0, %v267
        %269 = vst [vmem:[%s254 + $0x24] sm:$0x1] %v268
        %v270 = vld [vmem:[%s254 + $0x30] sm:$0x1]
        %v271 = vsel %vm257, 0, %v270
        %272 = vst [vmem:[%s254 + $0x30] sm:$0x1] %v271
        %v273 = vld [vmem:[%s254 + $0x3c] sm:$0x1]
        %v274 = vsel %vm257, 0, %v273
        %275 = vst [vmem:[%s254 + $0x3c] sm:$0x1] %v274
        %v276 = vld [vmem:[%s254 + $0x48] sm:$0x1]
        %v277 = vsel %vm257, 0, %v276
        %278 = vst [vmem:[%s254 + $0x48] sm:$0x1] %v277
        %v279 = vld [vmem:[%s254 + $0x54] sm:$0x1]
        %v280 = vsel %vm257, 0, %v279
        %281 = vst [vmem:[%s254 + $0x54] sm:$0x1] %v280
        %v282 = vld [vmem:[%s254 + $0x60] sm:$0x1]
        %v283 = vsel %vm257, 0, %v282
        %284 = vst [vmem:[%s254 + $0x60] sm:$0x1] %v283
        %v285 = vld [vmem:[%s254 + $0x6c] sm:$0x1]
        %v286 = vsel %vm257, 0, %v285
        %287 = vst [vmem:[%s254 + $0x6c] sm:$0x1] %v286
        %v288 = vld [vmem:[%s254 + $0x78] sm:$0x1]
        %v289 = vsel %vm257, 0, %v288
        %290 = vst [vmem:[%s254 + $0x78] sm:$0x1] %v289
        %v291 = vld [vmem:[%s254 + $0x84] sm:$0x1]
        %v292 = vsel %vm257, 0, %v291
        %293 = vst [vmem:[%s254 + $0x84] sm:$0x1] %v292
        %v294 = vld [vmem:[%s254 + $0x90] sm:$0x1]
        %v295 = vsel %vm257, 0, %v294
        %296 = vst [vmem:[%s254 + $0x90] sm:$0x1] %v295
        %v297 = vld [vmem:[%s254 + $0x9c] sm:$0x1]
        %v298 = vsel %vm257, 0, %v297
        %299 = vst [vmem:[%s254 + $0x9c] sm:$0x1] %v298
        %v300 = vld [vmem:[%s254 + $0xa8] sm:$0x1]
        %v301 = vsel %vm257, 0, %v300
        %302 = vst [vmem:[%s254 + $0xa8] sm:$0x1] %v301
        %v303 = vld [vmem:[%s254 + $0xb4] sm:$0x1]
        %v304 = vsel %vm257, 0, %v303
        %305 = vst [vmem:[%s254 + $0xb4] sm:$0x1] %v304
        %vm306 = vsmask.f32 7938
        %vm307 = vmand %vm255, %vm306
        %v308 = vld [vmem:[%s254 + $0x8] sm:$0x1]
        %v309 = vsel %vm307, 0, %v308
        %310 = vst [vmem:[%s254 + $0x8] sm:$0x1] %v309
        %v311 = vld [vmem:[%s254 + $0x14] sm:$0x1]
        %v312 = vsel %vm307, 0, %v311
        %313 = vst [vmem:[%s254 + $0x14] sm:$0x1] %v312
        %v314 = vld [vmem:[%s254 + $0x20] sm:$0x1]
        %v315 = vsel %vm307, 0, %v314
        %316 = vst [vmem:[%s254 + $0x20] sm:$0x1] %v315
        %v317 = vld [vmem:[%s254 + $0x2c] sm:$0x1]
        %v318 = vsel %vm307, 0, %v317
        %319 = vst [vmem:[%s254 + $0x2c] sm:$0x1] %v318
        %v320 = vld [vmem:[%s254 + $0x38] sm:$0x1]
        %v321 = vsel %vm307, 0, %v320
        %322 = vst [vmem:[%s254 + $0x38] sm:$0x1] %v321
        %v323 = vld [vmem:[%s254 + $0x44] sm:$0x1]
        %v324 = vsel %vm307, 0, %v323
        %325 = vst [vmem:[%s254 + $0x44] sm:$0x1] %v324
        %v326 = vld [vmem:[%s254 + $0x50] sm:$0x1]
        %v327 = vsel %vm307, 0, %v326
        %328 = vst [vmem:[%s254 + $0x50] sm:$0x1] %v327
        %v329 = vld [vmem:[%s254 + $0x5c] sm:$0x1]
        %v330 = vsel %vm307, 0, %v329
        %331 = vst [vmem:[%s254 + $0x5c] sm:$0x1] %v330
        %v332 = vld [vmem:[%s254 + $0x68] sm:$0x1]
        %v333 = vsel %vm307, 0, %v332
        %334 = vst [vmem:[%s254 + $0x68] sm:$0x1] %v333
        %v335 = vld [vmem:[%s254 + $0x74] sm:$0x1]
        %v336 = vsel %vm307, 0, %v335
        %337 = vst [vmem:[%s254 + $0x74] sm:$0x1] %v336
        %v338 = vld [vmem:[%s254 + $0x80] sm:$0x1]
        %v339 = vsel %vm307, 0, %v338
        %340 = vst [vmem:[%s254 + $0x80] sm:$0x1] %v339
        %v341 = vld [vmem:[%s254 + $0x8c] sm:$0x1]
        %v342 = vsel %vm307, 0, %v341
        %343 = vst [vmem:[%s254 + $0x8c] sm:$0x1] %v342
        %v344 = vld [vmem:[%s254 + $0x98] sm:$0x1]
        %v345 = vsel %vm307, 0, %v344
        %346 = vst [vmem:[%s254 + $0x98] sm:$0x1] %v345
        %v347 = vld [vmem:[%s254 + $0xa4] sm:$0x1]
        %v348 = vsel %vm307, 0, %v347
        %349 = vst [vmem:[%s254 + $0xa4] sm:$0x1] %v348
        %v350 = vld [vmem:[%s254 + $0xb0] sm:$0x1]
        %v351 = vsel %vm307, 0, %v350
        %352 = vst [vmem:[%s254 + $0xb0] sm:$0x1] %v351
        %v353 = vld [vmem:[%s254 + $0xbc] sm:$0x1]
        %v354 = vsel %vm307, 0, %v353
        %355 = vst [vmem:[%s254 + $0xbc] sm:$0x1] %v354
        %v356 = vld [vmem:[%s217] sm:$0xf]
        %v357 = vld [vmem:[%s217 + $0x4] sm:$0xf]
        %v358 = vld [vmem:[%s217 + $0x8] sm:$0xf]
        %v359 = vld [vmem:[%s217 + $0xc] sm:$0xf]
        %v360 = vld [vmem:[%s217 + $0x10] sm:$0xf]
        %v361 = vld [vmem:[%s217 + $0x14] sm:$0xf]
        %v362 = vld [vmem:[%s217 + $0x18] sm:$0xf]
        %v363 = vld [vmem:[%s217 + $0x1c] sm:$0xf]
        %v364 = vld [vmem:[%s217 + $0x20] sm:$0xf]
        %v365 = vld [vmem:[%s217 + $0x24] sm:$0xf]
        %v366 = vld [vmem:[%s217 + $0x28] sm:$0xf]
        %v367 = vld [vmem:[%s217 + $0x2c] sm:$0xf]
        %v368 = vld [vmem:[%s217 + $0x30] sm:$0xf]
        %v369 = vld [vmem:[%s217 + $0x34] sm:$0xf]
        %v370 = vld [vmem:[%s217 + $0x38] sm:$0xf]
        %v371 = vld [vmem:[%s217 + $0x3c] sm:$0xf]
        %v372 = vld [vmem:[%s217 + $0x40] sm:$0xf]
        %v373 = vld [vmem:[%s217 + $0x44] sm:$0xf]
        %v374 = vld [vmem:[%s217 + $0x48] sm:$0xf]
        %v375 = vld [vmem:[%s217 + $0x4c] sm:$0xf]
        %v376 = vld [vmem:[%s217 + $0x50] sm:$0xf]
        %v377 = vld [vmem:[%s217 + $0x54] sm:$0xf]
        %v378 = vld [vmem:[%s217 + $0x58] sm:$0xf]
        %v379 = vld [vmem:[%s217 + $0x5c] sm:$0xf]
        %v380 = vld [vmem:[%s217 + $0x60] sm:$0xf]
        %v381 = vld [vmem:[%s217 + $0x64] sm:$0xf]
        %v382 = vld [vmem:[%s217 + $0x68] sm:$0xf]
        %v383 = vld [vmem:[%s217 + $0x6c] sm:$0xf]
        %v384 = vld [vmem:[%s217 + $0x70] sm:$0xf]
        %v385 = vld [vmem:[%s217 + $0x74] sm:$0xf]
        %v386 = vld [vmem:[%s217 + $0x78] sm:$0xf]
        %v387 = vld [vmem:[%s217 + $0x7c] sm:$0xf]
        %vm388 = vsmask.f32 4368
        %vm389 = vmor %vm256, %vm388
        %v391 = vshrl.u32 %v356, 16
        %v393 = vrot.slane %v391, 7
        %v394 = vshll.u32 %v356, 16
        %v396 = vor.u32 %v393, %v394
        %v397 = vrot.slane %v393, 4
        %v399 = vshrl.u32 %v357, 16
        %v401 = vrot.slane %v399, 7
        %v402 = vshll.u32 %v357, 16
        %v404 = vor.u32 %v401, %v402
        %v405 = vsel %vm389, %v397, %v404
        %v406 = vrot.slane %v401, 4
        %v408 = vshrl.u32 %v358, 16
        %v410 = vrot.slane %v408, 7
        %v411 = vshll.u32 %v358, 16
        %v413 = vor.u32 %v410, %v411
        %v414 = vrot.slane %v410, 4
        %v416 = vshrl.u32 %v359, 16
        %v418 = vrot.slane %v416, 7
        %v419 = vshll.u32 %v359, 16
        %v421 = vor.u32 %v418, %v419
        %v422 = vsel %vm389, %v414, %v421
        %v423 = vrot.slane %v418, 4
        %v425 = vshrl.u32 %v360, 16
        %v427 = vrot.slane %v425, 7
        %v428 = vshll.u32 %v360, 16
        %v430 = vor.u32 %v427, %v428
        %v431 = vrot.slane %v427, 4
        %v433 = vshrl.u32 %v361, 16
        %v435 = vrot.slane %v433, 7
        %v436 = vshll.u32 %v361, 16
        %v438 = vor.u32 %v435, %v436
        %v439 = vsel %vm389, %v431, %v438
        %v440 = vrot.slane %v435, 4
        %v442 = vshrl.u32 %v362, 16
        %v444 = vrot.slane %v442, 7
        %v445 = vshll.u32 %v362, 16
        %v447 = vor.u32 %v444, %v445
        %v448 = vrot.slane %v444, 4
        %v450 = vshrl.u32 %v363, 16
        %v452 = vrot.slane %v450, 7
        %v453 = vshll.u32 %v363, 16
        %v455 = vor.u32 %v452, %v453
        %v456 = vsel %vm389, %v448, %v455
        %v457 = vrot.slane %v452, 4
        %v459 = vshrl.u32 %v364, 16
        %v461 = vrot.slane %v459, 7
        %v462 = vshll.u32 %v364, 16
        %v464 = vor.u32 %v461, %v462
        %v465 = vrot.slane %v461, 4
        %v467 = vshrl.u32 %v365, 16
        %v469 = vrot.slane %v467, 7
        %v470 = vshll.u32 %v365, 16
        %v472 = vor.u32 %v469, %v470
        %v473 = vsel %vm389, %v465, %v472
        %v474 = vrot.slane %v469, 4
        %v476 = vshrl.u32 %v366, 16
        %v478 = vrot.slane %v476, 7
        %v479 = vshll.u32 %v366, 16
        %v481 = vor.u32 %v478, %v479
        %v482 = vrot.slane %v478, 4
        %v484 = vshrl.u32 %v367, 16
        %v486 = vrot.slane %v484, 7
        %v487 = vshll.u32 %v367, 16
        %v489 = vor.u32 %v486, %v487
        %v490 = vsel %vm389, %v482, %v489
        %v491 = vrot.slane %v486, 4
        %v493 = vshrl.u32 %v368, 16
        %v495 = vrot.slane %v493, 7
        %v496 = vshll.u32 %v368, 16
        %v498 = vor.u32 %v495, %v496
        %v499 = vrot.slane %v495, 4
        %v501 = vshrl.u32 %v369, 16
        %v503 = vrot.slane %v501, 7
        %v504 = vshll.u32 %v369, 16
        %v506 = vor.u32 %v503, %v504
        %v507 = vsel %vm389, %v499, %v506
        %v508 = vrot.slane %v503, 4
        %v510 = vshrl.u32 %v370, 16
        %v512 = vrot.slane %v510, 7
        %v513 = vshll.u32 %v370, 16
        %v515 = vor.u32 %v512, %v513
        %v516 = vrot.slane %v512, 4
        %v518 = vshrl.u32 %v371, 16
        %v520 = vrot.slane %v518, 7
        %v521 = vshll.u32 %v371, 16
        %v523 = vor.u32 %v520, %v521
        %v524 = vsel %vm389, %v516, %v523
        %v525 = vrot.slane %v520, 4
        %v527 = vshrl.u32 %v372, 16
        %v529 = vrot.slane %v527, 7
        %v530 = vshll.u32 %v372, 16
        %v532 = vor.u32 %v529, %v530
        %v533 = vrot.slane %v529, 4
        %v535 = vshrl.u32 %v373, 16
        %v537 = vrot.slane %v535, 7
        %v538 = vshll.u32 %v373, 16
        %v540 = vor.u32 %v537, %v538
        %v541 = vsel %vm389, %v533, %v540
        %v542 = vrot.slane %v537, 4
        %v544 = vshrl.u32 %v374, 16
        %v546 = vrot.slane %v544, 7
        %v547 = vshll.u32 %v374, 16
        %v549 = vor.u32 %v546, %v547
        %v550 = vrot.slane %v546, 4
        %v552 = vshrl.u32 %v375, 16
        %v554 = vrot.slane %v552, 7
        %v555 = vshll.u32 %v375, 16
        %v557 = vor.u32 %v554, %v555
        %v558 = vsel %vm389, %v550, %v557
        %v559 = vrot.slane %v554, 4
        %v561 = vshrl.u32 %v376, 16
        %v563 = vrot.slane %v561, 7
        %v564 = vshll.u32 %v376, 16
        %v566 = vor.u32 %v563, %v564
        %v567 = vrot.slane %v563, 4
        %v569 = vshrl.u32 %v377, 16
        %v571 = vrot.slane %v569, 7
        %v572 = vshll.u32 %v377, 16
        %v574 = vor.u32 %v571, %v572
        %v575 = vsel %vm389, %v567, %v574
        %v576 = vrot.slane %v571, 4
        %v578 = vshrl.u32 %v378, 16
        %v580 = vrot.slane %v578, 7
        %v581 = vshll.u32 %v378, 16
        %v583 = vor.u32 %v580, %v581
        %v584 = vrot.slane %v580, 4
        %v586 = vshrl.u32 %v379, 16
        %v588 = vrot.slane %v586, 7
        %v589 = vshll.u32 %v379, 16
        %v591 = vor.u32 %v588, %v589
        %v592 = vsel %vm389, %v584, %v591
        %v593 = vrot.slane %v588, 4
        %v595 = vshrl.u32 %v380, 16
        %v597 = vrot.slane %v595, 7
        %v598 = vshll.u32 %v380, 16
        %v600 = vor.u32 %v597, %v598
        %v601 = vrot.slane %v597, 4
        %v603 = vshrl.u32 %v381, 16
        %v605 = vrot.slane %v603, 7
        %v606 = vshll.u32 %v381, 16
        %v608 = vor.u32 %v605, %v606
        %v609 = vsel %vm389, %v601, %v608
        %v610 = vrot.slane %v605, 4
        %v612 = vshrl.u32 %v382, 16
        %v614 = vrot.slane %v612, 7
        %v615 = vshll.u32 %v382, 16
        %v617 = vor.u32 %v614, %v615
        %v618 = vrot.slane %v614, 4
        %v620 = vshrl.u32 %v383, 16
        %v622 = vrot.slane %v620, 7
        %v623 = vshll.u32 %v383, 16
        %v625 = vor.u32 %v622, %v623
        %v626 = vsel %vm389, %v618, %v625
        %v627 = vrot.slane %v622, 4
        %v629 = vshrl.u32 %v384, 16
        %v631 = vrot.slane %v629, 7
        %v632 = vshll.u32 %v384, 16
        %v634 = vor.u32 %v631, %v632
        %v635 = vrot.slane %v631, 4
        %v637 = vshrl.u32 %v385, 16
        %v639 = vrot.slane %v637, 7
        %v640 = vshll.u32 %v385, 16
        %v642 = vor.u32 %v639, %v640
        %v643 = vsel %vm389, %v635, %v642
        %v644 = vrot.slane %v639, 4
        %v646 = vshrl.u32 %v386, 16
        %v648 = vrot.slane %v646, 7
        %v649 = vshll.u32 %v386, 16
        %v651 = vor.u32 %v648, %v649
        %v652 = vrot.slane %v648, 4
        %v654 = vshrl.u32 %v387, 16
        %v656 = vrot.slane %v654, 7
        %v657 = vshll.u32 %v387, 16
        %v659 = vor.u32 %v656, %v657
        %v660 = vsel %vm389, %v652, %v659
        %v661 = vrot.slane %v656, 4
        %vm710 = vcmask 257024
        %vm711 = vmand %vm710, %vm306
        %v712 = vld [vmem:[%s254] sm:$0xf]
        %v713 = vsel %vm711, %v396, %v712
        %714 = vst [vmem:[%s254] sm:$0xf] %v713
        %715 = vst.msk [vmem:[%s254 + $0x4] sm:$0xf] %vm245, %v405
        %v716 = vld [vmem:[%s254 + $0x8] sm:$0x1]
        %v717 = vsel %vm257, %v406, %v716
        %718 = vst [vmem:[%s254 + $0x8] sm:$0x1] %v717
        %v719 = vld [vmem:[%s254 + $0xc] sm:$0xf]
        %v720 = vsel %vm711, %v413, %v719
        %721 = vst [vmem:[%s254 + $0xc] sm:$0xf] %v720
        %722 = vst.msk [vmem:[%s254 + $0x10] sm:$0xf] %vm245, %v422
        %v723 = vld [vmem:[%s254 + $0x14] sm:$0x1]
        %v724 = vsel %vm257, %v423, %v723
        %725 = vst [vmem:[%s254 + $0x14] sm:$0x1] %v724
        %v726 = vld [vmem:[%s254 + $0x18] sm:$0xf]
        %v727 = vsel %vm711, %v430, %v726
        %728 = vst [vmem:[%s254 + $0x18] sm:$0xf] %v727
        %729 = vst.msk [vmem:[%s254 + $0x1c] sm:$0xf] %vm245, %v439
        %v730 = vld [vmem:[%s254 + $0x20] sm:$0x1]
        %v731 = vsel %vm257, %v440, %v730
        %732 = vst [vmem:[%s254 + $0x20] sm:$0x1] %v731
        %v733 = vld [vmem:[%s254 + $0x24] sm:$0xf]
        %v734 = vsel %vm711, %v447, %v733
        %735 = vst [vmem:[%s254 + $0x24] sm:$0xf] %v734
        %736 = vst.msk [vmem:[%s254 + $0x28] sm:$0xf] %vm245, %v456
        %v737 = vld [vmem:[%s254 + $0x2c] sm:$0x1]
        %v738 = vsel %vm257, %v457, %v737
        %739 = vst [vmem:[%s254 + $0x2c] sm:$0x1] %v738
        %v740 = vld [vmem:[%s254 + $0x30] sm:$0xf]
        %v741 = vsel %vm711, %v464, %v740
        %742 = vst [vmem:[%s254 + $0x30] sm:$0xf] %v741
        %743 = vst.msk [vmem:[%s254 + $0x34] sm:$0xf] %vm245, %v473
        %v744 = vld [vmem:[%s254 + $0x38] sm:$0x1]
        %v745 = vsel %vm257, %v474, %v744
        %746 = vst [vmem:[%s254 + $0x38] sm:$0x1] %v745
        %v747 = vld [vmem:[%s254 + $0x3c] sm:$0xf]
        %v748 = vsel %vm711, %v481, %v747
        %749 = vst [vmem:[%s254 + $0x3c] sm:$0xf] %v748
        %750 = vst.msk [vmem:[%s254 + $0x40] sm:$0xf] %vm245, %v490
        %v751 = vld [vmem:[%s254 + $0x44] sm:$0x1]
        %v752 = vsel %vm257, %v491, %v751
        %753 = vst [vmem:[%s254 + $0x44] sm:$0x1] %v752
        %v754 = vld [vmem:[%s254 + $0x48] sm:$0xf]
        %v755 = vsel %vm711, %v498, %v754
        %756 = vst [vmem:[%s254 + $0x48] sm:$0xf] %v755
        %757 = vst.msk [vmem:[%s254 + $0x4c] sm:$0xf] %vm245, %v507
        %v758 = vld [vmem:[%s254 + $0x50] sm:$0x1]
        %v759 = vsel %vm257, %v508, %v758
        %760 = vst [vmem:[%s254 + $0x50] sm:$0x1] %v759
        %v761 = vld [vmem:[%s254 + $0x54] sm:$0xf]
        %v762 = vsel %vm711, %v515, %v761
        %763 = vst [vmem:[%s254 + $0x54] sm:$0xf] %v762
        %764 = vst.msk [vmem:[%s254 + $0x58] sm:$0xf] %vm245, %v524
        %v765 = vld [vmem:[%s254 + $0x5c] sm:$0x1]
        %v766 = vsel %vm257, %v525, %v765
        %767 = vst [vmem:[%s254 + $0x5c] sm:$0x1] %v766
        %v768 = vld [vmem:[%s254 + $0x60] sm:$0xf]
        %v769 = vsel %vm711, %v532, %v768
        %770 = vst [vmem:[%s254 + $0x60] sm:$0xf] %v769
        %771 = vst.msk [vmem:[%s254 + $0x64] sm:$0xf] %vm245, %v541
        %v772 = vld [vmem:[%s254 + $0x68] sm:$0x1]
        %v773 = vsel %vm257, %v542, %v772
        %774 = vst [vmem:[%s254 + $0x68] sm:$0x1] %v773
        %v775 = vld [vmem:[%s254 + $0x6c] sm:$0xf]
        %v776 = vsel %vm711, %v549, %v775
        %777 = vst [vmem:[%s254 + $0x6c] sm:$0xf] %v776
        %778 = vst.msk [vmem:[%s254 + $0x70] sm:$0xf] %vm245, %v558
        %v779 = vld [vmem:[%s254 + $0x74] sm:$0x1]
        %v780 = vsel %vm257, %v559, %v779
        %781 = vst [vmem:[%s254 + $0x74] sm:$0x1] %v780
        %v782 = vld [vmem:[%s254 + $0x78] sm:$0xf]
        %v783 = vsel %vm711, %v566, %v782
        %784 = vst [vmem:[%s254 + $0x78] sm:$0xf] %v783
        %785 = vst.msk [vmem:[%s254 + $0x7c] sm:$0xf] %vm245, %v575
        %v786 = vld [vmem:[%s254 + $0x80] sm:$0x1]
        %v787 = vsel %vm257, %v576, %v786
        %788 = vst [vmem:[%s254 + $0x80] sm:$0x1] %v787
        %v789 = vld [vmem:[%s254 + $0x84] sm:$0xf]
        %v790 = vsel %vm711, %v583, %v789
        %791 = vst [vmem:[%s254 + $0x84] sm:$0xf] %v790
        %792 = vst.msk [vmem:[%s254 + $0x88] sm:$0xf] %vm245, %v592
        %v793 = vld [vmem:[%s254 + $0x8c] sm:$0x1]
        %v794 = vsel %vm257, %v593, %v793
        %795 = vst [vmem:[%s254 + $0x8c] sm:$0x1] %v794
        %v796 = vld [vmem:[%s254 + $0x90] sm:$0xf]
        %v797 = vsel %vm711, %v600, %v796
        %798 = vst [vmem:[%s254 + $0x90] sm:$0xf] %v797
        %799 = vst.msk [vmem:[%s254 + $0x94] sm:$0xf] %vm245, %v609
        %v800 = vld [vmem:[%s254 + $0x98] sm:$0x1]
        %v801 = vsel %vm257, %v610, %v800
        %802 = vst [vmem:[%s254 + $0x98] sm:$0x1] %v801
        %v803 = vld [vmem:[%s254 + $0x9c] sm:$0xf]
        %v804 = vsel %vm711, %v617, %v803
        %805 = vst [vmem:[%s254 + $0x9c] sm:$0xf] %v804
        %806 = vst.msk [vmem:[%s254 + $0xa0] sm:$0xf] %vm245, %v626
        %v807 = vld [vmem:[%s254 + $0xa4] sm:$0x1]
        %v808 = vsel %vm257, %v627, %v807
        %809 = vst [vmem:[%s254 + $0xa4] sm:$0x1] %v808
        %v810 = vld [vmem:[%s254 + $0xa8] sm:$0xf]
        %v811 = vsel %vm711, %v634, %v810
        %812 = vst [vmem:[%s254 + $0xa8] sm:$0xf] %v811
        %813 = vst.msk [vmem:[%s254 + $0xac] sm:$0xf] %vm245, %v643
        %v814 = vld [vmem:[%s254 + $0xb0] sm:$0x1]
        %v815 = vsel %vm257, %v644, %v814
        %816 = vst [vmem:[%s254 + $0xb0] sm:$0x1] %v815
        %v817 = vld [vmem:[%s254 + $0xb4] sm:$0xf]
        %v818 = vsel %vm711, %v651, %v817
        %819 = vst [vmem:[%s254 + $0xb4] sm:$0xf] %v818
        %820 = vst.msk [vmem:[%s254 + $0xb8] sm:$0xf] %vm245, %v660
        %v821 = vld [vmem:[%s254 + $0xbc] sm:$0x1]
        %v822 = vsel %vm257, %v661, %v821
        %823 = vst [vmem:[%s254 + $0xbc] sm:$0x1] %v822
        %v824 = vld [vmem:[#allocation2] sm:$0xf]
        %v825 = vld [vmem:[#allocation2 + $0x4] sm:$0xf]
        %v826 = vld [vmem:[#allocation2 + $0xc] sm:$0xf]
        %v827 = vld [vmem:[#allocation2 + $0x10] sm:$0xf]
        %v828 = vld [vmem:[#allocation2 + $0x18] sm:$0xf]
        %v829 = vld [vmem:[#allocation2 + $0x1c] sm:$0xf]
        %v830 = vld [vmem:[#allocation2 + $0x24] sm:$0xf]
        %v831 = vld [vmem:[#allocation2 + $0x28] sm:$0xf]
        %v832 = vld [vmem:[#allocation2 + $0x30] sm:$0xf]
        %v833 = vld [vmem:[#allocation2 + $0x34] sm:$0xf]
        %v834 = vld [vmem:[#allocation2 + $0x3c] sm:$0xf]
        %v835 = vld [vmem:[#allocation2 + $0x40] sm:$0xf]
        %v836 = vld [vmem:[#allocation2 + $0x48] sm:$0xf]
        %v837 = vld [vmem:[#allocation2 + $0x4c] sm:$0xf]
        %v838 = vld [vmem:[#allocation2 + $0x54] sm:$0xf]
        %v839 = vld [vmem:[#allocation2 + $0x58] sm:$0xf]
        %v840 = vld [vmem:[#allocation2 + $0x60] sm:$0xf]
        %v841 = vld [vmem:[#allocation2 + $0x64] sm:$0xf]
        %v842 = vld [vmem:[#allocation2 + $0x6c] sm:$0xf]
        %v843 = vld [vmem:[#allocation2 + $0x70] sm:$0xf]
        %v844 = vld [vmem:[#allocation2 + $0x78] sm:$0xf]
        %v845 = vld [vmem:[#allocation2 + $0x7c] sm:$0xf]
        %v846 = vld [vmem:[#allocation2 + $0x84] sm:$0xf]
        %v847 = vld [vmem:[#allocation2 + $0x88] sm:$0xf]
        %v848 = vld [vmem:[#allocation2 + $0x90] sm:$0xf]
        %v849 = vld [vmem:[#allocation2 + $0x94] sm:$0xf]
        %v850 = vld [vmem:[#allocation2 + $0x9c] sm:$0xf]
        %v851 = vld [vmem:[#allocation2 + $0xa0] sm:$0xf]
        %v852 = vld [vmem:[#allocation2 + $0xa8] sm:$0xf]
        %v853 = vld [vmem:[#allocation2 + $0xac] sm:$0xf]
        %v854 = vld [vmem:[#allocation2 + $0xb4] sm:$0xf]
        %v855 = vld [vmem:[#allocation2 + $0xb8] sm:$0xf]
        %v856 = vld [vmem:[%s1] sm:$0xf]
        %v857 = vld [vmem:[%s1 + $0x4] sm:$0xf]
        %v858 = vld [vmem:[%s1 + $0x8] sm:$0xf]
        %v859 = vld [vmem:[%s1 + $0xc] sm:$0xf]
        %v860 = vld [vmem:[#allocation2 + $0x8] sm:$0x1]
        %v861 = vld [vmem:[#allocation2 + $0x14] sm:$0x1]
        %v862 = vld [vmem:[#allocation2 + $0x20] sm:$0x1]
        %v863 = vld [vmem:[#allocation2 + $0x2c] sm:$0x1]
        %v864 = vld [vmem:[#allocation2 + $0x38] sm:$0x1]
        %v865 = vld [vmem:[#allocation2 + $0x44] sm:$0x1]
        %v866 = vld [vmem:[#allocation2 + $0x50] sm:$0x1]
        %v867 = vld [vmem:[#allocation2 + $0x5c] sm:$0x1]
        %v868 = vld [vmem:[#allocation2 + $0x68] sm:$0x1]
        %v869 = vld [vmem:[#allocation2 + $0x74] sm:$0x1]
        %v870 = vld [vmem:[#allocation2 + $0x80] sm:$0x1]
        %v871 = vld [vmem:[#allocation2 + $0x8c] sm:$0x1]
        %v872 = vld [vmem:[#allocation2 + $0x98] sm:$0x1]
        %v873 = vld [vmem:[#allocation2 + $0xa4] sm:$0x1]
        %v874 = vld [vmem:[#allocation2 + $0xb0] sm:$0x1]
        %v875 = vld [vmem:[#allocation2 + $0xbc] sm:$0x1]
        %vm876 = vsmask.f32 3328
        %vm877 = vsmask.f32 7440
        %vm878 = vmor %vm876, %vm877
        %v880 = vshrl.u32 %v824, 16
        %v882 = vrot.slane %v880, 4
        %v883 = vshll.u32 %v824, 16
        %v885 = vrot.slane %v883, 5
        %v886 = vor.u32 %v882, %v885
        %v887 = vrot.slane %v886, 4
        %v889 = vshll.u32 %v825, 16
        %v891 = vrot.slane %v889, 5
        %v892 = vsel %vm878, %v887, %v891
        %v893 = vshrl.u32 %v825, 16
        %v895 = vrot.slane %v893, 4
        %v896 = vor.u32 %v895, %v891
        %v897 = vrot.slane %v896, 4
        %v899 = vshll.u32 %v860, 16
        %v901 = vrot.slane %v899, 5
        %v902 = vsel %vm878, %v897, %v901
        %v904 = vshrl.u32 %v826, 16
        %v906 = vrot.slane %v904, 4
        %v907 = vshll.u32 %v826, 16
        %v909 = vrot.slane %v907, 5
        %v910 = vor.u32 %v906, %v909
        %v911 = vrot.slane %v910, 4
        %v913 = vshll.u32 %v827, 16
        %v915 = vrot.slane %v913, 5
        %v916 = vsel %vm878, %v911, %v915
        %v917 = vshrl.u32 %v827, 16
        %v919 = vrot.slane %v917, 4
        %v920 = vor.u32 %v919, %v915
        %v921 = vrot.slane %v920, 4
        %v923 = vshll.u32 %v861, 16
        %v925 = vrot.slane %v923, 5
        %v926 = vsel %vm878, %v921, %v925
        %v928 = vshrl.u32 %v828, 16
        %v930 = vrot.slane %v928, 4
        %v931 = vshll.u32 %v828, 16
        %v933 = vrot.slane %v931, 5
        %v934 = vor.u32 %v930, %v933
        %v935 = vrot.slane %v934, 4
        %v937 = vshll.u32 %v829, 16
        %v939 = vrot.slane %v937, 5
        %v940 = vsel %vm878, %v935, %v939
        %v941 = vshrl.u32 %v829, 16
        %v943 = vrot.slane %v941, 4
        %v944 = vor.u32 %v943, %v939
        %v945 = vrot.slane %v944, 4
        %v947 = vshll.u32 %v862, 16
        %v949 = vrot.slane %v947, 5
        %v950 = vsel %vm878, %v945, %v949
        %v952 = vshrl.u32 %v830, 16
        %v954 = vrot.slane %v952, 4
        %v955 = vshll.u32 %v830, 16
        %v957 = vrot.slane %v955, 5
        %v958 = vor.u32 %v954, %v957
        %v959 = vrot.slane %v958, 4
        %v961 = vshll.u32 %v831, 16
        %v963 = vrot.slane %v961, 5
        %v964 = vsel %vm878, %v959, %v963
        %v965 = vshrl.u32 %v831, 16
        %v967 = vrot.slane %v965, 4
        %v968 = vor.u32 %v967, %v963
        %v969 = vrot.slane %v968, 4
        %v971 = vshll.u32 %v863, 16
        %v973 = vrot.slane %v971, 5
        %v974 = vsel %vm878, %v969, %v973
        %v976 = vshrl.u32 %v832, 16
        %v978 = vrot.slane %v976, 4
        %v979 = vshll.u32 %v832, 16
        %v981 = vrot.slane %v979, 5
        %v982 = vor.u32 %v978, %v981
        %v983 = vrot.slane %v982, 4
        %v985 = vshll.u32 %v833, 16
        %v987 = vrot.slane %v985, 5
        %v988 = vsel %vm878, %v983, %v987
        %v989 = vshrl.u32 %v833, 16
        %v991 = vrot.slane %v989, 4
        %v992 = vor.u32 %v991, %v987
        %v993 = vrot.slane %v992, 4
        %v995 = vshll.u32 %v864, 16
        %v997 = vrot.slane %v995, 5
        %v998 = vsel %vm878, %v993, %v997
        %v1000 = vshrl.u32 %v834, 16
        %v1002 = vrot.slane %v1000, 4
        %v1003 = vshll.u32 %v834, 16
        %v1005 = vrot.slane %v1003, 5
        %v1006 = vor.u32 %v1002, %v1005
        %v1007 = vrot.slane %v1006, 4
        %v1009 = vshll.u32 %v835, 16
        %v1011 = vrot.slane %v1009, 5
        %v1012 = vsel %vm878, %v1007, %v1011
        %v1013 = vshrl.u32 %v835, 16
        %v1015 = vrot.slane %v1013, 4
        %v1016 = vor.u32 %v1015, %v1011
        %v1017 = vrot.slane %v1016, 4
        %v1019 = vshll.u32 %v865, 16
        %v1021 = vrot.slane %v1019, 5
        %v1022 = vsel %vm878, %v1017, %v1021
        %v1024 = vshrl.u32 %v836, 16
        %v1026 = vrot.slane %v1024, 4
        %v1027 = vshll.u32 %v836, 16
        %v1029 = vrot.slane %v1027, 5
        %v1030 = vor.u32 %v1026, %v1029
        %v1031 = vrot.slane %v1030, 4
        %v1033 = vshll.u32 %v837, 16
        %v1035 = vrot.slane %v1033, 5
        %v1036 = vsel %vm878, %v1031, %v1035
        %v1037 = vshrl.u32 %v837, 16
        %v1039 = vrot.slane %v1037, 4
        %v1040 = vor.u32 %v1039, %v1035
        %v1041 = vrot.slane %v1040, 4
        %v1043 = vshll.u32 %v866, 16
        %v1045 = vrot.slane %v1043, 5
        %v1046 = vsel %vm878, %v1041, %v1045
        %v1048 = vshrl.u32 %v838, 16
        %v1050 = vrot.slane %v1048, 4
        %v1051 = vshll.u32 %v838, 16
        %v1053 = vrot.slane %v1051, 5
        %v1054 = vor.u32 %v1050, %v1053
        %v1055 = vrot.slane %v1054, 4
        %v1057 = vshll.u32 %v839, 16
        %v1059 = vrot.slane %v1057, 5
        %v1060 = vsel %vm878, %v1055, %v1059
        %v1061 = vshrl.u32 %v839, 16
        %v1063 = vrot.slane %v1061, 4
        %v1064 = vor.u32 %v1063, %v1059
        %v1065 = vrot.slane %v1064, 4
        %v1067 = vshll.u32 %v867, 16
        %v1069 = vrot.slane %v1067, 5
        %v1070 = vsel %vm878, %v1065, %v1069
        %v1072 = vshrl.u32 %v840, 16
        %v1074 = vrot.slane %v1072, 4
        %v1075 = vshll.u32 %v840, 16
        %v1077 = vrot.slane %v1075, 5
        %v1078 = vor.u32 %v1074, %v1077
        %v1079 = vrot.slane %v1078, 4
        %v1081 = vshll.u32 %v841, 16
        %v1083 = vrot.slane %v1081, 5
        %v1084 = vsel %vm878, %v1079, %v1083
        %v1085 = vshrl.u32 %v841, 16
        %v1087 = vrot.slane %v1085, 4
        %v1088 = vor.u32 %v1087, %v1083
        %v1089 = vrot.slane %v1088, 4
        %v1091 = vshll.u32 %v868, 16
        %v1093 = vrot.slane %v1091, 5
        %v1094 = vsel %vm878, %v1089, %v1093
        %v1096 = vshrl.u32 %v842, 16
        %v1098 = vrot.slane %v1096, 4
        %v1099 = vshll.u32 %v842, 16
        %v1101 = vrot.slane %v1099, 5
        %v1102 = vor.u32 %v1098, %v1101
        %v1103 = vrot.slane %v1102, 4
        %v1105 = vshll.u32 %v843, 16
        %v1107 = vrot.slane %v1105, 5
        %v1108 = vsel %vm878, %v1103, %v1107
        %v1109 = vshrl.u32 %v843, 16
        %v1111 = vrot.slane %v1109, 4
        %v1112 = vor.u32 %v1111, %v1107
        %v1113 = vrot.slane %v1112, 4
        %v1115 = vshll.u32 %v869, 16
        %v1117 = vrot.slane %v1115, 5
        %v1118 = vsel %vm878, %v1113, %v1117
        %v1120 = vshrl.u32 %v844, 16
        %v1122 = vrot.slane %v1120, 4
        %v1123 = vshll.u32 %v844, 16
        %v1125 = vrot.slane %v1123, 5
        %v1126 = vor.u32 %v1122, %v1125
        %v1127 = vrot.slane %v1126, 4
        %v1129 = vshll.u32 %v845, 16
        %v1131 = vrot.slane %v1129, 5
        %v1132 = vsel %vm878, %v1127, %v1131
        %v1133 = vshrl.u32 %v845, 16
        %v1135 = vrot.slane %v1133, 4
        %v1136 = vor.u32 %v1135, %v1131
        %v1137 = vrot.slane %v1136, 4
        %v1139 = vshll.u32 %v870, 16
        %v1141 = vrot.slane %v1139, 5
        %v1142 = vsel %vm878, %v1137, %v1141
        %v1144 = vshrl.u32 %v846, 16
        %v1146 = vrot.slane %v1144, 4
        %v1147 = vshll.u32 %v846, 16
        %v1149 = vrot.slane %v1147, 5
        %v1150 = vor.u32 %v1146, %v1149
        %v1151 = vrot.slane %v1150, 4
        %v1153 = vshll.u32 %v847, 16
        %v1155 = vrot.slane %v1153, 5
        %v1156 = vsel %vm878, %v1151, %v1155
        %v1157 = vshrl.u32 %v847, 16
        %v1159 = vrot.slane %v1157, 4
        %v1160 = vor.u32 %v1159, %v1155
        %v1161 = vrot.slane %v1160, 4
        %v1163 = vshll.u32 %v871, 16
        %v1165 = vrot.slane %v1163, 5
        %v1166 = vsel %vm878, %v1161, %v1165
        %v1168 = vshrl.u32 %v848, 16
        %v1170 = vrot.slane %v1168, 4
        %v1171 = vshll.u32 %v848, 16
        %v1173 = vrot.slane %v1171, 5
        %v1174 = vor.u32 %v1170, %v1173
        %v1175 = vrot.slane %v1174, 4
        %v1177 = vshll.u32 %v849, 16
        %v1179 = vrot.slane %v1177, 5
        %v1180 = vsel %vm878, %v1175, %v1179
        %v1181 = vshrl.u32 %v849, 16
        %v1183 = vrot.slane %v1181, 4
        %v1184 = vor.u32 %v1183, %v1179
        %v1185 = vrot.slane %v1184, 4
        %v1187 = vshll.u32 %v872, 16
        %v1189 = vrot.slane %v1187, 5
        %v1190 = vsel %vm878, %v1185, %v1189
        %v1192 = vshrl.u32 %v850, 16
        %v1194 = vrot.slane %v1192, 4
        %v1195 = vshll.u32 %v850, 16
        %v1197 = vrot.slane %v1195, 5
        %v1198 = vor.u32 %v1194, %v1197
        %v1199 = vrot.slane %v1198, 4
        %v1201 = vshll.u32 %v851, 16
        %v1203 = vrot.slane %v1201, 5
        %v1204 = vsel %vm878, %v1199, %v1203
        %v1205 = vshrl.u32 %v851, 16
        %v1207 = vrot.slane %v1205, 4
        %v1208 = vor.u32 %v1207, %v1203
        %v1209 = vrot.slane %v1208, 4
        %v1211 = vshll.u32 %v873, 16
        %v1213 = vrot.slane %v1211, 5
        %v1214 = vsel %vm878, %v1209, %v1213
        %v1216 = vshrl.u32 %v852, 16
        %v1218 = vrot.slane %v1216, 4
        %v1219 = vshll.u32 %v852, 16
        %v1221 = vrot.slane %v1219, 5
        %v1222 = vor.u32 %v1218, %v1221
        %v1223 = vrot.slane %v1222, 4
        %v1225 = vshll.u32 %v853, 16
        %v1227 = vrot.slane %v1225, 5
        %v1228 = vsel %vm878, %v1223, %v1227
        %v1229 = vshrl.u32 %v853, 16
        %v1231 = vrot.slane %v1229, 4
        %v1232 = vor.u32 %v1231, %v1227
        %v1233 = vrot.slane %v1232, 4
        %v1235 = vshll.u32 %v874, 16
        %v1237 = vrot.slane %v1235, 5
        %v1238 = vsel %vm878, %v1233, %v1237
        %v1240 = vshrl.u32 %v854, 16
        %v1242 = vrot.slane %v1240, 4
        %v1243 = vshll.u32 %v854, 16
        %v1245 = vrot.slane %v1243, 5
        %v1246 = vor.u32 %v1242, %v1245
        %v1247 = vrot.slane %v1246, 4
        %v1249 = vshll.u32 %v855, 16
        %v1251 = vrot.slane %v1249, 5
        %v1252 = vsel %vm878, %v1247, %v1251
        %v1253 = vshrl.u32 %v855, 16
        %v1255 = vrot.slane %v1253, 4
        %v1256 = vor.u32 %v1255, %v1251
        %v1257 = vrot.slane %v1256, 4
        %v1259 = vshll.u32 %v875, 16
        %v1261 = vrot.slane %v1259, 5
        %v1262 = vsel %vm878, %v1257, %v1261
        %s1263 = scalar_lea.vmem %s1, 16
        %v1264 = vld [vmem:[%s1263] sm:$0xf]
        %v1265 = vld [vmem:[%s1263 + $0x4] sm:$0xf]
        %v1266 = vld [vmem:[%s1263 + $0x8] sm:$0xf]
        %v1267 = vld [vmem:[%s1263 + $0xc] sm:$0xf]
        %v1268 = vunpack.c.l.b16 %v892
        %v1269 = vunpack.c.l.b16 %v902
        %v1270 = vunpack.c.l.b16 %v916
        %v1271 = vunpack.c.l.b16 %v926
        %v1272 = vunpack.c.l.b16 %v940
        %v1273 = vunpack.c.l.b16 %v950
        %v1274 = vunpack.c.l.b16 %v964
        %v1275 = vunpack.c.l.b16 %v974
        %v1276 = vunpack.c.l.b16 %v988
        %v1277 = vunpack.c.l.b16 %v998
        %v1278 = vunpack.c.l.b16 %v1012
        %v1279 = vunpack.c.l.b16 %v1022
        %v1280 = vunpack.c.l.b16 %v1036
        %v1281 = vunpack.c.l.b16 %v1046
        %v1282 = vunpack.c.l.b16 %v1060
        %v1283 = vunpack.c.l.b16 %v1070
        %v1284 = vunpack.c.l.b16 %v1084
        %v1285 = vunpack.c.l.b16 %v1094
        %v1286 = vunpack.c.l.b16 %v1108
        %v1287 = vunpack.c.l.b16 %v1118
        %v1288 = vunpack.c.l.b16 %v1132
        %v1289 = vunpack.c.l.b16 %v1142
        %v1290 = vunpack.c.l.b16 %v1156
        %v1291 = vunpack.c.l.b16 %v1166
        %v1292 = vunpack.c.l.b16 %v1180
        %v1293 = vunpack.c.l.b16 %v1190
        %v1294 = vunpack.c.l.b16 %v1204
        %v1295 = vunpack.c.l.b16 %v1214
        %v1296 = vunpack.c.l.b16 %v1228
        %v1297 = vunpack.c.l.b16 %v1238
        %v1298 = vunpack.c.l.b16 %v1252
        %v1299 = vunpack.c.l.b16 %v1262
        %v1300 = vpack.c.b16 %v1269, %v1268
        %v1301 = vpack.c.b16 %v1271, %v1270
        %v1302 = vpack.c.b16 %v1273, %v1272
        %v1303 = vpack.c.b16 %v1275, %v1274
        %v1304 = vpack.c.b16 %v1277, %v1276
        %v1305 = vpack.c.b16 %v1279, %v1278
        %v1306 = vpack.c.b16 %v1281, %v1280
        %v1307 = vpack.c.b16 %v1283, %v1282
        %v1308 = vpack.c.b16 %v1285, %v1284
        %v1309 = vpack.c.b16 %v1287, %v1286
        %v1310 = vpack.c.b16 %v1289, %v1288
        %v1311 = vpack.c.b16 %v1291, %v1290
        %v1312 = vpack.c.b16 %v1293, %v1292
        %v1313 = vpack.c.b16 %v1295, %v1294
        %v1314 = vpack.c.b16 %v1297, %v1296
        %v1315 = vpack.c.b16 %v1299, %v1298
        %v1320 = vunpack.c.l.b16 %v1264
        %v1321 = vunpack.c.l.b16 %v1265
        %v1322 = vunpack.c.l.b16 %v1266
        %v1323 = vunpack.c.l.b16 %v1267
        %v1324 = vpack.c.b16 %v1321, %v1320
        %v1325 = vpack.c.b16 %v1323, %v1322
        %vm1328 = vcmask 261120
        %v1330 = vsel %vm1328, %v1300, 0
        %v1333 = vsel %vm1328, %v1301, 0
        %v1336 = vsel %vm1328, %v1302, 0
        %v1339 = vsel %vm1328, %v1303, 0
        %v1342 = vsel %vm1328, %v1304, 0
        %v1345 = vsel %vm1328, %v1305, 0
        %v1348 = vsel %vm1328, %v1306, 0
        %v1351 = vsel %vm1328, %v1307, 0
        %v1354 = vsel %vm1328, %v1308, 0
        %v1357 = vsel %vm1328, %v1309, 0
        %v1360 = vsel %vm1328, %v1310, 0
        %v1363 = vsel %vm1328, %v1311, 0
        %v1366 = vsel %vm1328, %v1312, 0
        %v1369 = vsel %vm1328, %v1313, 0
        %v1372 = vsel %vm1328, %v1314, 0
        %v1375 = vsel %vm1328, %v1315, 0
        %1377 = vmatprep.subr.bf16.mxu0 0
        %1378 = vmatpush1.bf16.msra.mxu0 0
        %1379 = vmatprep.subr.bf16.mxu0 0
        %1380 = vmatpush1.bf16.msra.mxu0 0
        %1381 = vmatprep.subr.bf16.mxu0 0
        %1382 = vmatpush1.bf16.msra.mxu0 0
        %1383 = vmatprep.subr.bf16.mxu0 0
        %1384 = vmatpush1.bf16.msra.mxu0 0
        %1385 = vmatprep.subr.bf16.mxu0 0
        %1386 = vmatpush1.bf16.msra.mxu0 0
        %1387 = vmatprep.subr.bf16.mxu0 0
        %1388 = vmatpush1.bf16.msra.mxu0 0
        %1389 = vmatprep.subr.bf16.mxu0 0
        %1390 = vmatpush1.bf16.msra.mxu0 %v1325
        %1391 = vmatprep.subr.bf16.mxu0 0
        %1392 = vmatpush1.bf16.msra.mxu0 %v1324
        %1393 = vmatprep.subr.bf16.mxu0 0
        %1394 = vmatpush2.bf16.msra.mxu0 0
        %1395 = vmatprep.subr.bf16.mxu0 0
        %1396 = vmatpush2.bf16.msra.mxu0 0
        %1397 = vmatprep.subr.bf16.mxu0 0
        %1398 = vmatpush2.bf16.msra.mxu0 0
        %1399 = vmatprep.subr.bf16.mxu0 0
        %1400 = vmatpush2.bf16.msra.mxu0 0
        %1401 = vmatprep.subr.bf16.mxu0 0
        %1402 = vmatpush2.bf16.msra.mxu0 0
        %1403 = vmatprep.subr.bf16.mxu0 0
        %1404 = vmatpush2.bf16.msra.mxu0 0
        %1405 = vmatprep.subr.bf16.mxu0 0
        %1406 = vmatpush2.bf16.msra.mxu0 0
        %1407 = vmatprep.subr.bf16.mxu0 0
        %1408 = vmatpush2.bf16.msra.mxu0 0
        %1409 = vmatprep.mubr.bf16.mxu0 0
        %1410 = vmatmul.mubr.bf16.gmra.mxu0 %v1330
        %v1411 = vpop.f32.mrf.mxu0
        %v1412 = vadd.f32 0.0, %v1411
        %v1413 = vpop.f32.mrf.mxu0
        %v1414 = vpop.f32.mrf.mxu0
        %v1415 = vadd.f32 0.0, %v1414
        %v1416 = vpop.f32.mrf.mxu0
        %1417 = vmatprep.mubr.bf16.mxu0 0
        %1418 = vmatmul.mubr.bf16.gmra.mxu0 %v1333
        %v1419 = vpop.f32.mrf.mxu0
        %v1420 = vadd.f32 0.0, %v1419
        %v1421 = vpop.f32.mrf.mxu0
        %v1422 = vpop.f32.mrf.mxu0
        %v1423 = vadd.f32 0.0, %v1422
        %v1424 = vpop.f32.mrf.mxu0
        %1425 = vmatprep.mubr.bf16.mxu0 0
        %1426 = vmatmul.mubr.bf16.gmra.mxu0 %v1336
        %v1427 = vpop.f32.mrf.mxu0
        %v1428 = vadd.f32 0.0, %v1427
        %v1429 = vpop.f32.mrf.mxu0
        %v1430 = vpop.f32.mrf.mxu0
        %v1431 = vadd.f32 0.0, %v1430
        %v1432 = vpop.f32.mrf.mxu0
        %1433 = vmatprep.mubr.bf16.mxu0 0
        %1434 = vmatmul.mubr.bf16.gmra.mxu0 %v1339
        %v1435 = vpop.f32.mrf.mxu0
        %v1436 = vadd.f32 0.0, %v1435
        %v1437 = vpop.f32.mrf.mxu0
        %v1438 = vpop.f32.mrf.mxu0
        %v1439 = vadd.f32 0.0, %v1438
        %v1440 = vpop.f32.mrf.mxu0
        %1441 = vmatprep.mubr.bf16.mxu0 0
        %1442 = vmatmul.mubr.bf16.gmra.mxu0 %v1342
        %v1443 = vpop.f32.mrf.mxu0
        %v1444 = vadd.f32 0.0, %v1443
        %v1445 = vpop.f32.mrf.mxu0
        %v1446 = vpop.f32.mrf.mxu0
        %v1447 = vadd.f32 0.0, %v1446
        %v1448 = vpop.f32.mrf.mxu0
        %1449 = vmatprep.mubr.bf16.mxu0 0
        %1450 = vmatmul.mubr.bf16.gmra.mxu0 %v1345
        %v1451 = vpop.f32.mrf.mxu0
        %v1452 = vadd.f32 0.0, %v1451
        %v1453 = vpop.f32.mrf.mxu0
        %v1454 = vpop.f32.mrf.mxu0
        %v1455 = vadd.f32 0.0, %v1454
        %v1456 = vpop.f32.mrf.mxu0
        %1457 = vmatprep.mubr.bf16.mxu0 0
        %1458 = vmatmul.mubr.bf16.gmra.mxu0 %v1348
        %v1459 = vpop.f32.mrf.mxu0
        %v1460 = vadd.f32 0.0, %v1459
        %v1461 = vpop.f32.mrf.mxu0
        %v1462 = vpop.f32.mrf.mxu0
        %v1463 = vadd.f32 0.0, %v1462
        %v1464 = vpop.f32.mrf.mxu0
        %1465 = vmatprep.mubr.bf16.mxu0 0
        %1466 = vmatmul.mubr.bf16.gmra.mxu0 %v1351
        %v1467 = vpop.f32.mrf.mxu0
        %v1468 = vadd.f32 0.0, %v1467
        %v1469 = vpop.f32.mrf.mxu0
        %v1470 = vpop.f32.mrf.mxu0
        %v1471 = vadd.f32 0.0, %v1470
        %v1472 = vpop.f32.mrf.mxu0
        %1473 = vmatprep.mubr.bf16.mxu0 0
        %1474 = vmatmul.mubr.bf16.gmra.mxu0 %v1354
        %v1475 = vpop.f32.mrf.mxu0
        %v1476 = vadd.f32 0.0, %v1475
        %v1477 = vpop.f32.mrf.mxu0
        %v1478 = vpop.f32.mrf.mxu0
        %v1479 = vadd.f32 0.0, %v1478
        %v1480 = vpop.f32.mrf.mxu0
        %1481 = vmatprep.mubr.bf16.mxu0 0
        %1482 = vmatmul.mubr.bf16.gmra.mxu0 %v1357
        %v1483 = vpop.f32.mrf.mxu0
        %v1484 = vadd.f32 0.0, %v1483
        %v1485 = vpop.f32.mrf.mxu0
        %v1486 = vpop.f32.mrf.mxu0
        %v1487 = vadd.f32 0.0, %v1486
        %v1488 = vpop.f32.mrf.mxu0
        %1489 = vmatprep.mubr.bf16.mxu0 0
        %1490 = vmatmul.mubr.bf16.gmra.mxu0 %v1360
        %v1491 = vpop.f32.mrf.mxu0
        %v1492 = vadd.f32 0.0, %v1491
        %v1493 = vpop.f32.mrf.mxu0
        %v1494 = vpop.f32.mrf.mxu0
        %v1495 = vadd.f32 0.0, %v1494
        %v1496 = vpop.f32.mrf.mxu0
        %1497 = vmatprep.mubr.bf16.mxu0 0
        %1498 = vmatmul.mubr.bf16.gmra.mxu0 %v1363
        %v1499 = vpop.f32.mrf.mxu0
        %v1500 = vadd.f32 0.0, %v1499
        %v1501 = vpop.f32.mrf.mxu0
        %v1502 = vpop.f32.mrf.mxu0
        %v1503 = vadd.f32 0.0, %v1502
        %v1504 = vpop.f32.mrf.mxu0
        %1505 = vmatprep.mubr.bf16.mxu0 0
        %1506 = vmatmul.mubr.bf16.gmra.mxu0 %v1366
        %v1507 = vpop.f32.mrf.mxu0
        %v1508 = vadd.f32 0.0, %v1507
        %v1509 = vpop.f32.mrf.mxu0
        %v1510 = vpop.f32.mrf.mxu0
        %v1511 = vadd.f32 0.0, %v1510
        %v1512 = vpop.f32.mrf.mxu0
        %1513 = vmatprep.mubr.bf16.mxu0 0
        %1514 = vmatmul.mubr.bf16.gmra.mxu0 %v1369
        %v1515 = vpop.f32.mrf.mxu0
        %v1516 = vadd.f32 0.0, %v1515
        %v1517 = vpop.f32.mrf.mxu0
        %v1518 = vpop.f32.mrf.mxu0
        %v1519 = vadd.f32 0.0, %v1518
        %v1520 = vpop.f32.mrf.mxu0
        %1521 = vmatprep.mubr.bf16.mxu0 0
        %1522 = vmatmul.mubr.bf16.gmra.mxu0 %v1372
        %v1523 = vpop.f32.mrf.mxu0
        %v1524 = vadd.f32 0.0, %v1523
        %v1525 = vpop.f32.mrf.mxu0
        %v1526 = vpop.f32.mrf.mxu0
        %v1527 = vadd.f32 0.0, %v1526
        %v1528 = vpop.f32.mrf.mxu0
        %1529 = vmatprep.mubr.bf16.mxu0 0
        %1530 = vmatmul.mubr.bf16.gmra.mxu0 %v1375
        %v1531 = vpop.f32.mrf.mxu0
        %v1532 = vadd.f32 0.0, %v1531
        %v1533 = vpop.f32.mrf.mxu0
        %v1534 = vpop.f32.mrf.mxu0
        %v1535 = vadd.f32 0.0, %v1534
        %v1536 = vpop.f32.mrf.mxu0
        %1537 = vdwg.mxu0
        %v1570 = vunpack.c.l.b16 %v824
        %v1571 = vunpack.c.l.b16 %v825
        %v1572 = vunpack.c.l.b16 %v826
        %v1573 = vunpack.c.l.b16 %v827
        %v1574 = vunpack.c.l.b16 %v828
        %v1575 = vunpack.c.l.b16 %v829
        %v1576 = vunpack.c.l.b16 %v830
        %v1577 = vunpack.c.l.b16 %v831
        %v1578 = vunpack.c.l.b16 %v832
        %v1579 = vunpack.c.l.b16 %v833
        %v1580 = vunpack.c.l.b16 %v834
        %v1581 = vunpack.c.l.b16 %v835
        %v1582 = vunpack.c.l.b16 %v836
        %v1583 = vunpack.c.l.b16 %v837
        %v1584 = vunpack.c.l.b16 %v838
        %v1585 = vunpack.c.l.b16 %v839
        %v1586 = vunpack.c.l.b16 %v840
        %v1587 = vunpack.c.l.b16 %v841
        %v1588 = vunpack.c.l.b16 %v842
        %v1589 = vunpack.c.l.b16 %v843
        %v1590 = vunpack.c.l.b16 %v844
        %v1591 = vunpack.c.l.b16 %v845
        %v1592 = vunpack.c.l.b16 %v846
        %v1593 = vunpack.c.l.b16 %v847
        %v1594 = vunpack.c.l.b16 %v848
        %v1595 = vunpack.c.l.b16 %v849
        %v1596 = vunpack.c.l.b16 %v850
        %v1597 = vunpack.c.l.b16 %v851
        %v1598 = vunpack.c.l.b16 %v852
        %v1599 = vunpack.c.l.b16 %v853
        %v1600 = vunpack.c.l.b16 %v854
        %v1601 = vunpack.c.l.b16 %v855
        %v1602 = vpack.c.b16 %v1571, %v1570
        %v1603 = vpack.c.b16 %v1573, %v1572
        %v1604 = vpack.c.b16 %v1575, %v1574
        %v1605 = vpack.c.b16 %v1577, %v1576
        %v1606 = vpack.c.b16 %v1579, %v1578
        %v1607 = vpack.c.b16 %v1581, %v1580
        %v1608 = vpack.c.b16 %v1583, %v1582
        %v1609 = vpack.c.b16 %v1585, %v1584
        %v1610 = vpack.c.b16 %v1587, %v1586
        %v1611 = vpack.c.b16 %v1589, %v1588
        %v1612 = vpack.c.b16 %v1591, %v1590
        %v1613 = vpack.c.b16 %v1593, %v1592
        %v1614 = vpack.c.b16 %v1595, %v1594
        %v1615 = vpack.c.b16 %v1597, %v1596
        %v1616 = vpack.c.b16 %v1599, %v1598
        %v1617 = vpack.c.b16 %v1601, %v1600
        %v1622 = vunpack.c.l.b16 %v856
        %v1623 = vunpack.c.l.b16 %v857
        %v1624 = vunpack.c.l.b16 %v858
        %v1625 = vunpack.c.l.b16 %v859
        %v1626 = vpack.c.b16 %v1623, %v1622
        %v1627 = vpack.c.b16 %v1625, %v1624
        %v1631 = vsel %vm1328, %v1602, 0
        %v1634 = vsel %vm1328, %v1603, 0
        %v1637 = vsel %vm1328, %v1604, 0
        %v1640 = vsel %vm1328, %v1605, 0
        %v1643 = vsel %vm1328, %v1606, 0
        %v1646 = vsel %vm1328, %v1607, 0
        %v1649 = vsel %vm1328, %v1608, 0
        %v1652 = vsel %vm1328, %v1609, 0
        %v1655 = vsel %vm1328, %v1610, 0
        %v1658 = vsel %vm1328, %v1611, 0
        %v1661 = vsel %vm1328, %v1612, 0
        %v1664 = vsel %vm1328, %v1613, 0
        %v1667 = vsel %vm1328, %v1614, 0
        %v1670 = vsel %vm1328, %v1615, 0
        %v1673 = vsel %vm1328, %v1616, 0
        %v1676 = vsel %vm1328, %v1617, 0
        %1678 = vmatprep.subr.bf16.mxu0 0
        %1679 = vmatpush1.bf16.msra.mxu0 0
        %1680 = vmatprep.subr.bf16.mxu0 0
        %1681 = vmatpush1.bf16.msra.mxu0 0
        %1682 = vmatprep.subr.bf16.mxu0 0
        %1683 = vmatpush1.bf16.msra.mxu0 0
        %1684 = vmatprep.subr.bf16.mxu0 0
        %1685 = vmatpush1.bf16.msra.mxu0 0
        %1686 = vmatprep.subr.bf16.mxu0 0
        %1687 = vmatpush1.bf16.msra.mxu0 0
        %1688 = vmatprep.subr.bf16.mxu0 0
        %1689 = vmatpush1.bf16.msra.mxu0 0
        %1690 = vmatprep.subr.bf16.mxu0 0
        %1691 = vmatpush1.bf16.msra.mxu0 %v1627
        %1692 = vmatprep.subr.bf16.mxu0 0
        %1693 = vmatpush1.bf16.msra.mxu0 %v1626
        %1694 = vmatprep.subr.bf16.mxu0 0
        %1695 = vmatpush2.bf16.msra.mxu0 0
        %1696 = vmatprep.subr.bf16.mxu0 0
        %1697 = vmatpush2.bf16.msra.mxu0 0
        %1698 = vmatprep.subr.bf16.mxu0 0
        %1699 = vmatpush2.bf16.msra.mxu0 0
        %1700 = vmatprep.subr.bf16.mxu0 0
        %1701 = vmatpush2.bf16.msra.mxu0 0
        %1702 = vmatprep.subr.bf16.mxu0 0
        %1703 = vmatpush2.bf16.msra.mxu0 0
        %1704 = vmatprep.subr.bf16.mxu0 0
        %1705 = vmatpush2.bf16.msra.mxu0 0
        %1706 = vmatprep.subr.bf16.mxu0 0
        %1707 = vmatpush2.bf16.msra.mxu0 0
        %1708 = vmatprep.subr.bf16.mxu0 0
        %1709 = vmatpush2.bf16.msra.mxu0 0
        %1710 = vmatprep.mubr.bf16.mxu0 0
        %1711 = vmatmul.mubr.bf16.gmra.mxu0 %v1631
        %v1712 = vpop.f32.mrf.mxu0
        %v1713 = vadd.f32 %v1412, %v1712
        %v1714 = vpop.f32.mrf.mxu0
        %v1715 = vpop.f32.mrf.mxu0
        %v1716 = vadd.f32 %v1415, %v1715
        %v1717 = vpop.f32.mrf.mxu0
        %1718 = vmatprep.mubr.bf16.mxu0 0
        %1719 = vmatmul.mubr.bf16.gmra.mxu0 %v1634
        %v1720 = vpop.f32.mrf.mxu0
        %v1721 = vadd.f32 %v1420, %v1720
        %v1722 = vpop.f32.mrf.mxu0
        %v1723 = vpop.f32.mrf.mxu0
        %v1724 = vadd.f32 %v1423, %v1723
        %v1725 = vpop.f32.mrf.mxu0
        %1726 = vmatprep.mubr.bf16.mxu0 0
        %1727 = vmatmul.mubr.bf16.gmra.mxu0 %v1637
        %v1728 = vpop.f32.mrf.mxu0
        %v1729 = vadd.f32 %v1428, %v1728
        %v1730 = vpop.f32.mrf.mxu0
        %v1731 = vpop.f32.mrf.mxu0
        %v1732 = vadd.f32 %v1431, %v1731
        %v1733 = vpop.f32.mrf.mxu0
        %1734 = vmatprep.mubr.bf16.mxu0 0
        %1735 = vmatmul.mubr.bf16.gmra.mxu0 %v1640
        %v1736 = vpop.f32.mrf.mxu0
        %v1737 = vadd.f32 %v1436, %v1736
        %v1738 = vpop.f32.mrf.mxu0
        %v1739 = vpop.f32.mrf.mxu0
        %v1740 = vadd.f32 %v1439, %v1739
        %v1741 = vpop.f32.mrf.mxu0
        %1742 = vmatprep.mubr.bf16.mxu0 0
        %1743 = vmatmul.mubr.bf16.gmra.mxu0 %v1643
        %v1744 = vpop.f32.mrf.mxu0
        %v1745 = vadd.f32 %v1444, %v1744
        %v1746 = vpop.f32.mrf.mxu0
        %v1747 = vpop.f32.mrf.mxu0
        %v1748 = vadd.f32 %v1447, %v1747
        %v1749 = vpop.f32.mrf.mxu0
        %1750 = vmatprep.mubr.bf16.mxu0 0
        %1751 = vmatmul.mubr.bf16.gmra.mxu0 %v1646
        %v1752 = vpop.f32.mrf.mxu0
        %v1753 = vadd.f32 %v1452, %v1752
        %v1754 = vpop.f32.mrf.mxu0
        %v1755 = vpop.f32.mrf.mxu0
        %v1756 = vadd.f32 %v1455, %v1755
        %v1757 = vpop.f32.mrf.mxu0
        %1758 = vmatprep.mubr.bf16.mxu0 0
        %1759 = vmatmul.mubr.bf16.gmra.mxu0 %v1649
        %v1760 = vpop.f32.mrf.mxu0
        %v1761 = vadd.f32 %v1460, %v1760
        %v1762 = vpop.f32.mrf.mxu0
        %v1763 = vpop.f32.mrf.mxu0
        %v1764 = vadd.f32 %v1463, %v1763
        %v1765 = vpop.f32.mrf.mxu0
        %1766 = vmatprep.mubr.bf16.mxu0 0
        %1767 = vmatmul.mubr.bf16.gmra.mxu0 %v1652
        %v1768 = vpop.f32.mrf.mxu0
        %v1769 = vadd.f32 %v1468, %v1768
        %v1770 = vpop.f32.mrf.mxu0
        %v1771 = vpop.f32.mrf.mxu0
        %v1772 = vadd.f32 %v1471, %v1771
        %v1773 = vpop.f32.mrf.mxu0
        %1774 = vmatprep.mubr.bf16.mxu0 0
        %1775 = vmatmul.mubr.bf16.gmra.mxu0 %v1655
        %v1776 = vpop.f32.mrf.mxu0
        %v1777 = vadd.f32 %v1476, %v1776
        %v1778 = vpop.f32.mrf.mxu0
        %v1779 = vpop.f32.mrf.mxu0
        %v1780 = vadd.f32 %v1479, %v1779
        %v1781 = vpop.f32.mrf.mxu0
        %1782 = vmatprep.mubr.bf16.mxu0 0
        %1783 = vmatmul.mubr.bf16.gmra.mxu0 %v1658
        %v1784 = vpop.f32.mrf.mxu0
        %v1785 = vadd.f32 %v1484, %v1784
        %v1786 = vpop.f32.mrf.mxu0
        %v1787 = vpop.f32.mrf.mxu0
        %v1788 = vadd.f32 %v1487, %v1787
        %v1789 = vpop.f32.mrf.mxu0
        %1790 = vmatprep.mubr.bf16.mxu0 0
        %1791 = vmatmul.mubr.bf16.gmra.mxu0 %v1661
        %v1792 = vpop.f32.mrf.mxu0
        %v1793 = vadd.f32 %v1492, %v1792
        %v1794 = vpop.f32.mrf.mxu0
        %v1795 = vpop.f32.mrf.mxu0
        %v1796 = vadd.f32 %v1495, %v1795
        %v1797 = vpop.f32.mrf.mxu0
        %1798 = vmatprep.mubr.bf16.mxu0 0
        %1799 = vmatmul.mubr.bf16.gmra.mxu0 %v1664
        %v1800 = vpop.f32.mrf.mxu0
        %v1801 = vadd.f32 %v1500, %v1800
        %v1802 = vpop.f32.mrf.mxu0
        %v1803 = vpop.f32.mrf.mxu0
        %v1804 = vadd.f32 %v1503, %v1803
        %v1805 = vpop.f32.mrf.mxu0
        %1806 = vmatprep.mubr.bf16.mxu0 0
        %1807 = vmatmul.mubr.bf16.gmra.mxu0 %v1667
        %v1808 = vpop.f32.mrf.mxu0
        %v1809 = vadd.f32 %v1508, %v1808
        %v1810 = vpop.f32.mrf.mxu0
        %v1811 = vpop.f32.mrf.mxu0
        %v1812 = vadd.f32 %v1511, %v1811
        %v1813 = vpop.f32.mrf.mxu0
        %1814 = vmatprep.mubr.bf16.mxu0 0
        %1815 = vmatmul.mubr.bf16.gmra.mxu0 %v1670
        %v1816 = vpop.f32.mrf.mxu0
        %v1817 = vadd.f32 %v1516, %v1816
        %v1818 = vpop.f32.mrf.mxu0
        %v1819 = vpop.f32.mrf.mxu0
        %v1820 = vadd.f32 %v1519, %v1819
        %v1821 = vpop.f32.mrf.mxu0
        %1822 = vmatprep.mubr.bf16.mxu0 0
        %1823 = vmatmul.mubr.bf16.gmra.mxu0 %v1673
        %v1824 = vpop.f32.mrf.mxu0
        %v1825 = vadd.f32 %v1524, %v1824
        %v1826 = vpop.f32.mrf.mxu0
        %v1827 = vpop.f32.mrf.mxu0
        %v1828 = vadd.f32 %v1527, %v1827
        %v1829 = vpop.f32.mrf.mxu0
        %1830 = vmatprep.mubr.bf16.mxu0 0
        %1831 = vmatmul.mubr.bf16.gmra.mxu0 %v1676
        %v1832 = vpop.f32.mrf.mxu0
        %v1833 = vadd.f32 %v1532, %v1832
        %v1834 = vpop.f32.mrf.mxu0
        %v1835 = vpop.f32.mrf.mxu0
        %v1836 = vadd.f32 %v1535, %v1835
        %v1837 = vpop.f32.mrf.mxu0
        %1838 = vdwg.mxu0
        %v1839 = vld [vmem:[#allocation2] sm:$0xe]
        %v1840 = vld [vmem:[#allocation2 + $0xc] sm:$0xe]
        %v1841 = vld [vmem:[#allocation2 + $0x18] sm:$0xe]
        %v1842 = vld [vmem:[#allocation2 + $0x24] sm:$0xe]
        %v1843 = vld [vmem:[#allocation2 + $0x30] sm:$0xe]
        %v1844 = vld [vmem:[#allocation2 + $0x3c] sm:$0xe]
        %v1845 = vld [vmem:[#allocation2 + $0x48] sm:$0xe]
        %v1846 = vld [vmem:[#allocation2 + $0x54] sm:$0xe]
        %v1847 = vld [vmem:[#allocation2 + $0x60] sm:$0xe]
        %v1848 = vld [vmem:[#allocation2 + $0x6c] sm:$0xe]
        %v1849 = vld [vmem:[#allocation2 + $0x78] sm:$0xe]
        %v1850 = vld [vmem:[#allocation2 + $0x84] sm:$0xe]
        %v1851 = vld [vmem:[#allocation2 + $0x90] sm:$0xe]
        %v1852 = vld [vmem:[#allocation2 + $0x9c] sm:$0xe]
        %v1853 = vld [vmem:[#allocation2 + $0xa8] sm:$0xe]
        %v1854 = vld [vmem:[#allocation2 + $0xb4] sm:$0xe]
        %vm1887 = vcmask 1042432
        %vm1888 = vcmask 1046532
        %vm1889 = vmor %vm1887, %vm1888
        %v1890 = vrot.slane %v1839, 5
        %v1891 = vrot.slane %v1890, 4
        %v1892 = vrot.slane %v825, 5
        %v1893 = vsel %vm1889, %v1891, %v1892
        %v1894 = vrot.slane %v1892, 4
        %v1895 = vrot.slane %v860, 5
        %v1896 = vsel %vm1889, %v1894, %v1895
        %v1897 = vrot.slane %v1840, 5
        %v1898 = vrot.slane %v1897, 4
        %v1899 = vrot.slane %v827, 5
        %v1900 = vsel %vm1889, %v1898, %v1899
        %v1901 = vrot.slane %v1899, 4
        %v1902 = vrot.slane %v861, 5
        %v1903 = vsel %vm1889, %v1901, %v1902
        %v1904 = vrot.slane %v1841, 5
        %v1905 = vrot.slane %v1904, 4
        %v1906 = vrot.slane %v829, 5
        %v1907 = vsel %vm1889, %v1905, %v1906
        %v1908 = vrot.slane %v1906, 4
        %v1909 = vrot.slane %v862, 5
        %v1910 = vsel %vm1889, %v1908, %v1909
        %v1911 = vrot.slane %v1842, 5
        %v1912 = vrot.slane %v1911, 4
        %v1913 = vrot.slane %v831, 5
        %v1914 = vsel %vm1889, %v1912, %v1913
        %v1915 = vrot.slane %v1913, 4
        %v1916 = vrot.slane %v863, 5
        %v1917 = vsel %vm1889, %v1915, %v1916
        %v1918 = vrot.slane %v1843, 5
        %v1919 = vrot.slane %v1918, 4
        %v1920 = vrot.slane %v833, 5
        %v1921 = vsel %vm1889, %v1919, %v1920
        %v1922 = vrot.slane %v1920, 4
        %v1923 = vrot.slane %v864, 5
        %v1924 = vsel %vm1889, %v1922, %v1923
        %v1925 = vrot.slane %v1844, 5
        %v1926 = vrot.slane %v1925, 4
        %v1927 = vrot.slane %v835, 5
        %v1928 = vsel %vm1889, %v1926, %v1927
        %v1929 = vrot.slane %v1927, 4
        %v1930 = vrot.slane %v865, 5
        %v1931 = vsel %vm1889, %v1929, %v1930
        %v1932 = vrot.slane %v1845, 5
        %v1933 = vrot.slane %v1932, 4
        %v1934 = vrot.slane %v837, 5
        %v1935 = vsel %vm1889, %v1933, %v1934
        %v1936 = vrot.slane %v1934, 4
        %v1937 = vrot.slane %v866, 5
        %v1938 = vsel %vm1889, %v1936, %v1937
        %v1939 = vrot.slane %v1846, 5
        %v1940 = vrot.slane %v1939, 4
        %v1941 = vrot.slane %v839, 5
        %v1942 = vsel %vm1889, %v1940, %v1941
        %v1943 = vrot.slane %v1941, 4
        %v1944 = vrot.slane %v867, 5
        %v1945 = vsel %vm1889, %v1943, %v1944
        %v1946 = vrot.slane %v1847, 5
        %v1947 = vrot.slane %v1946, 4
        %v1948 = vrot.slane %v841, 5
        %v1949 = vsel %vm1889, %v1947, %v1948
        %v1950 = vrot.slane %v1948, 4
        %v1951 = vrot.slane %v868, 5
        %v1952 = vsel %vm1889, %v1950, %v1951
        %v1953 = vrot.slane %v1848, 5
        %v1954 = vrot.slane %v1953, 4
        %v1955 = vrot.slane %v843, 5
        %v1956 = vsel %vm1889, %v1954, %v1955
        %v1957 = vrot.slane %v1955, 4
        %v1958 = vrot.slane %v869, 5
        %v1959 = vsel %vm1889, %v1957, %v1958
        %v1960 = vrot.slane %v1849, 5
        %v1961 = vrot.slane %v1960, 4
        %v1962 = vrot.slane %v845, 5
        %v1963 = vsel %vm1889, %v1961, %v1962
        %v1964 = vrot.slane %v1962, 4
        %v1965 = vrot.slane %v870, 5
        %v1966 = vsel %vm1889, %v1964, %v1965
        %v1967 = vrot.slane %v1850, 5
        %v1968 = vrot.slane %v1967, 4
        %v1969 = vrot.slane %v847, 5
        %v1970 = vsel %vm1889, %v1968, %v1969
        %v1971 = vrot.slane %v1969, 4
        %v1972 = vrot.slane %v871, 5
        %v1973 = vsel %vm1889, %v1971, %v1972
        %v1974 = vrot.slane %v1851, 5
        %v1975 = vrot.slane %v1974, 4
        %v1976 = vrot.slane %v849, 5
        %v1977 = vsel %vm1889, %v1975, %v1976
        %v1978 = vrot.slane %v1976, 4
        %v1979 = vrot.slane %v872, 5
        %v1980 = vsel %vm1889, %v1978, %v1979
        %v1981 = vrot.slane %v1852, 5
        %v1982 = vrot.slane %v1981, 4
        %v1983 = vrot.slane %v851, 5
        %v1984 = vsel %vm1889, %v1982, %v1983
        %v1985 = vrot.slane %v1983, 4
        %v1986 = vrot.slane %v873, 5
        %v1987 = vsel %vm1889, %v1985, %v1986
        %v1988 = vrot.slane %v1853, 5
        %v1989 = vrot.slane %v1988, 4
        %v1990 = vrot.slane %v853, 5
        %v1991 = vsel %vm1889, %v1989, %v1990
        %v1992 = vrot.slane %v1990, 4
        %v1993 = vrot.slane %v874, 5
        %v1994 = vsel %vm1889, %v1992, %v1993
        %v1995 = vrot.slane %v1854, 5
        %v1996 = vrot.slane %v1995, 4
        %v1997 = vrot.slane %v855, 5
        %v1998 = vsel %vm1889, %v1996, %v1997
        %v1999 = vrot.slane %v1997, 4
        %v2000 = vrot.slane %v875, 5
        %v2001 = vsel %vm1889, %v1999, %v2000
        %s2002 = scalar_lea.vmem %s1, 32
        %v2003 = vld [vmem:[%s2002] sm:$0xf]
        %v2004 = vld [vmem:[%s2002 + $0x4] sm:$0xf]
        %v2005 = vld [vmem:[%s2002 + $0x8] sm:$0xf]
        %v2006 = vld [vmem:[%s2002 + $0xc] sm:$0xf]
        %v2007 = vunpack.c.l.b16 %v1893
        %v2008 = vunpack.c.l.b16 %v1896
        %v2009 = vunpack.c.l.b16 %v1900
        %v2010 = vunpack.c.l.b16 %v1903
        %v2011 = vunpack.c.l.b16 %v1907
        %v2012 = vunpack.c.l.b16 %v1910
        %v2013 = vunpack.c.l.b16 %v1914
        %v2014 = vunpack.c.l.b16 %v1917
        %v2015 = vunpack.c.l.b16 %v1921
        %v2016 = vunpack.c.l.b16 %v1924
        %v2017 = vunpack.c.l.b16 %v1928
        %v2018 = vunpack.c.l.b16 %v1931
        %v2019 = vunpack.c.l.b16 %v1935
        %v2020 = vunpack.c.l.b16 %v1938
        %v2021 = vunpack.c.l.b16 %v1942
        %v2022 = vunpack.c.l.b16 %v1945
        %v2023 = vunpack.c.l.b16 %v1949
        %v2024 = vunpack.c.l.b16 %v1952
        %v2025 = vunpack.c.l.b16 %v1956
        %v2026 = vunpack.c.l.b16 %v1959
        %v2027 = vunpack.c.l.b16 %v1963
        %v2028 = vunpack.c.l.b16 %v1966
        %v2029 = vunpack.c.l.b16 %v1970
        %v2030 = vunpack.c.l.b16 %v1973
        %v2031 = vunpack.c.l.b16 %v1977
        %v2032 = vunpack.c.l.b16 %v1980
        %v2033 = vunpack.c.l.b16 %v1984
        %v2034 = vunpack.c.l.b16 %v1987
        %v2035 = vunpack.c.l.b16 %v1991
        %v2036 = vunpack.c.l.b16 %v1994
        %v2037 = vunpack.c.l.b16 %v1998
        %v2038 = vunpack.c.l.b16 %v2001
        %v2039 = vpack.c.b16 %v2008, %v2007
        %v2040 = vpack.c.b16 %v2010, %v2009
        %v2041 = vpack.c.b16 %v2012, %v2011
        %v2042 = vpack.c.b16 %v2014, %v2013
        %v2043 = vpack.c.b16 %v2016, %v2015
        %v2044 = vpack.c.b16 %v2018, %v2017
        %v2045 = vpack.c.b16 %v2020, %v2019
        %v2046 = vpack.c.b16 %v2022, %v2021
        %v2047 = vpack.c.b16 %v2024, %v2023
        %v2048 = vpack.c.b16 %v2026, %v2025
        %v2049 = vpack.c.b16 %v2028, %v2027
        %v2050 = vpack.c.b16 %v2030, %v2029
        %v2051 = vpack.c.b16 %v2032, %v2031
        %v2052 = vpack.c.b16 %v2034, %v2033
        %v2053 = vpack.c.b16 %v2036, %v2035
        %v2054 = vpack.c.b16 %v2038, %v2037
        %v2059 = vunpack.c.l.b16 %v2003
        %v2060 = vunpack.c.l.b16 %v2004
        %v2061 = vunpack.c.l.b16 %v2005
        %v2062 = vunpack.c.l.b16 %v2006
        %v2063 = vpack.c.b16 %v2060, %v2059
        %v2064 = vpack.c.b16 %v2062, %v2061
        %v2068 = vsel %vm1328, %v2039, 0
        %v2071 = vsel %vm1328, %v2040, 0
        %v2074 = vsel %vm1328, %v2041, 0
        %v2077 = vsel %vm1328, %v2042, 0
        %v2080 = vsel %vm1328, %v2043, 0
        %v2083 = vsel %vm1328, %v2044, 0
        %v2086 = vsel %vm1328, %v2045, 0
        %v2089 = vsel %vm1328, %v2046, 0
        %v2092 = vsel %vm1328, %v2047, 0
        %v2095 = vsel %vm1328, %v2048, 0
        %v2098 = vsel %vm1328, %v2049, 0
        %v2101 = vsel %vm1328, %v2050, 0
        %v2104 = vsel %vm1328, %v2051, 0
        %v2107 = vsel %vm1328, %v2052, 0
        %v2110 = vsel %vm1328, %v2053, 0
        %v2113 = vsel %vm1328, %v2054, 0
        %2115 = vmatprep.subr.bf16.mxu0 0
        %2116 = vmatpush1.bf16.msra.mxu0 0
        %2117 = vmatprep.subr.bf16.mxu0 0
        %2118 = vmatpush1.bf16.msra.mxu0 0
        %2119 = vmatprep.subr.bf16.mxu0 0
        %2120 = vmatpush1.bf16.msra.mxu0 0
        %2121 = vmatprep.subr.bf16.mxu0 0
        %2122 = vmatpush1.bf16.msra.mxu0 0
        %2123 = vmatprep.subr.bf16.mxu0 0
        %2124 = vmatpush1.bf16.msra.mxu0 0
        %2125 = vmatprep.subr.bf16.mxu0 0
        %2126 = vmatpush1.bf16.msra.mxu0 0
        %2127 = vmatprep.subr.bf16.mxu0 0
        %2128 = vmatpush1.bf16.msra.mxu0 %v2064
        %2129 = vmatprep.subr.bf16.mxu0 0
        %2130 = vmatpush1.bf16.msra.mxu0 %v2063
        %2131 = vmatprep.subr.bf16.mxu0 0
        %2132 = vmatpush2.bf16.msra.mxu0 0
        %2133 = vmatprep.subr.bf16.mxu0 0
        %2134 = vmatpush2.bf16.msra.mxu0 0
        %2135 = vmatprep.subr.bf16.mxu0 0
        %2136 = vmatpush2.bf16.msra.mxu0 0
        %2137 = vmatprep.subr.bf16.mxu0 0
        %2138 = vmatpush2.bf16.msra.mxu0 0
        %2139 = vmatprep.subr.bf16.mxu0 0
        %2140 = vmatpush2.bf16.msra.mxu0 0
        %2141 = vmatprep.subr.bf16.mxu0 0
        %2142 = vmatpush2.bf16.msra.mxu0 0
        %2143 = vmatprep.subr.bf16.mxu0 0
        %2144 = vmatpush2.bf16.msra.mxu0 0
        %2145 = vmatprep.subr.bf16.mxu0 0
        %2146 = vmatpush2.bf16.msra.mxu0 0
        %2147 = vmatprep.mubr.bf16.mxu0 0
        %2148 = vmatmul.mubr.bf16.gmra.mxu0 %v2068
        %v2149 = vpop.f32.mrf.mxu0
        %v2150 = vadd.f32 0.0, %v2149
        %v2151 = vpop.f32.mrf.mxu0
        %v2152 = vpop.f32.mrf.mxu0
        %v2153 = vadd.f32 0.0, %v2152
        %v2154 = vpop.f32.mrf.mxu0
        %2155 = vmatprep.mubr.bf16.mxu0 0
        %2156 = vmatmul.mubr.bf16.gmra.mxu0 %v2071
        %v2157 = vpop.f32.mrf.mxu0
        %v2158 = vadd.f32 0.0, %v2157
        %v2159 = vpop.f32.mrf.mxu0
        %v2160 = vpop.f32.mrf.mxu0
        %v2161 = vadd.f32 0.0, %v2160
        %v2162 = vpop.f32.mrf.mxu0
        %2163 = vmatprep.mubr.bf16.mxu0 0
        %2164 = vmatmul.mubr.bf16.gmra.mxu0 %v2074
        %v2165 = vpop.f32.mrf.mxu0
        %v2166 = vadd.f32 0.0, %v2165
        %v2167 = vpop.f32.mrf.mxu0
        %v2168 = vpop.f32.mrf.mxu0
        %v2169 = vadd.f32 0.0, %v2168
        %v2170 = vpop.f32.mrf.mxu0
        %2171 = vmatprep.mubr.bf16.mxu0 0
        %2172 = vmatmul.mubr.bf16.gmra.mxu0 %v2077
        %v2173 = vpop.f32.mrf.mxu0
        %v2174 = vadd.f32 0.0, %v2173
        %v2175 = vpop.f32.mrf.mxu0
        %v2176 = vpop.f32.mrf.mxu0
        %v2177 = vadd.f32 0.0, %v2176
        %v2178 = vpop.f32.mrf.mxu0
        %2179 = vmatprep.mubr.bf16.mxu0 0
        %2180 = vmatmul.mubr.bf16.gmra.mxu0 %v2080
        %v2181 = vpop.f32.mrf.mxu0
        %v2182 = vadd.f32 0.0, %v2181
        %v2183 = vpop.f32.mrf.mxu0
        %v2184 = vpop.f32.mrf.mxu0
        %v2185 = vadd.f32 0.0, %v2184
        %v2186 = vpop.f32.mrf.mxu0
        %2187 = vmatprep.mubr.bf16.mxu0 0
        %2188 = vmatmul.mubr.bf16.gmra.mxu0 %v2083
        %v2189 = vpop.f32.mrf.mxu0
        %v2190 = vadd.f32 0.0, %v2189
        %v2191 = vpop.f32.mrf.mxu0
        %v2192 = vpop.f32.mrf.mxu0
        %v2193 = vadd.f32 0.0, %v2192
        %v2194 = vpop.f32.mrf.mxu0
        %2195 = vmatprep.mubr.bf16.mxu0 0
        %2196 = vmatmul.mubr.bf16.gmra.mxu0 %v2086
        %v2197 = vpop.f32.mrf.mxu0
        %v2198 = vadd.f32 0.0, %v2197
        %v2199 = vpop.f32.mrf.mxu0
        %v2200 = vpop.f32.mrf.mxu0
        %v2201 = vadd.f32 0.0, %v2200
        %v2202 = vpop.f32.mrf.mxu0
        %2203 = vmatprep.mubr.bf16.mxu0 0
        %2204 = vmatmul.mubr.bf16.gmra.mxu0 %v2089
        %v2205 = vpop.f32.mrf.mxu0
        %v2206 = vadd.f32 0.0, %v2205
        %v2207 = vpop.f32.mrf.mxu0
        %v2208 = vpop.f32.mrf.mxu0
        %v2209 = vadd.f32 0.0, %v2208
        %v2210 = vpop.f32.mrf.mxu0
        %2211 = vmatprep.mubr.bf16.mxu0 0
        %2212 = vmatmul.mubr.bf16.gmra.mxu0 %v2092
        %v2213 = vpop.f32.mrf.mxu0
        %v2214 = vadd.f32 0.0, %v2213
        %v2215 = vpop.f32.mrf.mxu0
        %v2216 = vpop.f32.mrf.mxu0
        %v2217 = vadd.f32 0.0, %v2216
        %v2218 = vpop.f32.mrf.mxu0
        %2219 = vmatprep.mubr.bf16.mxu0 0
        %2220 = vmatmul.mubr.bf16.gmra.mxu0 %v2095
        %v2221 = vpop.f32.mrf.mxu0
        %v2222 = vadd.f32 0.0, %v2221
        %v2223 = vpop.f32.mrf.mxu0
        %v2224 = vpop.f32.mrf.mxu0
        %v2225 = vadd.f32 0.0, %v2224
        %v2226 = vpop.f32.mrf.mxu0
        %2227 = vmatprep.mubr.bf16.mxu0 0
        %2228 = vmatmul.mubr.bf16.gmra.mxu0 %v2098
        %v2229 = vpop.f32.mrf.mxu0
        %v2230 = vadd.f32 0.0, %v2229
        %v2231 = vpop.f32.mrf.mxu0
        %v2232 = vpop.f32.mrf.mxu0
        %v2233 = vadd.f32 0.0, %v2232
        %v2234 = vpop.f32.mrf.mxu0
        %2235 = vmatprep.mubr.bf16.mxu0 0
        %2236 = vmatmul.mubr.bf16.gmra.mxu0 %v2101
        %v2237 = vpop.f32.mrf.mxu0
        %v2238 = vadd.f32 0.0, %v2237
        %v2239 = vpop.f32.mrf.mxu0
        %v2240 = vpop.f32.mrf.mxu0
        %v2241 = vadd.f32 0.0, %v2240
        %v2242 = vpop.f32.mrf.mxu0
        %2243 = vmatprep.mubr.bf16.mxu0 0
        %2244 = vmatmul.mubr.bf16.gmra.mxu0 %v2104
        %v2245 = vpop.f32.mrf.mxu0
        %v2246 = vadd.f32 0.0, %v2245
        %v2247 = vpop.f32.mrf.mxu0
        %v2248 = vpop.f32.mrf.mxu0
        %v2249 = vadd.f32 0.0, %v2248
        %v2250 = vpop.f32.mrf.mxu0
        %2251 = vmatprep.mubr.bf16.mxu0 0
        %2252 = vmatmul.mubr.bf16.gmra.mxu0 %v2107
        %v2253 = vpop.f32.mrf.mxu0
        %v2254 = vadd.f32 0.0, %v2253
        %v2255 = vpop.f32.mrf.mxu0
        %v2256 = vpop.f32.mrf.mxu0
        %v2257 = vadd.f32 0.0, %v2256
        %v2258 = vpop.f32.mrf.mxu0
        %2259 = vmatprep.mubr.bf16.mxu0 0
        %2260 = vmatmul.mubr.bf16.gmra.mxu0 %v2110
        %v2261 = vpop.f32.mrf.mxu0
        %v2262 = vadd.f32 0.0, %v2261
        %v2263 = vpop.f32.mrf.mxu0
        %v2264 = vpop.f32.mrf.mxu0
        %v2265 = vadd.f32 0.0, %v2264
        %v2266 = vpop.f32.mrf.mxu0
        %2267 = vmatprep.mubr.bf16.mxu0 0
        %2268 = vmatmul.mubr.bf16.gmra.mxu0 %v2113
        %v2269 = vpop.f32.mrf.mxu0
        %v2270 = vadd.f32 0.0, %v2269
        %v2271 = vpop.f32.mrf.mxu0
        %v2272 = vpop.f32.mrf.mxu0
        %v2273 = vadd.f32 0.0, %v2272
        %v2274 = vpop.f32.mrf.mxu0
        %2275 = vdwg.mxu0
        %v2276 = vadd.f32 %v1713, %v2150
        %v2277 = vadd.f32 %v1716, %v2153
        %v2278 = vadd.f32 %v1721, %v2158
        %v2279 = vadd.f32 %v1724, %v2161
        %v2280 = vadd.f32 %v1729, %v2166
        %v2281 = vadd.f32 %v1732, %v2169
        %v2282 = vadd.f32 %v1737, %v2174
        %v2283 = vadd.f32 %v1740, %v2177
        %v2284 = vadd.f32 %v1745, %v2182
        %v2285 = vadd.f32 %v1748, %v2185
        %v2286 = vadd.f32 %v1753, %v2190
        %v2287 = vadd.f32 %v1756, %v2193
        %v2288 = vadd.f32 %v1761, %v2198
        %v2289 = vadd.f32 %v1764, %v2201
        %v2290 = vadd.f32 %v1769, %v2206
        %v2291 = vadd.f32 %v1772, %v2209
        %v2292 = vadd.f32 %v1777, %v2214
        %v2293 = vadd.f32 %v1780, %v2217
        %v2294 = vadd.f32 %v1785, %v2222
        %v2295 = vadd.f32 %v1788, %v2225
        %v2296 = vadd.f32 %v1793, %v2230
        %v2297 = vadd.f32 %v1796, %v2233
        %v2298 = vadd.f32 %v1801, %v2238
        %v2299 = vadd.f32 %v1804, %v2241
        %v2300 = vadd.f32 %v1809, %v2246
        %v2301 = vadd.f32 %v1812, %v2249
        %v2302 = vadd.f32 %v1817, %v2254
        %v2303 = vadd.f32 %v1820, %v2257
        %v2304 = vadd.f32 %v1825, %v2262
        %v2305 = vadd.f32 %v1828, %v2265
        %v2306 = vadd.f32 %v1833, %v2270
        %v2307 = vadd.f32 %v1836, %v2273
        %v2308 = vld [vmem:[%s254] sm:$0xf]
        %v2309 = vld [vmem:[%s254 + $0x4] sm:$0xf]
        %v2310 = vld [vmem:[%s254 + $0xc] sm:$0xf]
        %v2311 = vld [vmem:[%s254 + $0x10] sm:$0xf]
        %v2312 = vld [vmem:[%s254 + $0x18] sm:$0xf]
        %v2313 = vld [vmem:[%s254 + $0x1c] sm:$0xf]
        %v2314 = vld [vmem:[%s254 + $0x24] sm:$0xf]
        %v2315 = vld [vmem:[%s254 + $0x28] sm:$0xf]
        %v2316 = vld [vmem:[%s254 + $0x30] sm:$0xf]
        %v2317 = vld [vmem:[%s254 + $0x34] sm:$0xf]
        %v2318 = vld [vmem:[%s254 + $0x3c] sm:$0xf]
        %v2319 = vld [vmem:[%s254 + $0x40] sm:$0xf]
        %v2320 = vld [vmem:[%s254 + $0x48] sm:$0xf]
        %v2321 = vld [vmem:[%s254 + $0x4c] sm:$0xf]
        %v2322 = vld [vmem:[%s254 + $0x54] sm:$0xf]
        %v2323 = vld [vmem:[%s254 + $0x58] sm:$0xf]
        %v2324 = vld [vmem:[%s254 + $0x60] sm:$0xf]
        %v2325 = vld [vmem:[%s254 + $0x64] sm:$0xf]
        %v2326 = vld [vmem:[%s254 + $0x6c] sm:$0xf]
        %v2327 = vld [vmem:[%s254 + $0x70] sm:$0xf]
        %v2328 = vld [vmem:[%s254 + $0x78] sm:$0xf]
        %v2329 = vld [vmem:[%s254 + $0x7c] sm:$0xf]
        %v2330 = vld [vmem:[%s254 + $0x84] sm:$0xf]
        %v2331 = vld [vmem:[%s254 + $0x88] sm:$0xf]
        %v2332 = vld [vmem:[%s254 + $0x90] sm:$0xf]
        %v2333 = vld [vmem:[%s254 + $0x94] sm:$0xf]
        %v2334 = vld [vmem:[%s254 + $0x9c] sm:$0xf]
        %v2335 = vld [vmem:[%s254 + $0xa0] sm:$0xf]
        %v2336 = vld [vmem:[%s254 + $0xa8] sm:$0xf]
        %v2337 = vld [vmem:[%s254 + $0xac] sm:$0xf]
        %v2338 = vld [vmem:[%s254 + $0xb4] sm:$0xf]
        %v2339 = vld [vmem:[%s254 + $0xb8] sm:$0xf]
        %s2340 = scalar_lea.vmem %s1, 48
        %v2341 = vld [vmem:[%s2340] sm:$0xf]
        %v2342 = vld [vmem:[%s2340 + $0x4] sm:$0xf]
        %v2343 = vld [vmem:[%s2340 + $0x8] sm:$0xf]
        %v2344 = vld [vmem:[%s2340 + $0xc] sm:$0xf]
        %v2377 = vunpack.c.l.b16 %v2308
        %v2378 = vunpack.c.l.b16 %v2309
        %v2379 = vunpack.c.l.b16 %v2310
        %v2380 = vunpack.c.l.b16 %v2311
        %v2381 = vunpack.c.l.b16 %v2312
        %v2382 = vunpack.c.l.b16 %v2313
        %v2383 = vunpack.c.l.b16 %v2314
        %v2384 = vunpack.c.l.b16 %v2315
        %v2385 = vunpack.c.l.b16 %v2316
        %v2386 = vunpack.c.l.b16 %v2317
        %v2387 = vunpack.c.l.b16 %v2318
        %v2388 = vunpack.c.l.b16 %v2319
        %v2389 = vunpack.c.l.b16 %v2320
        %v2390 = vunpack.c.l.b16 %v2321
        %v2391 = vunpack.c.l.b16 %v2322
        %v2392 = vunpack.c.l.b16 %v2323
        %v2393 = vunpack.c.l.b16 %v2324
        %v2394 = vunpack.c.l.b16 %v2325
        %v2395 = vunpack.c.l.b16 %v2326
        %v2396 = vunpack.c.l.b16 %v2327
        %v2397 = vunpack.c.l.b16 %v2328
        %v2398 = vunpack.c.l.b16 %v2329
        %v2399 = vunpack.c.l.b16 %v2330
        %v2400 = vunpack.c.l.b16 %v2331
        %v2401 = vunpack.c.l.b16 %v2332
        %v2402 = vunpack.c.l.b16 %v2333
        %v2403 = vunpack.c.l.b16 %v2334
        %v2404 = vunpack.c.l.b16 %v2335
        %v2405 = vunpack.c.l.b16 %v2336
        %v2406 = vunpack.c.l.b16 %v2337
        %v2407 = vunpack.c.l.b16 %v2338
        %v2408 = vunpack.c.l.b16 %v2339
        %v2409 = vpack.c.b16 %v2378, %v2377
        %v2410 = vpack.c.b16 %v2380, %v2379
        %v2411 = vpack.c.b16 %v2382, %v2381
        %v2412 = vpack.c.b16 %v2384, %v2383
        %v2413 = vpack.c.b16 %v2386, %v2385
        %v2414 = vpack.c.b16 %v2388, %v2387
        %v2415 = vpack.c.b16 %v2390, %v2389
        %v2416 = vpack.c.b16 %v2392, %v2391
        %v2417 = vpack.c.b16 %v2394, %v2393
        %v2418 = vpack.c.b16 %v2396, %v2395
        %v2419 = vpack.c.b16 %v2398, %v2397
        %v2420 = vpack.c.b16 %v2400, %v2399
        %v2421 = vpack.c.b16 %v2402, %v2401
        %v2422 = vpack.c.b16 %v2404, %v2403
        %v2423 = vpack.c.b16 %v2406, %v2405
        %v2424 = vpack.c.b16 %v2408, %v2407
        %v2429 = vunpack.c.l.b16 %v2341
        %v2430 = vunpack.c.l.b16 %v2342
        %v2431 = vunpack.c.l.b16 %v2343
        %v2432 = vunpack.c.l.b16 %v2344
        %v2433 = vpack.c.b16 %v2430, %v2429
        %v2434 = vpack.c.b16 %v2432, %v2431
        %v2438 = vsel %vm1328, %v2409, 0
        %v2441 = vsel %vm1328, %v2410, 0
        %v2444 = vsel %vm1328, %v2411, 0
        %v2447 = vsel %vm1328, %v2412, 0
        %v2450 = vsel %vm1328, %v2413, 0
        %v2453 = vsel %vm1328, %v2414, 0
        %v2456 = vsel %vm1328, %v2415, 0
        %v2459 = vsel %vm1328, %v2416, 0
        %v2462 = vsel %vm1328, %v2417, 0
        %v2465 = vsel %vm1328, %v2418, 0
        %v2468 = vsel %vm1328, %v2419, 0
        %v2471 = vsel %vm1328, %v2420, 0
        %v2474 = vsel %vm1328, %v2421, 0
        %v2477 = vsel %vm1328, %v2422, 0
        %v2480 = vsel %vm1328, %v2423, 0
        %v2483 = vsel %vm1328, %v2424, 0
        %2485 = vmatprep.subr.bf16.mxu0 0
        %2486 = vmatpush1.bf16.msra.mxu0 0
        %2487 = vmatprep.subr.bf16.mxu0 0
        %2488 = vmatpush1.bf16.msra.mxu0 0
        %2489 = vmatprep.subr.bf16.mxu0 0
        %2490 = vmatpush1.bf16.msra.mxu0 0
        %2491 = vmatprep.subr.bf16.mxu0 0
        %2492 = vmatpush1.bf16.msra.mxu0 0
        %2493 = vmatprep.subr.bf16.mxu0 0
        %2494 = vmatpush1.bf16.msra.mxu0 0
        %2495 = vmatprep.subr.bf16.mxu0 0
        %2496 = vmatpush1.bf16.msra.mxu0 0
        %2497 = vmatprep.subr.bf16.mxu0 0
        %2498 = vmatpush1.bf16.msra.mxu0 %v2434
        %2499 = vmatprep.subr.bf16.mxu0 0
        %2500 = vmatpush1.bf16.msra.mxu0 %v2433
        %2501 = vmatprep.subr.bf16.mxu0 0
        %2502 = vmatpush2.bf16.msra.mxu0 0
        %2503 = vmatprep.subr.bf16.mxu0 0
        %2504 = vmatpush2.bf16.msra.mxu0 0
        %2505 = vmatprep.subr.bf16.mxu0 0
        %2506 = vmatpush2.bf16.msra.mxu0 0
        %2507 = vmatprep.subr.bf16.mxu0 0
        %2508 = vmatpush2.bf16.msra.mxu0 0
        %2509 = vmatprep.subr.bf16.mxu0 0
        %2510 = vmatpush2.bf16.msra.mxu0 0
        %2511 = vmatprep.subr.bf16.mxu0 0
        %2512 = vmatpush2.bf16.msra.mxu0 0
        %2513 = vmatprep.subr.bf16.mxu0 0
        %2514 = vmatpush2.bf16.msra.mxu0 0
        %2515 = vmatprep.subr.bf16.mxu0 0
        %2516 = vmatpush2.bf16.msra.mxu0 0
        %2517 = vmatprep.mubr.bf16.mxu0 0
        %2518 = vmatmul.mubr.bf16.gmra.mxu0 %v2438
        %v2519 = vpop.f32.mrf.mxu0
        %v2520 = vadd.f32 0.0, %v2519
        %v2521 = vpop.f32.mrf.mxu0
        %v2522 = vpop.f32.mrf.mxu0
        %v2523 = vadd.f32 0.0, %v2522
        %v2524 = vpop.f32.mrf.mxu0
        %2525 = vmatprep.mubr.bf16.mxu0 0
        %2526 = vmatmul.mubr.bf16.gmra.mxu0 %v2441
        %v2527 = vpop.f32.mrf.mxu0
        %v2528 = vadd.f32 0.0, %v2527
        %v2529 = vpop.f32.mrf.mxu0
        %v2530 = vpop.f32.mrf.mxu0
        %v2531 = vadd.f32 0.0, %v2530
        %v2532 = vpop.f32.mrf.mxu0
        %2533 = vmatprep.mubr.bf16.mxu0 0
        %2534 = vmatmul.mubr.bf16.gmra.mxu0 %v2444
        %v2535 = vpop.f32.mrf.mxu0
        %v2536 = vadd.f32 0.0, %v2535
        %v2537 = vpop.f32.mrf.mxu0
        %v2538 = vpop.f32.mrf.mxu0
        %v2539 = vadd.f32 0.0, %v2538
        %v2540 = vpop.f32.mrf.mxu0
        %2541 = vmatprep.mubr.bf16.mxu0 0
        %2542 = vmatmul.mubr.bf16.gmra.mxu0 %v2447
        %v2543 = vpop.f32.mrf.mxu0
        %v2544 = vadd.f32 0.0, %v2543
        %v2545 = vpop.f32.mrf.mxu0
        %v2546 = vpop.f32.mrf.mxu0
        %v2547 = vadd.f32 0.0, %v2546
        %v2548 = vpop.f32.mrf.mxu0
        %2549 = vmatprep.mubr.bf16.mxu0 0
        %2550 = vmatmul.mubr.bf16.gmra.mxu0 %v2450
        %v2551 = vpop.f32.mrf.mxu0
        %v2552 = vadd.f32 0.0, %v2551
        %v2553 = vpop.f32.mrf.mxu0
        %v2554 = vpop.f32.mrf.mxu0
        %v2555 = vadd.f32 0.0, %v2554
        %v2556 = vpop.f32.mrf.mxu0
        %2557 = vmatprep.mubr.bf16.mxu0 0
        %2558 = vmatmul.mubr.bf16.gmra.mxu0 %v2453
        %v2559 = vpop.f32.mrf.mxu0
        %v2560 = vadd.f32 0.0, %v2559
        %v2561 = vpop.f32.mrf.mxu0
        %v2562 = vpop.f32.mrf.mxu0
        %v2563 = vadd.f32 0.0, %v2562
        %v2564 = vpop.f32.mrf.mxu0
        %2565 = vmatprep.mubr.bf16.mxu0 0
        %2566 = vmatmul.mubr.bf16.gmra.mxu0 %v2456
        %v2567 = vpop.f32.mrf.mxu0
        %v2568 = vadd.f32 0.0, %v2567
        %v2569 = vpop.f32.mrf.mxu0
        %v2570 = vpop.f32.mrf.mxu0
        %v2571 = vadd.f32 0.0, %v2570
        %v2572 = vpop.f32.mrf.mxu0
        %2573 = vmatprep.mubr.bf16.mxu0 0
        %2574 = vmatmul.mubr.bf16.gmra.mxu0 %v2459
        %v2575 = vpop.f32.mrf.mxu0
        %v2576 = vadd.f32 0.0, %v2575
        %v2577 = vpop.f32.mrf.mxu0
        %v2578 = vpop.f32.mrf.mxu0
        %v2579 = vadd.f32 0.0, %v2578
        %v2580 = vpop.f32.mrf.mxu0
        %2581 = vmatprep.mubr.bf16.mxu0 0
        %2582 = vmatmul.mubr.bf16.gmra.mxu0 %v2462
        %v2583 = vpop.f32.mrf.mxu0
        %v2584 = vadd.f32 0.0, %v2583
        %v2585 = vpop.f32.mrf.mxu0
        %v2586 = vpop.f32.mrf.mxu0
        %v2587 = vadd.f32 0.0, %v2586
        %v2588 = vpop.f32.mrf.mxu0
        %2589 = vmatprep.mubr.bf16.mxu0 0
        %2590 = vmatmul.mubr.bf16.gmra.mxu0 %v2465
        %v2591 = vpop.f32.mrf.mxu0
        %v2592 = vadd.f32 0.0, %v2591
        %v2593 = vpop.f32.mrf.mxu0
        %v2594 = vpop.f32.mrf.mxu0
        %v2595 = vadd.f32 0.0, %v2594
        %v2596 = vpop.f32.mrf.mxu0
        %2597 = vmatprep.mubr.bf16.mxu0 0
        %2598 = vmatmul.mubr.bf16.gmra.mxu0 %v2468
        %v2599 = vpop.f32.mrf.mxu0
        %v2600 = vadd.f32 0.0, %v2599
        %v2601 = vpop.f32.mrf.mxu0
        %v2602 = vpop.f32.mrf.mxu0
        %v2603 = vadd.f32 0.0, %v2602
        %v2604 = vpop.f32.mrf.mxu0
        %2605 = vmatprep.mubr.bf16.mxu0 0
        %2606 = vmatmul.mubr.bf16.gmra.mxu0 %v2471
        %v2607 = vpop.f32.mrf.mxu0
        %v2608 = vadd.f32 0.0, %v2607
        %v2609 = vpop.f32.mrf.mxu0
        %v2610 = vpop.f32.mrf.mxu0
        %v2611 = vadd.f32 0.0, %v2610
        %v2612 = vpop.f32.mrf.mxu0
        %2613 = vmatprep.mubr.bf16.mxu0 0
        %2614 = vmatmul.mubr.bf16.gmra.mxu0 %v2474
        %v2615 = vpop.f32.mrf.mxu0
        %v2616 = vadd.f32 0.0, %v2615
        %v2617 = vpop.f32.mrf.mxu0
        %v2618 = vpop.f32.mrf.mxu0
        %v2619 = vadd.f32 0.0, %v2618
        %v2620 = vpop.f32.mrf.mxu0
        %2621 = vmatprep.mubr.bf16.mxu0 0
        %2622 = vmatmul.mubr.bf16.gmra.mxu0 %v2477
        %v2623 = vpop.f32.mrf.mxu0
        %v2624 = vadd.f32 0.0, %v2623
        %v2625 = vpop.f32.mrf.mxu0
        %v2626 = vpop.f32.mrf.mxu0
        %v2627 = vadd.f32 0.0, %v2626
        %v2628 = vpop.f32.mrf.mxu0
        %2629 = vmatprep.mubr.bf16.mxu0 0
        %2630 = vmatmul.mubr.bf16.gmra.mxu0 %v2480
        %v2631 = vpop.f32.mrf.mxu0
        %v2632 = vadd.f32 0.0, %v2631
        %v2633 = vpop.f32.mrf.mxu0
        %v2634 = vpop.f32.mrf.mxu0
        %v2635 = vadd.f32 0.0, %v2634
        %v2636 = vpop.f32.mrf.mxu0
        %2637 = vmatprep.mubr.bf16.mxu0 0
        %2638 = vmatmul.mubr.bf16.gmra.mxu0 %v2483
        %v2639 = vpop.f32.mrf.mxu0
        %v2640 = vadd.f32 0.0, %v2639
        %v2641 = vpop.f32.mrf.mxu0
        %v2642 = vpop.f32.mrf.mxu0
        %v2643 = vadd.f32 0.0, %v2642
        %v2644 = vpop.f32.mrf.mxu0
        %2645 = vdwg.mxu0
        %v2646 = vadd.f32 %v2276, %v2520
        %v2647 = vadd.f32 %v2277, %v2523
        %v2648 = vadd.f32 %v2278, %v2528
        %v2649 = vadd.f32 %v2279, %v2531
        %v2650 = vadd.f32 %v2280, %v2536
        %v2651 = vadd.f32 %v2281, %v2539
        %v2652 = vadd.f32 %v2282, %v2544
        %v2653 = vadd.f32 %v2283, %v2547
        %v2654 = vadd.f32 %v2284, %v2552
        %v2655 = vadd.f32 %v2285, %v2555
        %v2656 = vadd.f32 %v2286, %v2560
        %v2657 = vadd.f32 %v2287, %v2563
        %v2658 = vadd.f32 %v2288, %v2568
        %v2659 = vadd.f32 %v2289, %v2571
        %v2660 = vadd.f32 %v2290, %v2576
        %v2661 = vadd.f32 %v2291, %v2579
        %v2662 = vadd.f32 %v2292, %v2584
        %v2663 = vadd.f32 %v2293, %v2587
        %v2664 = vadd.f32 %v2294, %v2592
        %v2665 = vadd.f32 %v2295, %v2595
        %v2666 = vadd.f32 %v2296, %v2600
        %v2667 = vadd.f32 %v2297, %v2603
        %v2668 = vadd.f32 %v2298, %v2608
        %v2669 = vadd.f32 %v2299, %v2611
        %v2670 = vadd.f32 %v2300, %v2616
        %v2671 = vadd.f32 %v2301, %v2619
        %v2672 = vadd.f32 %v2302, %v2624
        %v2673 = vadd.f32 %v2303, %v2627
        %v2674 = vadd.f32 %v2304, %v2632
        %v2675 = vadd.f32 %v2305, %v2635
        %v2676 = vadd.f32 %v2306, %v2640
        %v2677 = vadd.f32 %v2307, %v2643
        %v2678 = vld [vmem:[%s254] sm:$0xf]
        %v2679 = vld [vmem:[%s254 + $0x4] sm:$0xf]
        %v2680 = vld [vmem:[%s254 + $0x8] sm:$0x1]
        %v2681 = vld [vmem:[%s254 + $0xc] sm:$0xf]
        %v2682 = vld [vmem:[%s254 + $0x10] sm:$0xf]
        %v2683 = vld [vmem:[%s254 + $0x14] sm:$0x1]
        %v2684 = vld [vmem:[%s254 + $0x18] sm:$0xf]
        %v2685 = vld [vmem:[%s254 + $0x1c] sm:$0xf]
        %v2686 = vld [vmem:[%s254 + $0x20] sm:$0x1]
        %v2687 = vld [vmem:[%s254 + $0x24] sm:$0xf]
        %v2688 = vld [vmem:[%s254 + $0x28] sm:$0xf]
        %v2689 = vld [vmem:[%s254 + $0x2c] sm:$0x1]
        %v2690 = vld [vmem:[%s254 + $0x30] sm:$0xf]
        %v2691 = vld [vmem:[%s254 + $0x34] sm:$0xf]
        %v2692 = vld [vmem:[%s254 + $0x38] sm:$0x1]
        %v2693 = vld [vmem:[%s254 + $0x3c] sm:$0xf]
        %v2694 = vld [vmem:[%s254 + $0x40] sm:$0xf]
        %v2695 = vld [vmem:[%s254 + $0x44] sm:$0x1]
        %v2696 = vld [vmem:[%s254 + $0x48] sm:$0xf]
        %v2697 = vld [vmem:[%s254 + $0x4c] sm:$0xf]
        %v2698 = vld [vmem:[%s254 + $0x50] sm:$0x1]
        %v2699 = vld [vmem:[%s254 + $0x54] sm:$0xf]
        %v2700 = vld [vmem:[%s254 + $0x58] sm:$0xf]
        %v2701 = vld [vmem:[%s254 + $0x5c] sm:$0x1]
        %v2702 = vld [vmem:[%s254 + $0x60] sm:$0xf]
        %v2703 = vld [vmem:[%s254 + $0x64] sm:$0xf]
        %v2704 = vld [vmem:[%s254 + $0x68] sm:$0x1]
        %v2705 = vld [vmem:[%s254 + $0x6c] sm:$0xf]
        %v2706 = vld [vmem:[%s254 + $0x70] sm:$0xf]
        %v2707 = vld [vmem:[%s254 + $0x74] sm:$0x1]
        %v2708 = vld [vmem:[%s254 + $0x78] sm:$0xf]
        %v2709 = vld [vmem:[%s254 + $0x7c] sm:$0xf]
        %v2710 = vld [vmem:[%s254 + $0x80] sm:$0x1]
        %v2711 = vld [vmem:[%s254 + $0x84] sm:$0xf]
        %v2712 = vld [vmem:[%s254 + $0x88] sm:$0xf]
        %v2713 = vld [vmem:[%s254 + $0x8c] sm:$0x1]
        %v2714 = vld [vmem:[%s254 + $0x90] sm:$0xf]
        %v2715 = vld [vmem:[%s254 + $0x94] sm:$0xf]
        %v2716 = vld [vmem:[%s254 + $0x98] sm:$0x1]
        %v2717 = vld [vmem:[%s254 + $0x9c] sm:$0xf]
        %v2718 = vld [vmem:[%s254 + $0xa0] sm:$0xf]
        %v2719 = vld [vmem:[%s254 + $0xa4] sm:$0x1]
        %v2720 = vld [vmem:[%s254 + $0xa8] sm:$0xf]
        %v2721 = vld [vmem:[%s254 + $0xac] sm:$0xf]
        %v2722 = vld [vmem:[%s254 + $0xb0] sm:$0x1]
        %v2723 = vld [vmem:[%s254 + $0xb4] sm:$0xf]
        %v2724 = vld [vmem:[%s254 + $0xb8] sm:$0xf]
        %v2725 = vld [vmem:[%s254 + $0xbc] sm:$0x1]
        %v2727 = vshrl.u32 %v2678, 16
        %v2729 = vrot.slane %v2727, 4
        %v2730 = vshll.u32 %v2678, 16
        %v2732 = vrot.slane %v2730, 5
        %v2733 = vor.u32 %v2729, %v2732
        %v2734 = vrot.slane %v2733, 4
        %v2736 = vshll.u32 %v2679, 16
        %v2738 = vrot.slane %v2736, 5
        %v2739 = vsel %vm878, %v2734, %v2738
        %v2740 = vshrl.u32 %v2679, 16
        %v2742 = vrot.slane %v2740, 4
        %v2743 = vor.u32 %v2742, %v2738
        %v2744 = vrot.slane %v2743, 4
        %v2746 = vshll.u32 %v2680, 16
        %v2748 = vrot.slane %v2746, 5
        %v2749 = vsel %vm878, %v2744, %v2748
        %v2751 = vshrl.u32 %v2681, 16
        %v2753 = vrot.slane %v2751, 4
        %v2754 = vshll.u32 %v2681, 16
        %v2756 = vrot.slane %v2754, 5
        %v2757 = vor.u32 %v2753, %v2756
        %v2758 = vrot.slane %v2757, 4
        %v2760 = vshll.u32 %v2682, 16
        %v2762 = vrot.slane %v2760, 5
        %v2763 = vsel %vm878, %v2758, %v2762
        %v2764 = vshrl.u32 %v2682, 16
        %v2766 = vrot.slane %v2764, 4
        %v2767 = vor.u32 %v2766, %v2762
        %v2768 = vrot.slane %v2767, 4
        %v2770 = vshll.u32 %v2683, 16
        %v2772 = vrot.slane %v2770, 5
        %v2773 = vsel %vm878, %v2768, %v2772
        %v2775 = vshrl.u32 %v2684, 16
        %v2777 = vrot.slane %v2775, 4
        %v2778 = vshll.u32 %v2684, 16
        %v2780 = vrot.slane %v2778, 5
        %v2781 = vor.u32 %v2777, %v2780
        %v2782 = vrot.slane %v2781, 4
        %v2784 = vshll.u32 %v2685, 16
        %v2786 = vrot.slane %v2784, 5
        %v2787 = vsel %vm878, %v2782, %v2786
        %v2788 = vshrl.u32 %v2685, 16
        %v2790 = vrot.slane %v2788, 4
        %v2791 = vor.u32 %v2790, %v2786
        %v2792 = vrot.slane %v2791, 4
        %v2794 = vshll.u32 %v2686, 16
        %v2796 = vrot.slane %v2794, 5
        %v2797 = vsel %vm878, %v2792, %v2796
        %v2799 = vshrl.u32 %v2687, 16
        %v2801 = vrot.slane %v2799, 4
        %v2802 = vshll.u32 %v2687, 16
        %v2804 = vrot.slane %v2802, 5
        %v2805 = vor.u32 %v2801, %v2804
        %v2806 = vrot.slane %v2805, 4
        %v2808 = vshll.u32 %v2688, 16
        %v2810 = vrot.slane %v2808, 5
        %v2811 = vsel %vm878, %v2806, %v2810
        %v2812 = vshrl.u32 %v2688, 16
        %v2814 = vrot.slane %v2812, 4
        %v2815 = vor.u32 %v2814, %v2810
        %v2816 = vrot.slane %v2815, 4
        %v2818 = vshll.u32 %v2689, 16
        %v2820 = vrot.slane %v2818, 5
        %v2821 = vsel %vm878, %v2816, %v2820
        %v2823 = vshrl.u32 %v2690, 16
        %v2825 = vrot.slane %v2823, 4
        %v2826 = vshll.u32 %v2690, 16
        %v2828 = vrot.slane %v2826, 5
        %v2829 = vor.u32 %v2825, %v2828
        %v2830 = vrot.slane %v2829, 4
        %v2832 = vshll.u32 %v2691, 16
        %v2834 = vrot.slane %v2832, 5
        %v2835 = vsel %vm878, %v2830, %v2834
        %v2836 = vshrl.u32 %v2691, 16
        %v2838 = vrot.slane %v2836, 4
        %v2839 = vor.u32 %v2838, %v2834
        %v2840 = vrot.slane %v2839, 4
        %v2842 = vshll.u32 %v2692, 16
        %v2844 = vrot.slane %v2842, 5
        %v2845 = vsel %vm878, %v2840, %v2844
        %v2847 = vshrl.u32 %v2693, 16
        %v2849 = vrot.slane %v2847, 4
        %v2850 = vshll.u32 %v2693, 16
        %v2852 = vrot.slane %v2850, 5
        %v2853 = vor.u32 %v2849, %v2852
        %v2854 = vrot.slane %v2853, 4
        %v2856 = vshll.u32 %v2694, 16
        %v2858 = vrot.slane %v2856, 5
        %v2859 = vsel %vm878, %v2854, %v2858
        %v2860 = vshrl.u32 %v2694, 16
        %v2862 = vrot.slane %v2860, 4
        %v2863 = vor.u32 %v2862, %v2858
        %v2864 = vrot.slane %v2863, 4
        %v2866 = vshll.u32 %v2695, 16
        %v2868 = vrot.slane %v2866, 5
        %v2869 = vsel %vm878, %v2864, %v2868
        %v2871 = vshrl.u32 %v2696, 16
        %v2873 = vrot.slane %v2871, 4
        %v2874 = vshll.u32 %v2696, 16
        %v2876 = vrot.slane %v2874, 5
        %v2877 = vor.u32 %v2873, %v2876
        %v2878 = vrot.slane %v2877, 4
        %v2880 = vshll.u32 %v2697, 16
        %v2882 = vrot.slane %v2880, 5
        %v2883 = vsel %vm878, %v2878, %v2882
        %v2884 = vshrl.u32 %v2697, 16
        %v2886 = vrot.slane %v2884, 4
        %v2887 = vor.u32 %v2886, %v2882
        %v2888 = vrot.slane %v2887, 4
        %v2890 = vshll.u32 %v2698, 16
        %v2892 = vrot.slane %v2890, 5
        %v2893 = vsel %vm878, %v2888, %v2892
        %v2895 = vshrl.u32 %v2699, 16
        %v2897 = vrot.slane %v2895, 4
        %v2898 = vshll.u32 %v2699, 16
        %v2900 = vrot.slane %v2898, 5
        %v2901 = vor.u32 %v2897, %v2900
        %v2902 = vrot.slane %v2901, 4
        %v2904 = vshll.u32 %v2700, 16
        %v2906 = vrot.slane %v2904, 5
        %v2907 = vsel %vm878, %v2902, %v2906
        %v2908 = vshrl.u32 %v2700, 16
        %v2910 = vrot.slane %v2908, 4
        %v2911 = vor.u32 %v2910, %v2906
        %v2912 = vrot.slane %v2911, 4
        %v2914 = vshll.u32 %v2701, 16
        %v2916 = vrot.slane %v2914, 5
        %v2917 = vsel %vm878, %v2912, %v2916
        %v2919 = vshrl.u32 %v2702, 16
        %v2921 = vrot.slane %v2919, 4
        %v2922 = vshll.u32 %v2702, 16
        %v2924 = vrot.slane %v2922, 5
        %v2925 = vor.u32 %v2921, %v2924
        %v2926 = vrot.slane %v2925, 4
        %v2928 = vshll.u32 %v2703, 16
        %v2930 = vrot.slane %v2928, 5
        %v2931 = vsel %vm878, %v2926, %v2930
        %v2932 = vshrl.u32 %v2703, 16
        %v2934 = vrot.slane %v2932, 4
        %v2935 = vor.u32 %v2934, %v2930
        %v2936 = vrot.slane %v2935, 4
        %v2938 = vshll.u32 %v2704, 16
        %v2940 = vrot.slane %v2938, 5
        %v2941 = vsel %vm878, %v2936, %v2940
        %v2943 = vshrl.u32 %v2705, 16
        %v2945 = vrot.slane %v2943, 4
        %v2946 = vshll.u32 %v2705, 16
        %v2948 = vrot.slane %v2946, 5
        %v2949 = vor.u32 %v2945, %v2948
        %v2950 = vrot.slane %v2949, 4
        %v2952 = vshll.u32 %v2706, 16
        %v2954 = vrot.slane %v2952, 5
        %v2955 = vsel %vm878, %v2950, %v2954
        %v2956 = vshrl.u32 %v2706, 16
        %v2958 = vrot.slane %v2956, 4
        %v2959 = vor.u32 %v2958, %v2954
        %v2960 = vrot.slane %v2959, 4
        %v2962 = vshll.u32 %v2707, 16
        %v2964 = vrot.slane %v2962, 5
        %v2965 = vsel %vm878, %v2960, %v2964
        %v2967 = vshrl.u32 %v2708, 16
        %v2969 = vrot.slane %v2967, 4
        %v2970 = vshll.u32 %v2708, 16
        %v2972 = vrot.slane %v2970, 5
        %v2973 = vor.u32 %v2969, %v2972
        %v2974 = vrot.slane %v2973, 4
        %v2976 = vshll.u32 %v2709, 16
        %v2978 = vrot.slane %v2976, 5
        %v2979 = vsel %vm878, %v2974, %v2978
        %v2980 = vshrl.u32 %v2709, 16
        %v2982 = vrot.slane %v2980, 4
        %v2983 = vor.u32 %v2982, %v2978
        %v2984 = vrot.slane %v2983, 4
        %v2986 = vshll.u32 %v2710, 16
        %v2988 = vrot.slane %v2986, 5
        %v2989 = vsel %vm878, %v2984, %v2988
        %v2991 = vshrl.u32 %v2711, 16
        %v2993 = vrot.slane %v2991, 4
        %v2994 = vshll.u32 %v2711, 16
        %v2996 = vrot.slane %v2994, 5
        %v2997 = vor.u32 %v2993, %v2996
        %v2998 = vrot.slane %v2997, 4
        %v3000 = vshll.u32 %v2712, 16
        %v3002 = vrot.slane %v3000, 5
        %v3003 = vsel %vm878, %v2998, %v3002
        %v3004 = vshrl.u32 %v2712, 16
        %v3006 = vrot.slane %v3004, 4
        %v3007 = vor.u32 %v3006, %v3002
        %v3008 = vrot.slane %v3007, 4
        %v3010 = vshll.u32 %v2713, 16
        %v3012 = vrot.slane %v3010, 5
        %v3013 = vsel %vm878, %v3008, %v3012
        %v3015 = vshrl.u32 %v2714, 16
        %v3017 = vrot.slane %v3015, 4
        %v3018 = vshll.u32 %v2714, 16
        %v3020 = vrot.slane %v3018, 5
        %v3021 = vor.u32 %v3017, %v3020
        %v3022 = vrot.slane %v3021, 4
        %v3024 = vshll.u32 %v2715, 16
        %v3026 = vrot.slane %v3024, 5
        %v3027 = vsel %vm878, %v3022, %v3026
        %v3028 = vshrl.u32 %v2715, 16
        %v3030 = vrot.slane %v3028, 4
        %v3031 = vor.u32 %v3030, %v3026
        %v3032 = vrot.slane %v3031, 4
        %v3034 = vshll.u32 %v2716, 16
        %v3036 = vrot.slane %v3034, 5
        %v3037 = vsel %vm878, %v3032, %v3036
        %v3039 = vshrl.u32 %v2717, 16
        %v3041 = vrot.slane %v3039, 4
        %v3042 = vshll.u32 %v2717, 16
        %v3044 = vrot.slane %v3042, 5
        %v3045 = vor.u32 %v3041, %v3044
        %v3046 = vrot.slane %v3045, 4
        %v3048 = vshll.u32 %v2718, 16
        %v3050 = vrot.slane %v3048, 5
        %v3051 = vsel %vm878, %v3046, %v3050
        %v3052 = vshrl.u32 %v2718, 16
        %v3054 = vrot.slane %v3052, 4
        %v3055 = vor.u32 %v3054, %v3050
        %v3056 = vrot.slane %v3055, 4
        %v3058 = vshll.u32 %v2719, 16
        %v3060 = vrot.slane %v3058, 5
        %v3061 = vsel %vm878, %v3056, %v3060
        %v3063 = vshrl.u32 %v2720, 16
        %v3065 = vrot.slane %v3063, 4
        %v3066 = vshll.u32 %v2720, 16
        %v3068 = vrot.slane %v3066, 5
        %v3069 = vor.u32 %v3065, %v3068
        %v3070 = vrot.slane %v3069, 4
        %v3072 = vshll.u32 %v2721, 16
        %v3074 = vrot.slane %v3072, 5
        %v3075 = vsel %vm878, %v3070, %v3074
        %v3076 = vshrl.u32 %v2721, 16
        %v3078 = vrot.slane %v3076, 4
        %v3079 = vor.u32 %v3078, %v3074
        %v3080 = vrot.slane %v3079, 4
        %v3082 = vshll.u32 %v2722, 16
        %v3084 = vrot.slane %v3082, 5
        %v3085 = vsel %vm878, %v3080, %v3084
        %v3087 = vshrl.u32 %v2723, 16
        %v3089 = vrot.slane %v3087, 4
        %v3090 = vshll.u32 %v2723, 16
        %v3092 = vrot.slane %v3090, 5
        %v3093 = vor.u32 %v3089, %v3092
        %v3094 = vrot.slane %v3093, 4
        %v3096 = vshll.u32 %v2724, 16
        %v3098 = vrot.slane %v3096, 5
        %v3099 = vsel %vm878, %v3094, %v3098
        %v3100 = vshrl.u32 %v2724, 16
        %v3102 = vrot.slane %v3100, 4
        %v3103 = vor.u32 %v3102, %v3098
        %v3104 = vrot.slane %v3103, 4
        %v3106 = vshll.u32 %v2725, 16
        %v3108 = vrot.slane %v3106, 5
        %v3109 = vsel %vm878, %v3104, %v3108
        %s3110 = scalar_lea.vmem %s1, 64
        %v3111 = vld [vmem:[%s3110] sm:$0xf]
        %v3112 = vld [vmem:[%s3110 + $0x4] sm:$0xf]
        %v3113 = vld [vmem:[%s3110 + $0x8] sm:$0xf]
        %v3114 = vld [vmem:[%s3110 + $0xc] sm:$0xf]
        %v3115 = vunpack.c.l.b16 %v2739
        %v3116 = vunpack.c.l.b16 %v2749
        %v3117 = vunpack.c.l.b16 %v2763
        %v3118 = vunpack.c.l.b16 %v2773
        %v3119 = vunpack.c.l.b16 %v2787
        %v3120 = vunpack.c.l.b16 %v2797
        %v3121 = vunpack.c.l.b16 %v2811
        %v3122 = vunpack.c.l.b16 %v2821
        %v3123 = vunpack.c.l.b16 %v2835
        %v3124 = vunpack.c.l.b16 %v2845
        %v3125 = vunpack.c.l.b16 %v2859
        %v3126 = vunpack.c.l.b16 %v2869
        %v3127 = vunpack.c.l.b16 %v2883
        %v3128 = vunpack.c.l.b16 %v2893
        %v3129 = vunpack.c.l.b16 %v2907
        %v3130 = vunpack.c.l.b16 %v2917
        %v3131 = vunpack.c.l.b16 %v2931
        %v3132 = vunpack.c.l.b16 %v2941
        %v3133 = vunpack.c.l.b16 %v2955
        %v3134 = vunpack.c.l.b16 %v2965
        %v3135 = vunpack.c.l.b16 %v2979
        %v3136 = vunpack.c.l.b16 %v2989
        %v3137 = vunpack.c.l.b16 %v3003
        %v3138 = vunpack.c.l.b16 %v3013
        %v3139 = vunpack.c.l.b16 %v3027
        %v3140 = vunpack.c.l.b16 %v3037
        %v3141 = vunpack.c.l.b16 %v3051
        %v3142 = vunpack.c.l.b16 %v3061
        %v3143 = vunpack.c.l.b16 %v3075
        %v3144 = vunpack.c.l.b16 %v3085
        %v3145 = vunpack.c.l.b16 %v3099
        %v3146 = vunpack.c.l.b16 %v3109
        %v3147 = vpack.c.b16 %v3116, %v3115
        %v3148 = vpack.c.b16 %v3118, %v3117
        %v3149 = vpack.c.b16 %v3120, %v3119
        %v3150 = vpack.c.b16 %v3122, %v3121
        %v3151 = vpack.c.b16 %v3124, %v3123
        %v3152 = vpack.c.b16 %v3126, %v3125
        %v3153 = vpack.c.b16 %v3128, %v3127
        %v3154 = vpack.c.b16 %v3130, %v3129
        %v3155 = vpack.c.b16 %v3132, %v3131
        %v3156 = vpack.c.b16 %v3134, %v3133
        %v3157 = vpack.c.b16 %v3136, %v3135
        %v3158 = vpack.c.b16 %v3138, %v3137
        %v3159 = vpack.c.b16 %v3140, %v3139
        %v3160 = vpack.c.b16 %v3142, %v3141
        %v3161 = vpack.c.b16 %v3144, %v3143
        %v3162 = vpack.c.b16 %v3146, %v3145
        %v3167 = vunpack.c.l.b16 %v3111
        %v3168 = vunpack.c.l.b16 %v3112
        %v3169 = vunpack.c.l.b16 %v3113
        %v3170 = vunpack.c.l.b16 %v3114
        %v3171 = vpack.c.b16 %v3168, %v3167
        %v3172 = vpack.c.b16 %v3170, %v3169
        %v3176 = vsel %vm1328, %v3147, 0
        %v3179 = vsel %vm1328, %v3148, 0
        %v3182 = vsel %vm1328, %v3149, 0
        %v3185 = vsel %vm1328, %v3150, 0
        %v3188 = vsel %vm1328, %v3151, 0
        %v3191 = vsel %vm1328, %v3152, 0
        %v3194 = vsel %vm1328, %v3153, 0
        %v3197 = vsel %vm1328, %v3154, 0
        %v3200 = vsel %vm1328, %v3155, 0
        %v3203 = vsel %vm1328, %v3156, 0
        %v3206 = vsel %vm1328, %v3157, 0
        %v3209 = vsel %vm1328, %v3158, 0
        %v3212 = vsel %vm1328, %v3159, 0
        %v3215 = vsel %vm1328, %v3160, 0
        %v3218 = vsel %vm1328, %v3161, 0
        %v3221 = vsel %vm1328, %v3162, 0
        %3223 = vmatprep.subr.bf16.mxu0 0
        %3224 = vmatpush1.bf16.msra.mxu0 0
        %3225 = vmatprep.subr.bf16.mxu0 0
        %3226 = vmatpush1.bf16.msra.mxu0 0
        %3227 = vmatprep.subr.bf16.mxu0 0
        %3228 = vmatpush1.bf16.msra.mxu0 0
        %3229 = vmatprep.subr.bf16.mxu0 0
        %3230 = vmatpush1.bf16.msra.mxu0 0
        %3231 = vmatprep.subr.bf16.mxu0 0
        %3232 = vmatpush1.bf16.msra.mxu0 0
        %3233 = vmatprep.subr.bf16.mxu0 0
        %3234 = vmatpush1.bf16.msra.mxu0 0
        %3235 = vmatprep.subr.bf16.mxu0 0
        %3236 = vmatpush1.bf16.msra.mxu0 %v3172
        %3237 = vmatprep.subr.bf16.mxu0 0
        %3238 = vmatpush1.bf16.msra.mxu0 %v3171
        %3239 = vmatprep.subr.bf16.mxu0 0
        %3240 = vmatpush2.bf16.msra.mxu0 0
        %3241 = vmatprep.subr.bf16.mxu0 0
        %3242 = vmatpush2.bf16.msra.mxu0 0
        %3243 = vmatprep.subr.bf16.mxu0 0
        %3244 = vmatpush2.bf16.msra.mxu0 0
        %3245 = vmatprep.subr.bf16.mxu0 0
        %3246 = vmatpush2.bf16.msra.mxu0 0
        %3247 = vmatprep.subr.bf16.mxu0 0
        %3248 = vmatpush2.bf16.msra.mxu0 0
        %3249 = vmatprep.subr.bf16.mxu0 0
        %3250 = vmatpush2.bf16.msra.mxu0 0
        %3251 = vmatprep.subr.bf16.mxu0 0
        %3252 = vmatpush2.bf16.msra.mxu0 0
        %3253 = vmatprep.subr.bf16.mxu0 0
        %3254 = vmatpush2.bf16.msra.mxu0 0
        %3255 = vmatprep.mubr.bf16.mxu0 0
        %3256 = vmatmul.mubr.bf16.gmra.mxu0 %v3176
        %v3257 = vpop.f32.mrf.mxu0
        %v3258 = vadd.f32 0.0, %v3257
        %v3259 = vpop.f32.mrf.mxu0
        %v3260 = vpop.f32.mrf.mxu0
        %v3261 = vadd.f32 0.0, %v3260
        %v3262 = vpop.f32.mrf.mxu0
        %3263 = vmatprep.mubr.bf16.mxu0 0
        %3264 = vmatmul.mubr.bf16.gmra.mxu0 %v3179
        %v3265 = vpop.f32.mrf.mxu0
        %v3266 = vadd.f32 0.0, %v3265
        %v3267 = vpop.f32.mrf.mxu0
        %v3268 = vpop.f32.mrf.mxu0
        %v3269 = vadd.f32 0.0, %v3268
        %v3270 = vpop.f32.mrf.mxu0
        %3271 = vmatprep.mubr.bf16.mxu0 0
        %3272 = vmatmul.mubr.bf16.gmra.mxu0 %v3182
        %v3273 = vpop.f32.mrf.mxu0
        %v3274 = vadd.f32 0.0, %v3273
        %v3275 = vpop.f32.mrf.mxu0
        %v3276 = vpop.f32.mrf.mxu0
        %v3277 = vadd.f32 0.0, %v3276
        %v3278 = vpop.f32.mrf.mxu0
        %3279 = vmatprep.mubr.bf16.mxu0 0
        %3280 = vmatmul.mubr.bf16.gmra.mxu0 %v3185
        %v3281 = vpop.f32.mrf.mxu0
        %v3282 = vadd.f32 0.0, %v3281
        %v3283 = vpop.f32.mrf.mxu0
        %v3284 = vpop.f32.mrf.mxu0
        %v3285 = vadd.f32 0.0, %v3284
        %v3286 = vpop.f32.mrf.mxu0
        %3287 = vmatprep.mubr.bf16.mxu0 0
        %3288 = vmatmul.mubr.bf16.gmra.mxu0 %v3188
        %v3289 = vpop.f32.mrf.mxu0
        %v3290 = vadd.f32 0.0, %v3289
        %v3291 = vpop.f32.mrf.mxu0
        %v3292 = vpop.f32.mrf.mxu0
        %v3293 = vadd.f32 0.0, %v3292
        %v3294 = vpop.f32.mrf.mxu0
        %3295 = vmatprep.mubr.bf16.mxu0 0
        %3296 = vmatmul.mubr.bf16.gmra.mxu0 %v3191
        %v3297 = vpop.f32.mrf.mxu0
        %v3298 = vadd.f32 0.0, %v3297
        %v3299 = vpop.f32.mrf.mxu0
        %v3300 = vpop.f32.mrf.mxu0
        %v3301 = vadd.f32 0.0, %v3300
        %v3302 = vpop.f32.mrf.mxu0
        %3303 = vmatprep.mubr.bf16.mxu0 0
        %3304 = vmatmul.mubr.bf16.gmra.mxu0 %v3194
        %v3305 = vpop.f32.mrf.mxu0
        %v3306 = vadd.f32 0.0, %v3305
        %v3307 = vpop.f32.mrf.mxu0
        %v3308 = vpop.f32.mrf.mxu0
        %v3309 = vadd.f32 0.0, %v3308
        %v3310 = vpop.f32.mrf.mxu0
        %3311 = vmatprep.mubr.bf16.mxu0 0
        %3312 = vmatmul.mubr.bf16.gmra.mxu0 %v3197
        %v3313 = vpop.f32.mrf.mxu0
        %v3314 = vadd.f32 0.0, %v3313
        %v3315 = vpop.f32.mrf.mxu0
        %v3316 = vpop.f32.mrf.mxu0
        %v3317 = vadd.f32 0.0, %v3316
        %v3318 = vpop.f32.mrf.mxu0
        %3319 = vmatprep.mubr.bf16.mxu0 0
        %3320 = vmatmul.mubr.bf16.gmra.mxu0 %v3200
        %v3321 = vpop.f32.mrf.mxu0
        %v3322 = vadd.f32 0.0, %v3321
        %v3323 = vpop.f32.mrf.mxu0
        %v3324 = vpop.f32.mrf.mxu0
        %v3325 = vadd.f32 0.0, %v3324
        %v3326 = vpop.f32.mrf.mxu0
        %3327 = vmatprep.mubr.bf16.mxu0 0
        %3328 = vmatmul.mubr.bf16.gmra.mxu0 %v3203
        %v3329 = vpop.f32.mrf.mxu0
        %v3330 = vadd.f32 0.0, %v3329
        %v3331 = vpop.f32.mrf.mxu0
        %v3332 = vpop.f32.mrf.mxu0
        %v3333 = vadd.f32 0.0, %v3332
        %v3334 = vpop.f32.mrf.mxu0
        %3335 = vmatprep.mubr.bf16.mxu0 0
        %3336 = vmatmul.mubr.bf16.gmra.mxu0 %v3206
        %v3337 = vpop.f32.mrf.mxu0
        %v3338 = vadd.f32 0.0, %v3337
        %v3339 = vpop.f32.mrf.mxu0
        %v3340 = vpop.f32.mrf.mxu0
        %v3341 = vadd.f32 0.0, %v3340
        %v3342 = vpop.f32.mrf.mxu0
        %3343 = vmatprep.mubr.bf16.mxu0 0
        %3344 = vmatmul.mubr.bf16.gmra.mxu0 %v3209
        %v3345 = vpop.f32.mrf.mxu0
        %v3346 = vadd.f32 0.0, %v3345
        %v3347 = vpop.f32.mrf.mxu0
        %v3348 = vpop.f32.mrf.mxu0
        %v3349 = vadd.f32 0.0, %v3348
        %v3350 = vpop.f32.mrf.mxu0
        %3351 = vmatprep.mubr.bf16.mxu0 0
        %3352 = vmatmul.mubr.bf16.gmra.mxu0 %v3212
        %v3353 = vpop.f32.mrf.mxu0
        %v3354 = vadd.f32 0.0, %v3353
        %v3355 = vpop.f32.mrf.mxu0
        %v3356 = vpop.f32.mrf.mxu0
        %v3357 = vadd.f32 0.0, %v3356
        %v3358 = vpop.f32.mrf.mxu0
        %3359 = vmatprep.mubr.bf16.mxu0 0
        %3360 = vmatmul.mubr.bf16.gmra.mxu0 %v3215
        %v3361 = vpop.f32.mrf.mxu0
        %v3362 = vadd.f32 0.0, %v3361
        %v3363 = vpop.f32.mrf.mxu0
        %v3364 = vpop.f32.mrf.mxu0
        %v3365 = vadd.f32 0.0, %v3364
        %v3366 = vpop.f32.mrf.mxu0
        %3367 = vmatprep.mubr.bf16.mxu0 0
        %3368 = vmatmul.mubr.bf16.gmra.mxu0 %v3218
        %v3369 = vpop.f32.mrf.mxu0
        %v3370 = vadd.f32 0.0, %v3369
        %v3371 = vpop.f32.mrf.mxu0
        %v3372 = vpop.f32.mrf.mxu0
        %v3373 = vadd.f32 0.0, %v3372
        %v3374 = vpop.f32.mrf.mxu0
        %3375 = vmatprep.mubr.bf16.mxu0 0
        %3376 = vmatmul.mubr.bf16.gmra.mxu0 %v3221
        %v3377 = vpop.f32.mrf.mxu0
        %v3378 = vadd.f32 0.0, %v3377
        %v3379 = vpop.f32.mrf.mxu0
        %v3380 = vpop.f32.mrf.mxu0
        %v3381 = vadd.f32 0.0, %v3380
        %v3382 = vpop.f32.mrf.mxu0
        %3383 = vdwg.mxu0
        %v3384 = vadd.f32 %v2646, %v3258
        %v3385 = vadd.f32 %v2647, %v3261
        %v3386 = vadd.f32 %v2648, %v3266
        %v3387 = vadd.f32 %v2649, %v3269
        %v3388 = vadd.f32 %v2650, %v3274
        %v3389 = vadd.f32 %v2651, %v3277
        %v3390 = vadd.f32 %v2652, %v3282
        %v3391 = vadd.f32 %v2653, %v3285
        %v3392 = vadd.f32 %v2654, %v3290
        %v3393 = vadd.f32 %v2655, %v3293
        %v3394 = vadd.f32 %v2656, %v3298
        %v3395 = vadd.f32 %v2657, %v3301
        %v3396 = vadd.f32 %v2658, %v3306
        %v3397 = vadd.f32 %v2659, %v3309
        %v3398 = vadd.f32 %v2660, %v3314
        %v3399 = vadd.f32 %v2661, %v3317
        %v3400 = vadd.f32 %v2662, %v3322
        %v3401 = vadd.f32 %v2663, %v3325
        %v3402 = vadd.f32 %v2664, %v3330
        %v3403 = vadd.f32 %v2665, %v3333
        %v3404 = vadd.f32 %v2666, %v3338
        %v3405 = vadd.f32 %v2667, %v3341
        %v3406 = vadd.f32 %v2668, %v3346
        %v3407 = vadd.f32 %v2669, %v3349
        %v3408 = vadd.f32 %v2670, %v3354
        %v3409 = vadd.f32 %v2671, %v3357
        %v3410 = vadd.f32 %v2672, %v3362
        %v3411 = vadd.f32 %v2673, %v3365
        %v3412 = vadd.f32 %v2674, %v3370
        %v3413 = vadd.f32 %v2675, %v3373
        %v3414 = vadd.f32 %v2676, %v3378
        %v3415 = vadd.f32 %v2677, %v3381
        %v3416 = vld [vmem:[%s254] sm:$0xe]
        %v3417 = vld [vmem:[%s254 + $0xc] sm:$0xe]
        %v3418 = vld [vmem:[%s254 + $0x18] sm:$0xe]
        %v3419 = vld [vmem:[%s254 + $0x24] sm:$0xe]
        %v3420 = vld [vmem:[%s254 + $0x30] sm:$0xe]
        %v3421 = vld [vmem:[%s254 + $0x3c] sm:$0xe]
        %v3422 = vld [vmem:[%s254 + $0x48] sm:$0xe]
        %v3423 = vld [vmem:[%s254 + $0x54] sm:$0xe]
        %v3424 = vld [vmem:[%s254 + $0x60] sm:$0xe]
        %v3425 = vld [vmem:[%s254 + $0x6c] sm:$0xe]
        %v3426 = vld [vmem:[%s254 + $0x78] sm:$0xe]
        %v3427 = vld [vmem:[%s254 + $0x84] sm:$0xe]
        %v3428 = vld [vmem:[%s254 + $0x90] sm:$0xe]
        %v3429 = vld [vmem:[%s254 + $0x9c] sm:$0xe]
        %v3430 = vld [vmem:[%s254 + $0xa8] sm:$0xe]
        %v3431 = vld [vmem:[%s254 + $0xb4] sm:$0xe]
        %v3480 = vrot.slane %v3416, 5
        %v3481 = vrot.slane %v3480, 4
        %v3482 = vrot.slane %v2679, 5
        %v3483 = vsel %vm1889, %v3481, %v3482
        %v3484 = vrot.slane %v3482, 4
        %v3485 = vrot.slane %v2680, 5
        %v3486 = vsel %vm1889, %v3484, %v3485
        %v3487 = vrot.slane %v3417, 5
        %v3488 = vrot.slane %v3487, 4
        %v3489 = vrot.slane %v2682, 5
        %v3490 = vsel %vm1889, %v3488, %v3489
        %v3491 = vrot.slane %v3489, 4
        %v3492 = vrot.slane %v2683, 5
        %v3493 = vsel %vm1889, %v3491, %v3492
        %v3494 = vrot.slane %v3418, 5
        %v3495 = vrot.slane %v3494, 4
        %v3496 = vrot.slane %v2685, 5
        %v3497 = vsel %vm1889, %v3495, %v3496
        %v3498 = vrot.slane %v3496, 4
        %v3499 = vrot.slane %v2686, 5
        %v3500 = vsel %vm1889, %v3498, %v3499
        %v3501 = vrot.slane %v3419, 5
        %v3502 = vrot.slane %v3501, 4
        %v3503 = vrot.slane %v2688, 5
        %v3504 = vsel %vm1889, %v3502, %v3503
        %v3505 = vrot.slane %v3503, 4
        %v3506 = vrot.slane %v2689, 5
        %v3507 = vsel %vm1889, %v3505, %v3506
        %v3508 = vrot.slane %v3420, 5
        %v3509 = vrot.slane %v3508, 4
        %v3510 = vrot.slane %v2691, 5
        %v3511 = vsel %vm1889, %v3509, %v3510
        %v3512 = vrot.slane %v3510, 4
        %v3513 = vrot.slane %v2692, 5
        %v3514 = vsel %vm1889, %v3512, %v3513
        %v3515 = vrot.slane %v3421, 5
        %v3516 = vrot.slane %v3515, 4
        %v3517 = vrot.slane %v2694, 5
        %v3518 = vsel %vm1889, %v3516, %v3517
        %v3519 = vrot.slane %v3517, 4
        %v3520 = vrot.slane %v2695, 5
        %v3521 = vsel %vm1889, %v3519, %v3520
        %v3522 = vrot.slane %v3422, 5
        %v3523 = vrot.slane %v3522, 4
        %v3524 = vrot.slane %v2697, 5
        %v3525 = vsel %vm1889, %v3523, %v3524
        %v3526 = vrot.slane %v3524, 4
        %v3527 = vrot.slane %v2698, 5
        %v3528 = vsel %vm1889, %v3526, %v3527
        %v3529 = vrot.slane %v3423, 5
        %v3530 = vrot.slane %v3529, 4
        %v3531 = vrot.slane %v2700, 5
        %v3532 = vsel %vm1889, %v3530, %v3531
        %v3533 = vrot.slane %v3531, 4
        %v3534 = vrot.slane %v2701, 5
        %v3535 = vsel %vm1889, %v3533, %v3534
        %v3536 = vrot.slane %v3424, 5
        %v3537 = vrot.slane %v3536, 4
        %v3538 = vrot.slane %v2703, 5
        %v3539 = vsel %vm1889, %v3537, %v3538
        %v3540 = vrot.slane %v3538, 4
        %v3541 = vrot.slane %v2704, 5
        %v3542 = vsel %vm1889, %v3540, %v3541
        %v3543 = vrot.slane %v3425, 5
        %v3544 = vrot.slane %v3543, 4
        %v3545 = vrot.slane %v2706, 5
        %v3546 = vsel %vm1889, %v3544, %v3545
        %v3547 = vrot.slane %v3545, 4
        %v3548 = vrot.slane %v2707, 5
        %v3549 = vsel %vm1889, %v3547, %v3548
        %v3550 = vrot.slane %v3426, 5
        %v3551 = vrot.slane %v3550, 4
        %v3552 = vrot.slane %v2709, 5
        %v3553 = vsel %vm1889, %v3551, %v3552
        %v3554 = vrot.slane %v3552, 4
        %v3555 = vrot.slane %v2710, 5
        %v3556 = vsel %vm1889, %v3554, %v3555
        %v3557 = vrot.slane %v3427, 5
        %v3558 = vrot.slane %v3557, 4
        %v3559 = vrot.slane %v2712, 5
        %v3560 = vsel %vm1889, %v3558, %v3559
        %v3561 = vrot.slane %v3559, 4
        %v3562 = vrot.slane %v2713, 5
        %v3563 = vsel %vm1889, %v3561, %v3562
        %v3564 = vrot.slane %v3428, 5
        %v3565 = vrot.slane %v3564, 4
        %v3566 = vrot.slane %v2715, 5
        %v3567 = vsel %vm1889, %v3565, %v3566
        %v3568 = vrot.slane %v3566, 4
        %v3569 = vrot.slane %v2716, 5
        %v3570 = vsel %vm1889, %v3568, %v3569
        %v3571 = vrot.slane %v3429, 5
        %v3572 = vrot.slane %v3571, 4
        %v3573 = vrot.slane %v2718, 5
        %v3574 = vsel %vm1889, %v3572, %v3573
        %v3575 = vrot.slane %v3573, 4
        %v3576 = vrot.slane %v2719, 5
        %v3577 = vsel %vm1889, %v3575, %v3576
        %v3578 = vrot.slane %v3430, 5
        %v3579 = vrot.slane %v3578, 4
        %v3580 = vrot.slane %v2721, 5
        %v3581 = vsel %vm1889, %v3579, %v3580
        %v3582 = vrot.slane %v3580, 4
        %v3583 = vrot.slane %v2722, 5
        %v3584 = vsel %vm1889, %v3582, %v3583
        %v3585 = vrot.slane %v3431, 5
        %v3586 = vrot.slane %v3585, 4
        %v3587 = vrot.slane %v2724, 5
        %v3588 = vsel %vm1889, %v3586, %v3587
        %v3589 = vrot.slane %v3587, 4
        %v3590 = vrot.slane %v2725, 5
        %v3591 = vsel %vm1889, %v3589, %v3590
        %s3592 = scalar_lea.vmem %s1, 80
        %v3593 = vld [vmem:[%s3592] sm:$0xf]
        %v3594 = vld [vmem:[%s3592 + $0x4] sm:$0xf]
        %v3595 = vld [vmem:[%s3592 + $0x8] sm:$0xf]
        %v3596 = vld [vmem:[%s3592 + $0xc] sm:$0xf]
        %v3597 = vunpack.c.l.b16 %v3483
        %v3598 = vunpack.c.l.b16 %v3486
        %v3599 = vunpack.c.l.b16 %v3490
        %v3600 = vunpack.c.l.b16 %v3493
        %v3601 = vunpack.c.l.b16 %v3497
        %v3602 = vunpack.c.l.b16 %v3500
        %v3603 = vunpack.c.l.b16 %v3504
        %v3604 = vunpack.c.l.b16 %v3507
        %v3605 = vunpack.c.l.b16 %v3511
        %v3606 = vunpack.c.l.b16 %v3514
        %v3607 = vunpack.c.l.b16 %v3518
        %v3608 = vunpack.c.l.b16 %v3521
        %v3609 = vunpack.c.l.b16 %v3525
        %v3610 = vunpack.c.l.b16 %v3528
        %v3611 = vunpack.c.l.b16 %v3532
        %v3612 = vunpack.c.l.b16 %v3535
        %v3613 = vunpack.c.l.b16 %v3539
        %v3614 = vunpack.c.l.b16 %v3542
        %v3615 = vunpack.c.l.b16 %v3546
        %v3616 = vunpack.c.l.b16 %v3549
        %v3617 = vunpack.c.l.b16 %v3553
        %v3618 = vunpack.c.l.b16 %v3556
        %v3619 = vunpack.c.l.b16 %v3560
        %v3620 = vunpack.c.l.b16 %v3563
        %v3621 = vunpack.c.l.b16 %v3567
        %v3622 = vunpack.c.l.b16 %v3570
        %v3623 = vunpack.c.l.b16 %v3574
        %v3624 = vunpack.c.l.b16 %v3577
        %v3625 = vunpack.c.l.b16 %v3581
        %v3626 = vunpack.c.l.b16 %v3584
        %v3627 = vunpack.c.l.b16 %v3588
        %v3628 = vunpack.c.l.b16 %v3591
        %v3629 = vpack.c.b16 %v3598, %v3597
        %v3630 = vpack.c.b16 %v3600, %v3599
        %v3631 = vpack.c.b16 %v3602, %v3601
        %v3632 = vpack.c.b16 %v3604, %v3603
        %v3633 = vpack.c.b16 %v3606, %v3605
        %v3634 = vpack.c.b16 %v3608, %v3607
        %v3635 = vpack.c.b16 %v3610, %v3609
        %v3636 = vpack.c.b16 %v3612, %v3611
        %v3637 = vpack.c.b16 %v3614, %v3613
        %v3638 = vpack.c.b16 %v3616, %v3615
        %v3639 = vpack.c.b16 %v3618, %v3617
        %v3640 = vpack.c.b16 %v3620, %v3619
        %v3641 = vpack.c.b16 %v3622, %v3621
        %v3642 = vpack.c.b16 %v3624, %v3623
        %v3643 = vpack.c.b16 %v3626, %v3625
        %v3644 = vpack.c.b16 %v3628, %v3627
        %v3649 = vunpack.c.l.b16 %v3593
        %v3650 = vunpack.c.l.b16 %v3594
        %v3651 = vunpack.c.l.b16 %v3595
        %v3652 = vunpack.c.l.b16 %v3596
        %v3653 = vpack.c.b16 %v3650, %v3649
        %v3654 = vpack.c.b16 %v3652, %v3651
        %v3658 = vsel %vm1328, %v3629, 0
        %v3661 = vsel %vm1328, %v3630, 0
        %v3664 = vsel %vm1328, %v3631, 0
        %v3667 = vsel %vm1328, %v3632, 0
        %v3670 = vsel %vm1328, %v3633, 0
        %v3673 = vsel %vm1328, %v3634, 0
        %v3676 = vsel %vm1328, %v3635, 0
        %v3679 = vsel %vm1328, %v3636, 0
        %v3682 = vsel %vm1328, %v3637, 0
        %v3685 = vsel %vm1328, %v3638, 0
        %v3688 = vsel %vm1328, %v3639, 0
        %v3691 = vsel %vm1328, %v3640, 0
        %v3694 = vsel %vm1328, %v3641, 0
        %v3697 = vsel %vm1328, %v3642, 0
        %v3700 = vsel %vm1328, %v3643, 0
        %v3703 = vsel %vm1328, %v3644, 0
        %3705 = vmatprep.subr.bf16.mxu0 0
        %3706 = vmatpush1.bf16.msra.mxu0 0
        %3707 = vmatprep.subr.bf16.mxu0 0
        %3708 = vmatpush1.bf16.msra.mxu0 0
        %3709 = vmatprep.subr.bf16.mxu0 0
        %3710 = vmatpush1.bf16.msra.mxu0 0
        %3711 = vmatprep.subr.bf16.mxu0 0
        %3712 = vmatpush1.bf16.msra.mxu0 0
        %3713 = vmatprep.subr.bf16.mxu0 0
        %3714 = vmatpush1.bf16.msra.mxu0 0
        %3715 = vmatprep.subr.bf16.mxu0 0
        %3716 = vmatpush1.bf16.msra.mxu0 0
        %3717 = vmatprep.subr.bf16.mxu0 0
        %3718 = vmatpush1.bf16.msra.mxu0 %v3654
        %3719 = vmatprep.subr.bf16.mxu0 0
        %3720 = vmatpush1.bf16.msra.mxu0 %v3653
        %3721 = vmatprep.subr.bf16.mxu0 0
        %3722 = vmatpush2.bf16.msra.mxu0 0
        %3723 = vmatprep.subr.bf16.mxu0 0
        %3724 = vmatpush2.bf16.msra.mxu0 0
        %3725 = vmatprep.subr.bf16.mxu0 0
        %3726 = vmatpush2.bf16.msra.mxu0 0
        %3727 = vmatprep.subr.bf16.mxu0 0
        %3728 = vmatpush2.bf16.msra.mxu0 0
        %3729 = vmatprep.subr.bf16.mxu0 0
        %3730 = vmatpush2.bf16.msra.mxu0 0
        %3731 = vmatprep.subr.bf16.mxu0 0
        %3732 = vmatpush2.bf16.msra.mxu0 0
        %3733 = vmatprep.subr.bf16.mxu0 0
        %3734 = vmatpush2.bf16.msra.mxu0 0
        %3735 = vmatprep.subr.bf16.mxu0 0
        %3736 = vmatpush2.bf16.msra.mxu0 0
        %3737 = vmatprep.mubr.bf16.mxu0 0
        %3738 = vmatmul.mubr.bf16.gmra.mxu0 %v3658
        %v3739 = vpop.f32.mrf.mxu0
        %v3740 = vadd.f32 0.0, %v3739
        %v3741 = vpop.f32.mrf.mxu0
        %v3742 = vpop.f32.mrf.mxu0
        %v3743 = vadd.f32 0.0, %v3742
        %v3744 = vpop.f32.mrf.mxu0
        %3745 = vmatprep.mubr.bf16.mxu0 0
        %3746 = vmatmul.mubr.bf16.gmra.mxu0 %v3661
        %v3747 = vpop.f32.mrf.mxu0
        %v3748 = vadd.f32 0.0, %v3747
        %v3749 = vpop.f32.mrf.mxu0
        %v3750 = vpop.f32.mrf.mxu0
        %v3751 = vadd.f32 0.0, %v3750
        %v3752 = vpop.f32.mrf.mxu0
        %3753 = vmatprep.mubr.bf16.mxu0 0
        %3754 = vmatmul.mubr.bf16.gmra.mxu0 %v3664
        %v3755 = vpop.f32.mrf.mxu0
        %v3756 = vadd.f32 0.0, %v3755
        %v3757 = vpop.f32.mrf.mxu0
        %v3758 = vpop.f32.mrf.mxu0
        %v3759 = vadd.f32 0.0, %v3758
        %v3760 = vpop.f32.mrf.mxu0
        %3761 = vmatprep.mubr.bf16.mxu0 0
        %3762 = vmatmul.mubr.bf16.gmra.mxu0 %v3667
        %v3763 = vpop.f32.mrf.mxu0
        %v3764 = vadd.f32 0.0, %v3763
        %v3765 = vpop.f32.mrf.mxu0
        %v3766 = vpop.f32.mrf.mxu0
        %v3767 = vadd.f32 0.0, %v3766
        %v3768 = vpop.f32.mrf.mxu0
        %3769 = vmatprep.mubr.bf16.mxu0 0
        %3770 = vmatmul.mubr.bf16.gmra.mxu0 %v3670
        %v3771 = vpop.f32.mrf.mxu0
        %v3772 = vadd.f32 0.0, %v3771
        %v3773 = vpop.f32.mrf.mxu0
        %v3774 = vpop.f32.mrf.mxu0
        %v3775 = vadd.f32 0.0, %v3774
        %v3776 = vpop.f32.mrf.mxu0
        %3777 = vmatprep.mubr.bf16.mxu0 0
        %3778 = vmatmul.mubr.bf16.gmra.mxu0 %v3673
        %v3779 = vpop.f32.mrf.mxu0
        %v3780 = vadd.f32 0.0, %v3779
        %v3781 = vpop.f32.mrf.mxu0
        %v3782 = vpop.f32.mrf.mxu0
        %v3783 = vadd.f32 0.0, %v3782
        %v3784 = vpop.f32.mrf.mxu0
        %3785 = vmatprep.mubr.bf16.mxu0 0
        %3786 = vmatmul.mubr.bf16.gmra.mxu0 %v3676
        %v3787 = vpop.f32.mrf.mxu0
        %v3788 = vadd.f32 0.0, %v3787
        %v3789 = vpop.f32.mrf.mxu0
        %v3790 = vpop.f32.mrf.mxu0
        %v3791 = vadd.f32 0.0, %v3790
        %v3792 = vpop.f32.mrf.mxu0
        %3793 = vmatprep.mubr.bf16.mxu0 0
        %3794 = vmatmul.mubr.bf16.gmra.mxu0 %v3679
        %v3795 = vpop.f32.mrf.mxu0
        %v3796 = vadd.f32 0.0, %v3795
        %v3797 = vpop.f32.mrf.mxu0
        %v3798 = vpop.f32.mrf.mxu0
        %v3799 = vadd.f32 0.0, %v3798
        %v3800 = vpop.f32.mrf.mxu0
        %3801 = vmatprep.mubr.bf16.mxu0 0
        %3802 = vmatmul.mubr.bf16.gmra.mxu0 %v3682
        %v3803 = vpop.f32.mrf.mxu0
        %v3804 = vadd.f32 0.0, %v3803
        %v3805 = vpop.f32.mrf.mxu0
        %v3806 = vpop.f32.mrf.mxu0
        %v3807 = vadd.f32 0.0, %v3806
        %v3808 = vpop.f32.mrf.mxu0
        %3809 = vmatprep.mubr.bf16.mxu0 0
        %3810 = vmatmul.mubr.bf16.gmra.mxu0 %v3685
        %v3811 = vpop.f32.mrf.mxu0
        %v3812 = vadd.f32 0.0, %v3811
        %v3813 = vpop.f32.mrf.mxu0
        %v3814 = vpop.f32.mrf.mxu0
        %v3815 = vadd.f32 0.0, %v3814
        %v3816 = vpop.f32.mrf.mxu0
        %3817 = vmatprep.mubr.bf16.mxu0 0
        %3818 = vmatmul.mubr.bf16.gmra.mxu0 %v3688
        %v3819 = vpop.f32.mrf.mxu0
        %v3820 = vadd.f32 0.0, %v3819
        %v3821 = vpop.f32.mrf.mxu0
        %v3822 = vpop.f32.mrf.mxu0
        %v3823 = vadd.f32 0.0, %v3822
        %v3824 = vpop.f32.mrf.mxu0
        %3825 = vmatprep.mubr.bf16.mxu0 0
        %3826 = vmatmul.mubr.bf16.gmra.mxu0 %v3691
        %v3827 = vpop.f32.mrf.mxu0
        %v3828 = vadd.f32 0.0, %v3827
        %v3829 = vpop.f32.mrf.mxu0
        %v3830 = vpop.f32.mrf.mxu0
        %v3831 = vadd.f32 0.0, %v3830
        %v3832 = vpop.f32.mrf.mxu0
        %3833 = vmatprep.mubr.bf16.mxu0 0
        %3834 = vmatmul.mubr.bf16.gmra.mxu0 %v3694
        %v3835 = vpop.f32.mrf.mxu0
        %v3836 = vadd.f32 0.0, %v3835
        %v3837 = vpop.f32.mrf.mxu0
        %v3838 = vpop.f32.mrf.mxu0
        %v3839 = vadd.f32 0.0, %v3838
        %v3840 = vpop.f32.mrf.mxu0
        %3841 = vmatprep.mubr.bf16.mxu0 0
        %3842 = vmatmul.mubr.bf16.gmra.mxu0 %v3697
        %v3843 = vpop.f32.mrf.mxu0
        %v3844 = vadd.f32 0.0, %v3843
        %v3845 = vpop.f32.mrf.mxu0
        %v3846 = vpop.f32.mrf.mxu0
        %v3847 = vadd.f32 0.0, %v3846
        %v3848 = vpop.f32.mrf.mxu0
        %3849 = vmatprep.mubr.bf16.mxu0 0
        %3850 = vmatmul.mubr.bf16.gmra.mxu0 %v3700
        %v3851 = vpop.f32.mrf.mxu0
        %v3852 = vadd.f32 0.0, %v3851
        %v3853 = vpop.f32.mrf.mxu0
        %v3854 = vpop.f32.mrf.mxu0
        %v3855 = vadd.f32 0.0, %v3854
        %v3856 = vpop.f32.mrf.mxu0
        %3857 = vmatprep.mubr.bf16.mxu0 0
        %3858 = vmatmul.mubr.bf16.gmra.mxu0 %v3703
        %v3859 = vpop.f32.mrf.mxu0
        %v3860 = vadd.f32 0.0, %v3859
        %v3861 = vpop.f32.mrf.mxu0
        %v3862 = vpop.f32.mrf.mxu0
        %v3863 = vadd.f32 0.0, %v3862
        %v3864 = vpop.f32.mrf.mxu0
        %3865 = vdwg.mxu0
        %v3866 = vadd.f32 %v3384, %v3740
        %v3867 = vadd.f32 %v3385, %v3743
        %v3868 = vadd.f32 %v3386, %v3748
        %v3869 = vadd.f32 %v3387, %v3751
        %v3870 = vadd.f32 %v3388, %v3756
        %v3871 = vadd.f32 %v3389, %v3759
        %v3872 = vadd.f32 %v3390, %v3764
        %v3873 = vadd.f32 %v3391, %v3767
        %v3874 = vadd.f32 %v3392, %v3772
        %v3875 = vadd.f32 %v3393, %v3775
        %v3876 = vadd.f32 %v3394, %v3780
        %v3877 = vadd.f32 %v3395, %v3783
        %v3878 = vadd.f32 %v3396, %v3788
        %v3879 = vadd.f32 %v3397, %v3791
        %v3880 = vadd.f32 %v3398, %v3796
        %v3881 = vadd.f32 %v3399, %v3799
        %v3882 = vadd.f32 %v3400, %v3804
        %v3883 = vadd.f32 %v3401, %v3807
        %v3884 = vadd.f32 %v3402, %v3812
        %v3885 = vadd.f32 %v3403, %v3815
        %v3886 = vadd.f32 %v3404, %v3820
        %v3887 = vadd.f32 %v3405, %v3823
        %v3888 = vadd.f32 %v3406, %v3828
        %v3889 = vadd.f32 %v3407, %v3831
        %v3890 = vadd.f32 %v3408, %v3836
        %v3891 = vadd.f32 %v3409, %v3839
        %v3892 = vadd.f32 %v3410, %v3844
        %v3893 = vadd.f32 %v3411, %v3847
        %v3894 = vadd.f32 %v3412, %v3852
        %v3895 = vadd.f32 %v3413, %v3855
        %v3896 = vadd.f32 %v3414, %v3860
        %v3897 = vadd.f32 %v3415, %v3863
        %s3898 = scalar_lea.vmem [#allocation2], 24
        %v3899 = vld [vmem:[%s3898] sm:$0xf]
        %v3900 = vld [vmem:[%s3898 + $0x4] sm:$0xf]
        %v3901 = vld [vmem:[%s3898 + $0xc] sm:$0xf]
        %v3902 = vld [vmem:[%s3898 + $0x10] sm:$0xf]
        %v3903 = vld [vmem:[%s3898 + $0x18] sm:$0xf]
        %v3904 = vld [vmem:[%s3898 + $0x1c] sm:$0xf]
        %v3905 = vld [vmem:[%s3898 + $0x24] sm:$0xf]
        %v3906 = vld [vmem:[%s3898 + $0x28] sm:$0xf]
        %v3907 = vld [vmem:[%s3898 + $0x30] sm:$0xf]
        %v3908 = vld [vmem:[%s3898 + $0x34] sm:$0xf]
        %v3909 = vld [vmem:[%s3898 + $0x3c] sm:$0xf]
        %v3910 = vld [vmem:[%s3898 + $0x40] sm:$0xf]
        %v3911 = vld [vmem:[%s3898 + $0x48] sm:$0xf]
        %v3912 = vld [vmem:[%s3898 + $0x4c] sm:$0xf]
        %v3913 = vld [vmem:[%s3898 + $0x54] sm:$0xf]
        %v3914 = vld [vmem:[%s3898 + $0x58] sm:$0xf]
        %v3915 = vld [vmem:[%s3898 + $0x60] sm:$0xf]
        %v3916 = vld [vmem:[%s3898 + $0x64] sm:$0xf]
        %v3917 = vld [vmem:[%s3898 + $0x6c] sm:$0xf]
        %v3918 = vld [vmem:[%s3898 + $0x70] sm:$0xf]
        %v3919 = vld [vmem:[%s3898 + $0x78] sm:$0xf]
        %v3920 = vld [vmem:[%s3898 + $0x7c] sm:$0xf]
        %v3921 = vld [vmem:[%s3898 + $0x84] sm:$0xf]
        %v3922 = vld [vmem:[%s3898 + $0x88] sm:$0xf]
        %v3923 = vld [vmem:[%s3898 + $0x90] sm:$0xf]
        %v3924 = vld [vmem:[%s3898 + $0x94] sm:$0xf]
        %v3925 = vld [vmem:[%s3898 + $0x9c] sm:$0xf]
        %v3926 = vld [vmem:[%s3898 + $0xa0] sm:$0xf]
        %v3927 = vld [vmem:[%s3898 + $0xa8] sm:$0xf]
        %v3928 = vld [vmem:[%s3898 + $0xac] sm:$0xf]
        %v3929 = vld [vmem:[%s3898 + $0xb4] sm:$0xf]
        %v3930 = vld [vmem:[%s3898 + $0xb8] sm:$0xf]
        %s3931 = scalar_lea.vmem %s1, 96
        %v3932 = vld [vmem:[%s3931] sm:$0xf]
        %v3933 = vld [vmem:[%s3931 + $0x4] sm:$0xf]
        %v3934 = vld [vmem:[%s3931 + $0x8] sm:$0xf]
        %v3935 = vld [vmem:[%s3931 + $0xc] sm:$0xf]
        %v3968 = vunpack.c.l.b16 %v3899
        %v3969 = vunpack.c.l.b16 %v3900
        %v3970 = vunpack.c.l.b16 %v3901
        %v3971 = vunpack.c.l.b16 %v3902
        %v3972 = vunpack.c.l.b16 %v3903
        %v3973 = vunpack.c.l.b16 %v3904
        %v3974 = vunpack.c.l.b16 %v3905
        %v3975 = vunpack.c.l.b16 %v3906
        %v3976 = vunpack.c.l.b16 %v3907
        %v3977 = vunpack.c.l.b16 %v3908
        %v3978 = vunpack.c.l.b16 %v3909
        %v3979 = vunpack.c.l.b16 %v3910
        %v3980 = vunpack.c.l.b16 %v3911
        %v3981 = vunpack.c.l.b16 %v3912
        %v3982 = vunpack.c.l.b16 %v3913
        %v3983 = vunpack.c.l.b16 %v3914
        %v3984 = vunpack.c.l.b16 %v3915
        %v3985 = vunpack.c.l.b16 %v3916
        %v3986 = vunpack.c.l.b16 %v3917
        %v3987 = vunpack.c.l.b16 %v3918
        %v3988 = vunpack.c.l.b16 %v3919
        %v3989 = vunpack.c.l.b16 %v3920
        %v3990 = vunpack.c.l.b16 %v3921
        %v3991 = vunpack.c.l.b16 %v3922
        %v3992 = vunpack.c.l.b16 %v3923
        %v3993 = vunpack.c.l.b16 %v3924
        %v3994 = vunpack.c.l.b16 %v3925
        %v3995 = vunpack.c.l.b16 %v3926
        %v3996 = vunpack.c.l.b16 %v3927
        %v3997 = vunpack.c.l.b16 %v3928
        %v3998 = vunpack.c.l.b16 %v3929
        %v3999 = vunpack.c.l.b16 %v3930
        %v4000 = vpack.c.b16 %v3969, %v3968
        %v4001 = vpack.c.b16 %v3971, %v3970
        %v4002 = vpack.c.b16 %v3973, %v3972
        %v4003 = vpack.c.b16 %v3975, %v3974
        %v4004 = vpack.c.b16 %v3977, %v3976
        %v4005 = vpack.c.b16 %v3979, %v3978
        %v4006 = vpack.c.b16 %v3981, %v3980
        %v4007 = vpack.c.b16 %v3983, %v3982
        %v4008 = vpack.c.b16 %v3985, %v3984
        %v4009 = vpack.c.b16 %v3987, %v3986
        %v4010 = vpack.c.b16 %v3989, %v3988
        %v4011 = vpack.c.b16 %v3991, %v3990
        %v4012 = vpack.c.b16 %v3993, %v3992
        %v4013 = vpack.c.b16 %v3995, %v3994
        %v4014 = vpack.c.b16 %v3997, %v3996
        %v4015 = vpack.c.b16 %v3999, %v3998
        %v4020 = vunpack.c.l.b16 %v3932
        %v4021 = vunpack.c.l.b16 %v3933
        %v4022 = vunpack.c.l.b16 %v3934
        %v4023 = vunpack.c.l.b16 %v3935
        %v4024 = vpack.c.b16 %v4021, %v4020
        %v4025 = vpack.c.b16 %v4023, %v4022
        %v4029 = vsel %vm1328, %v4000, 0
        %v4032 = vsel %vm1328, %v4001, 0
        %v4035 = vsel %vm1328, %v4002, 0
        %v4038 = vsel %vm1328, %v4003, 0
        %v4041 = vsel %vm1328, %v4004, 0
        %v4044 = vsel %vm1328, %v4005, 0
        %v4047 = vsel %vm1328, %v4006, 0
        %v4050 = vsel %vm1328, %v4007, 0
        %v4053 = vsel %vm1328, %v4008, 0
        %v4056 = vsel %vm1328, %v4009, 0
        %v4059 = vsel %vm1328, %v4010, 0
        %v4062 = vsel %vm1328, %v4011, 0
        %v4065 = vsel %vm1328, %v4012, 0
        %v4068 = vsel %vm1328, %v4013, 0
        %v4071 = vsel %vm1328, %v4014, 0
        %v4074 = vsel %vm1328, %v4015, 0
        %4076 = vmatprep.subr.bf16.mxu0 0
        %4077 = vmatpush1.bf16.msra.mxu0 0
        %4078 = vmatprep.subr.bf16.mxu0 0
        %4079 = vmatpush1.bf16.msra.mxu0 0
        %4080 = vmatprep.subr.bf16.mxu0 0
        %4081 = vmatpush1.bf16.msra.mxu0 0
        %4082 = vmatprep.subr.bf16.mxu0 0
        %4083 = vmatpush1.bf16.msra.mxu0 0
        %4084 = vmatprep.subr.bf16.mxu0 0
        %4085 = vmatpush1.bf16.msra.mxu0 0
        %4086 = vmatprep.subr.bf16.mxu0 0
        %4087 = vmatpush1.bf16.msra.mxu0 0
        %4088 = vmatprep.subr.bf16.mxu0 0
        %4089 = vmatpush1.bf16.msra.mxu0 %v4025
        %4090 = vmatprep.subr.bf16.mxu0 0
        %4091 = vmatpush1.bf16.msra.mxu0 %v4024
        %4092 = vmatprep.subr.bf16.mxu0 0
        %4093 = vmatpush2.bf16.msra.mxu0 0
        %4094 = vmatprep.subr.bf16.mxu0 0
        %4095 = vmatpush2.bf16.msra.mxu0 0
        %4096 = vmatprep.subr.bf16.mxu0 0
        %4097 = vmatpush2.bf16.msra.mxu0 0
        %4098 = vmatprep.subr.bf16.mxu0 0
        %4099 = vmatpush2.bf16.msra.mxu0 0
        %4100 = vmatprep.subr.bf16.mxu0 0
        %4101 = vmatpush2.bf16.msra.mxu0 0
        %4102 = vmatprep.subr.bf16.mxu0 0
        %4103 = vmatpush2.bf16.msra.mxu0 0
        %4104 = vmatprep.subr.bf16.mxu0 0
        %4105 = vmatpush2.bf16.msra.mxu0 0
        %4106 = vmatprep.subr.bf16.mxu0 0
        %4107 = vmatpush2.bf16.msra.mxu0 0
        %4108 = vmatprep.mubr.bf16.mxu0 0
        %4109 = vmatmul.mubr.bf16.gmra.mxu0 %v4029
        %v4110 = vpop.f32.mrf.mxu0
        %v4111 = vadd.f32 0.0, %v4110
        %v4112 = vpop.f32.mrf.mxu0
        %v4113 = vpop.f32.mrf.mxu0
        %v4114 = vadd.f32 0.0, %v4113
        %v4115 = vpop.f32.mrf.mxu0
        %4116 = vmatprep.mubr.bf16.mxu0 0
        %4117 = vmatmul.mubr.bf16.gmra.mxu0 %v4032
        %v4118 = vpop.f32.mrf.mxu0
        %v4119 = vadd.f32 0.0, %v4118
        %v4120 = vpop.f32.mrf.mxu0
        %v4121 = vpop.f32.mrf.mxu0
        %v4122 = vadd.f32 0.0, %v4121
        %v4123 = vpop.f32.mrf.mxu0
        %4124 = vmatprep.mubr.bf16.mxu0 0
        %4125 = vmatmul.mubr.bf16.gmra.mxu0 %v4035
        %v4126 = vpop.f32.mrf.mxu0
        %v4127 = vadd.f32 0.0, %v4126
        %v4128 = vpop.f32.mrf.mxu0
        %v4129 = vpop.f32.mrf.mxu0
        %v4130 = vadd.f32 0.0, %v4129
        %v4131 = vpop.f32.mrf.mxu0
        %4132 = vmatprep.mubr.bf16.mxu0 0
        %4133 = vmatmul.mubr.bf16.gmra.mxu0 %v4038
        %v4134 = vpop.f32.mrf.mxu0
        %v4135 = vadd.f32 0.0, %v4134
        %v4136 = vpop.f32.mrf.mxu0
        %v4137 = vpop.f32.mrf.mxu0
        %v4138 = vadd.f32 0.0, %v4137
        %v4139 = vpop.f32.mrf.mxu0
        %4140 = vmatprep.mubr.bf16.mxu0 0
        %4141 = vmatmul.mubr.bf16.gmra.mxu0 %v4041
        %v4142 = vpop.f32.mrf.mxu0
        %v4143 = vadd.f32 0.0, %v4142
        %v4144 = vpop.f32.mrf.mxu0
        %v4145 = vpop.f32.mrf.mxu0
        %v4146 = vadd.f32 0.0, %v4145
        %v4147 = vpop.f32.mrf.mxu0
        %4148 = vmatprep.mubr.bf16.mxu0 0
        %4149 = vmatmul.mubr.bf16.gmra.mxu0 %v4044
        %v4150 = vpop.f32.mrf.mxu0
        %v4151 = vadd.f32 0.0, %v4150
        %v4152 = vpop.f32.mrf.mxu0
        %v4153 = vpop.f32.mrf.mxu0
        %v4154 = vadd.f32 0.0, %v4153
        %v4155 = vpop.f32.mrf.mxu0
        %4156 = vmatprep.mubr.bf16.mxu0 0
        %4157 = vmatmul.mubr.bf16.gmra.mxu0 %v4047
        %v4158 = vpop.f32.mrf.mxu0
        %v4159 = vadd.f32 0.0, %v4158
        %v4160 = vpop.f32.mrf.mxu0
        %v4161 = vpop.f32.mrf.mxu0
        %v4162 = vadd.f32 0.0, %v4161
        %v4163 = vpop.f32.mrf.mxu0
        %4164 = vmatprep.mubr.bf16.mxu0 0
        %4165 = vmatmul.mubr.bf16.gmra.mxu0 %v4050
        %v4166 = vpop.f32.mrf.mxu0
        %v4167 = vadd.f32 0.0, %v4166
        %v4168 = vpop.f32.mrf.mxu0
        %v4169 = vpop.f32.mrf.mxu0
        %v4170 = vadd.f32 0.0, %v4169
        %v4171 = vpop.f32.mrf.mxu0
        %4172 = vmatprep.mubr.bf16.mxu0 0
        %4173 = vmatmul.mubr.bf16.gmra.mxu0 %v4053
        %v4174 = vpop.f32.mrf.mxu0
        %v4175 = vadd.f32 0.0, %v4174
        %v4176 = vpop.f32.mrf.mxu0
        %v4177 = vpop.f32.mrf.mxu0
        %v4178 = vadd.f32 0.0, %v4177
        %v4179 = vpop.f32.mrf.mxu0
        %4180 = vmatprep.mubr.bf16.mxu0 0
        %4181 = vmatmul.mubr.bf16.gmra.mxu0 %v4056
        %v4182 = vpop.f32.mrf.mxu0
        %v4183 = vadd.f32 0.0, %v4182
        %v4184 = vpop.f32.mrf.mxu0
        %v4185 = vpop.f32.mrf.mxu0
        %v4186 = vadd.f32 0.0, %v4185
        %v4187 = vpop.f32.mrf.mxu0
        %4188 = vmatprep.mubr.bf16.mxu0 0
        %4189 = vmatmul.mubr.bf16.gmra.mxu0 %v4059
        %v4190 = vpop.f32.mrf.mxu0
        %v4191 = vadd.f32 0.0, %v4190
        %v4192 = vpop.f32.mrf.mxu0
        %v4193 = vpop.f32.mrf.mxu0
        %v4194 = vadd.f32 0.0, %v4193
        %v4195 = vpop.f32.mrf.mxu0
        %4196 = vmatprep.mubr.bf16.mxu0 0
        %4197 = vmatmul.mubr.bf16.gmra.mxu0 %v4062
        %v4198 = vpop.f32.mrf.mxu0
        %v4199 = vadd.f32 0.0, %v4198
        %v4200 = vpop.f32.mrf.mxu0
        %v4201 = vpop.f32.mrf.mxu0
        %v4202 = vadd.f32 0.0, %v4201
        %v4203 = vpop.f32.mrf.mxu0
        %4204 = vmatprep.mubr.bf16.mxu0 0
        %4205 = vmatmul.mubr.bf16.gmra.mxu0 %v4065
        %v4206 = vpop.f32.mrf.mxu0
        %v4207 = vadd.f32 0.0, %v4206
        %v4208 = vpop.f32.mrf.mxu0
        %v4209 = vpop.f32.mrf.mxu0
        %v4210 = vadd.f32 0.0, %v4209
        %v4211 = vpop.f32.mrf.mxu0
        %4212 = vmatprep.mubr.bf16.mxu0 0
        %4213 = vmatmul.mubr.bf16.gmra.mxu0 %v4068
        %v4214 = vpop.f32.mrf.mxu0
        %v4215 = vadd.f32 0.0, %v4214
        %v4216 = vpop.f32.mrf.mxu0
        %v4217 = vpop.f32.mrf.mxu0
        %v4218 = vadd.f32 0.0, %v4217
        %v4219 = vpop.f32.mrf.mxu0
        %4220 = vmatprep.mubr.bf16.mxu0 0
        %4221 = vmatmul.mubr.bf16.gmra.mxu0 %v4071
        %v4222 = vpop.f32.mrf.mxu0
        %v4223 = vadd.f32 0.0, %v4222
        %v4224 = vpop.f32.mrf.mxu0
        %v4225 = vpop.f32.mrf.mxu0
        %v4226 = vadd.f32 0.0, %v4225
        %v4227 = vpop.f32.mrf.mxu0
        %4228 = vmatprep.mubr.bf16.mxu0 0
        %4229 = vmatmul.mubr.bf16.gmra.mxu0 %v4074
        %v4230 = vpop.f32.mrf.mxu0
        %v4231 = vadd.f32 0.0, %v4230
        %v4232 = vpop.f32.mrf.mxu0
        %v4233 = vpop.f32.mrf.mxu0
        %v4234 = vadd.f32 0.0, %v4233
        %v4235 = vpop.f32.mrf.mxu0
        %4236 = vdwg.mxu0
        %v4237 = vadd.f32 %v3866, %v4111
        %v4238 = vadd.f32 %v3867, %v4114
        %v4239 = vadd.f32 %v3868, %v4119
        %v4240 = vadd.f32 %v3869, %v4122
        %v4241 = vadd.f32 %v3870, %v4127
        %v4242 = vadd.f32 %v3871, %v4130
        %v4243 = vadd.f32 %v3872, %v4135
        %v4244 = vadd.f32 %v3873, %v4138
        %v4245 = vadd.f32 %v3874, %v4143
        %v4246 = vadd.f32 %v3875, %v4146
        %v4247 = vadd.f32 %v3876, %v4151
        %v4248 = vadd.f32 %v3877, %v4154
        %v4249 = vadd.f32 %v3878, %v4159
        %v4250 = vadd.f32 %v3879, %v4162
        %v4251 = vadd.f32 %v3880, %v4167
        %v4252 = vadd.f32 %v3881, %v4170
        %v4253 = vadd.f32 %v3882, %v4175
        %v4254 = vadd.f32 %v3883, %v4178
        %v4255 = vadd.f32 %v3884, %v4183
        %v4256 = vadd.f32 %v3885, %v4186
        %v4257 = vadd.f32 %v3886, %v4191
        %v4258 = vadd.f32 %v3887, %v4194
        %v4259 = vadd.f32 %v3888, %v4199
        %v4260 = vadd.f32 %v3889, %v4202
        %v4261 = vadd.f32 %v3890, %v4207
        %v4262 = vadd.f32 %v3891, %v4210
        %v4263 = vadd.f32 %v3892, %v4215
        %v4264 = vadd.f32 %v3893, %v4218
        %v4265 = vadd.f32 %v3894, %v4223
        %v4266 = vadd.f32 %v3895, %v4226
        %v4267 = vadd.f32 %v3896, %v4231
        %v4268 = vadd.f32 %v3897, %v4234
        %v4269 = vld [vmem:[%s3898] sm:$0xf]
        %v4270 = vld [vmem:[%s3898 + $0x4] sm:$0xf]
        %v4271 = vld [vmem:[%s3898 + $0x8] sm:$0x1]
        %v4272 = vld [vmem:[%s3898 + $0xc] sm:$0xf]
        %v4273 = vld [vmem:[%s3898 + $0x10] sm:$0xf]
        %v4274 = vld [vmem:[%s3898 + $0x14] sm:$0x1]
        %v4275 = vld [vmem:[%s3898 + $0x18] sm:$0xf]
        %v4276 = vld [vmem:[%s3898 + $0x1c] sm:$0xf]
        %v4277 = vld [vmem:[%s3898 + $0x20] sm:$0x1]
        %v4278 = vld [vmem:[%s3898 + $0x24] sm:$0xf]
        %v4279 = vld [vmem:[%s3898 + $0x28] sm:$0xf]
        %v4280 = vld [vmem:[%s3898 + $0x2c] sm:$0x1]
        %v4281 = vld [vmem:[%s3898 + $0x30] sm:$0xf]
        %v4282 = vld [vmem:[%s3898 + $0x34] sm:$0xf]
        %v4283 = vld [vmem:[%s3898 + $0x38] sm:$0x1]
        %v4284 = vld [vmem:[%s3898 + $0x3c] sm:$0xf]
        %v4285 = vld [vmem:[%s3898 + $0x40] sm:$0xf]
        %v4286 = vld [vmem:[%s3898 + $0x44] sm:$0x1]
        %v4287 = vld [vmem:[%s3898 + $0x48] sm:$0xf]
        %v4288 = vld [vmem:[%s3898 + $0x4c] sm:$0xf]
        %v4289 = vld [vmem:[%s3898 + $0x50] sm:$0x1]
        %v4290 = vld [vmem:[%s3898 + $0x54] sm:$0xf]
        %v4291 = vld [vmem:[%s3898 + $0x58] sm:$0xf]
        %v4292 = vld [vmem:[%s3898 + $0x5c] sm:$0x1]
        %v4293 = vld [vmem:[%s3898 + $0x60] sm:$0xf]
        %v4294 = vld [vmem:[%s3898 + $0x64] sm:$0xf]
        %v4295 = vld [vmem:[%s3898 + $0x68] sm:$0x1]
        %v4296 = vld [vmem:[%s3898 + $0x6c] sm:$0xf]
        %v4297 = vld [vmem:[%s3898 + $0x70] sm:$0xf]
        %v4298 = vld [vmem:[%s3898 + $0x74] sm:$0x1]
        %v4299 = vld [vmem:[%s3898 + $0x78] sm:$0xf]
        %v4300 = vld [vmem:[%s3898 + $0x7c] sm:$0xf]
        %v4301 = vld [vmem:[%s3898 + $0x80] sm:$0x1]
        %v4302 = vld [vmem:[%s3898 + $0x84] sm:$0xf]
        %v4303 = vld [vmem:[%s3898 + $0x88] sm:$0xf]
        %v4304 = vld [vmem:[%s3898 + $0x8c] sm:$0x1]
        %v4305 = vld [vmem:[%s3898 + $0x90] sm:$0xf]
        %v4306 = vld [vmem:[%s3898 + $0x94] sm:$0xf]
        %v4307 = vld [vmem:[%s3898 + $0x98] sm:$0x1]
        %v4308 = vld [vmem:[%s3898 + $0x9c] sm:$0xf]
        %v4309 = vld [vmem:[%s3898 + $0xa0] sm:$0xf]
        %v4310 = vld [vmem:[%s3898 + $0xa4] sm:$0x1]
        %v4311 = vld [vmem:[%s3898 + $0xa8] sm:$0xf]
        %v4312 = vld [vmem:[%s3898 + $0xac] sm:$0xf]
        %v4313 = vld [vmem:[%s3898 + $0xb0] sm:$0x1]
        %v4314 = vld [vmem:[%s3898 + $0xb4] sm:$0xf]
        %v4315 = vld [vmem:[%s3898 + $0xb8] sm:$0xf]
        %v4316 = vld [vmem:[%s3898 + $0xbc] sm:$0x1]
        %v4318 = vshrl.u32 %v4269, 16
        %v4320 = vrot.slane %v4318, 4
        %v4321 = vshll.u32 %v4269, 16
        %v4323 = vrot.slane %v4321, 5
        %v4324 = vor.u32 %v4320, %v4323
        %v4325 = vrot.slane %v4324, 4
        %v4327 = vshll.u32 %v4270, 16
        %v4329 = vrot.slane %v4327, 5
        %v4330 = vsel %vm878, %v4325, %v4329
        %v4331 = vshrl.u32 %v4270, 16
        %v4333 = vrot.slane %v4331, 4
        %v4334 = vor.u32 %v4333, %v4329
        %v4335 = vrot.slane %v4334, 4
        %v4337 = vshll.u32 %v4271, 16
        %v4339 = vrot.slane %v4337, 5
        %v4340 = vsel %vm878, %v4335, %v4339
        %v4342 = vshrl.u32 %v4272, 16
        %v4344 = vrot.slane %v4342, 4
        %v4345 = vshll.u32 %v4272, 16
        %v4347 = vrot.slane %v4345, 5
        %v4348 = vor.u32 %v4344, %v4347
        %v4349 = vrot.slane %v4348, 4
        %v4351 = vshll.u32 %v4273, 16
        %v4353 = vrot.slane %v4351, 5
        %v4354 = vsel %vm878, %v4349, %v4353
        %v4355 = vshrl.u32 %v4273, 16
        %v4357 = vrot.slane %v4355, 4
        %v4358 = vor.u32 %v4357, %v4353
        %v4359 = vrot.slane %v4358, 4
        %v4361 = vshll.u32 %v4274, 16
        %v4363 = vrot.slane %v4361, 5
        %v4364 = vsel %vm878, %v4359, %v4363
        %v4366 = vshrl.u32 %v4275, 16
        %v4368 = vrot.slane %v4366, 4
        %v4369 = vshll.u32 %v4275, 16
        %v4371 = vrot.slane %v4369, 5
        %v4372 = vor.u32 %v4368, %v4371
        %v4373 = vrot.slane %v4372, 4
        %v4375 = vshll.u32 %v4276, 16
        %v4377 = vrot.slane %v4375, 5
        %v4378 = vsel %vm878, %v4373, %v4377
        %v4379 = vshrl.u32 %v4276, 16
        %v4381 = vrot.slane %v4379, 4
        %v4382 = vor.u32 %v4381, %v4377
        %v4383 = vrot.slane %v4382, 4
        %v4385 = vshll.u32 %v4277, 16
        %v4387 = vrot.slane %v4385, 5
        %v4388 = vsel %vm878, %v4383, %v4387
        %v4390 = vshrl.u32 %v4278, 16
        %v4392 = vrot.slane %v4390, 4
        %v4393 = vshll.u32 %v4278, 16
        %v4395 = vrot.slane %v4393, 5
        %v4396 = vor.u32 %v4392, %v4395
        %v4397 = vrot.slane %v4396, 4
        %v4399 = vshll.u32 %v4279, 16
        %v4401 = vrot.slane %v4399, 5
        %v4402 = vsel %vm878, %v4397, %v4401
        %v4403 = vshrl.u32 %v4279, 16
        %v4405 = vrot.slane %v4403, 4
        %v4406 = vor.u32 %v4405, %v4401
        %v4407 = vrot.slane %v4406, 4
        %v4409 = vshll.u32 %v4280, 16
        %v4411 = vrot.slane %v4409, 5
        %v4412 = vsel %vm878, %v4407, %v4411
        %v4414 = vshrl.u32 %v4281, 16
        %v4416 = vrot.slane %v4414, 4
        %v4417 = vshll.u32 %v4281, 16
        %v4419 = vrot.slane %v4417, 5
        %v4420 = vor.u32 %v4416, %v4419
        %v4421 = vrot.slane %v4420, 4
        %v4423 = vshll.u32 %v4282, 16
        %v4425 = vrot.slane %v4423, 5
        %v4426 = vsel %vm878, %v4421, %v4425
        %v4427 = vshrl.u32 %v4282, 16
        %v4429 = vrot.slane %v4427, 4
        %v4430 = vor.u32 %v4429, %v4425
        %v4431 = vrot.slane %v4430, 4
        %v4433 = vshll.u32 %v4283, 16
        %v4435 = vrot.slane %v4433, 5
        %v4436 = vsel %vm878, %v4431, %v4435
        %v4438 = vshrl.u32 %v4284, 16
        %v4440 = vrot.slane %v4438, 4
        %v4441 = vshll.u32 %v4284, 16
        %v4443 = vrot.slane %v4441, 5
        %v4444 = vor.u32 %v4440, %v4443
        %v4445 = vrot.slane %v4444, 4
        %v4447 = vshll.u32 %v4285, 16
        %v4449 = vrot.slane %v4447, 5
        %v4450 = vsel %vm878, %v4445, %v4449
        %v4451 = vshrl.u32 %v4285, 16
        %v4453 = vrot.slane %v4451, 4
        %v4454 = vor.u32 %v4453, %v4449
        %v4455 = vrot.slane %v4454, 4
        %v4457 = vshll.u32 %v4286, 16
        %v4459 = vrot.slane %v4457, 5
        %v4460 = vsel %vm878, %v4455, %v4459
        %v4462 = vshrl.u32 %v4287, 16
        %v4464 = vrot.slane %v4462, 4
        %v4465 = vshll.u32 %v4287, 16
        %v4467 = vrot.slane %v4465, 5
        %v4468 = vor.u32 %v4464, %v4467
        %v4469 = vrot.slane %v4468, 4
        %v4471 = vshll.u32 %v4288, 16
        %v4473 = vrot.slane %v4471, 5
        %v4474 = vsel %vm878, %v4469, %v4473
        %v4475 = vshrl.u32 %v4288, 16
        %v4477 = vrot.slane %v4475, 4
        %v4478 = vor.u32 %v4477, %v4473
        %v4479 = vrot.slane %v4478, 4
        %v4481 = vshll.u32 %v4289, 16
        %v4483 = vrot.slane %v4481, 5
        %v4484 = vsel %vm878, %v4479, %v4483
        %v4486 = vshrl.u32 %v4290, 16
        %v4488 = vrot.slane %v4486, 4
        %v4489 = vshll.u32 %v4290, 16
        %v4491 = vrot.slane %v4489, 5
        %v4492 = vor.u32 %v4488, %v4491
        %v4493 = vrot.slane %v4492, 4
        %v4495 = vshll.u32 %v4291, 16
        %v4497 = vrot.slane %v4495, 5
        %v4498 = vsel %vm878, %v4493, %v4497
        %v4499 = vshrl.u32 %v4291, 16
        %v4501 = vrot.slane %v4499, 4
        %v4502 = vor.u32 %v4501, %v4497
        %v4503 = vrot.slane %v4502, 4
        %v4505 = vshll.u32 %v4292, 16
        %v4507 = vrot.slane %v4505, 5
        %v4508 = vsel %vm878, %v4503, %v4507
        %v4510 = vshrl.u32 %v4293, 16
        %v4512 = vrot.slane %v4510, 4
        %v4513 = vshll.u32 %v4293, 16
        %v4515 = vrot.slane %v4513, 5
        %v4516 = vor.u32 %v4512, %v4515
        %v4517 = vrot.slane %v4516, 4
        %v4519 = vshll.u32 %v4294, 16
        %v4521 = vrot.slane %v4519, 5
        %v4522 = vsel %vm878, %v4517, %v4521
        %v4523 = vshrl.u32 %v4294, 16
        %v4525 = vrot.slane %v4523, 4
        %v4526 = vor.u32 %v4525, %v4521
        %v4527 = vrot.slane %v4526, 4
        %v4529 = vshll.u32 %v4295, 16
        %v4531 = vrot.slane %v4529, 5
        %v4532 = vsel %vm878, %v4527, %v4531
        %v4534 = vshrl.u32 %v4296, 16
        %v4536 = vrot.slane %v4534, 4
        %v4537 = vshll.u32 %v4296, 16
        %v4539 = vrot.slane %v4537, 5
        %v4540 = vor.u32 %v4536, %v4539
        %v4541 = vrot.slane %v4540, 4
        %v4543 = vshll.u32 %v4297, 16
        %v4545 = vrot.slane %v4543, 5
        %v4546 = vsel %vm878, %v4541, %v4545
        %v4547 = vshrl.u32 %v4297, 16
        %v4549 = vrot.slane %v4547, 4
        %v4550 = vor.u32 %v4549, %v4545
        %v4551 = vrot.slane %v4550, 4
        %v4553 = vshll.u32 %v4298, 16
        %v4555 = vrot.slane %v4553, 5
        %v4556 = vsel %vm878, %v4551, %v4555
        %v4558 = vshrl.u32 %v4299, 16
        %v4560 = vrot.slane %v4558, 4
        %v4561 = vshll.u32 %v4299, 16
        %v4563 = vrot.slane %v4561, 5
        %v4564 = vor.u32 %v4560, %v4563
        %v4565 = vrot.slane %v4564, 4
        %v4567 = vshll.u32 %v4300, 16
        %v4569 = vrot.slane %v4567, 5
        %v4570 = vsel %vm878, %v4565, %v4569
        %v4571 = vshrl.u32 %v4300, 16
        %v4573 = vrot.slane %v4571, 4
        %v4574 = vor.u32 %v4573, %v4569
        %v4575 = vrot.slane %v4574, 4
        %v4577 = vshll.u32 %v4301, 16
        %v4579 = vrot.slane %v4577, 5
        %v4580 = vsel %vm878, %v4575, %v4579
        %v4582 = vshrl.u32 %v4302, 16
        %v4584 = vrot.slane %v4582, 4
        %v4585 = vshll.u32 %v4302, 16
        %v4587 = vrot.slane %v4585, 5
        %v4588 = vor.u32 %v4584, %v4587
        %v4589 = vrot.slane %v4588, 4
        %v4591 = vshll.u32 %v4303, 16
        %v4593 = vrot.slane %v4591, 5
        %v4594 = vsel %vm878, %v4589, %v4593
        %v4595 = vshrl.u32 %v4303, 16
        %v4597 = vrot.slane %v4595, 4
        %v4598 = vor.u32 %v4597, %v4593
        %v4599 = vrot.slane %v4598, 4
        %v4601 = vshll.u32 %v4304, 16
        %v4603 = vrot.slane %v4601, 5
        %v4604 = vsel %vm878, %v4599, %v4603
        %v4606 = vshrl.u32 %v4305, 16
        %v4608 = vrot.slane %v4606, 4
        %v4609 = vshll.u32 %v4305, 16
        %v4611 = vrot.slane %v4609, 5
        %v4612 = vor.u32 %v4608, %v4611
        %v4613 = vrot.slane %v4612, 4
        %v4615 = vshll.u32 %v4306, 16
        %v4617 = vrot.slane %v4615, 5
        %v4618 = vsel %vm878, %v4613, %v4617
        %v4619 = vshrl.u32 %v4306, 16
        %v4621 = vrot.slane %v4619, 4
        %v4622 = vor.u32 %v4621, %v4617
        %v4623 = vrot.slane %v4622, 4
        %v4625 = vshll.u32 %v4307, 16
        %v4627 = vrot.slane %v4625, 5
        %v4628 = vsel %vm878, %v4623, %v4627
        %v4630 = vshrl.u32 %v4308, 16
        %v4632 = vrot.slane %v4630, 4
        %v4633 = vshll.u32 %v4308, 16
        %v4635 = vrot.slane %v4633, 5
        %v4636 = vor.u32 %v4632, %v4635
        %v4637 = vrot.slane %v4636, 4
        %v4639 = vshll.u32 %v4309, 16
        %v4641 = vrot.slane %v4639, 5
        %v4642 = vsel %vm878, %v4637, %v4641
        %v4643 = vshrl.u32 %v4309, 16
        %v4645 = vrot.slane %v4643, 4
        %v4646 = vor.u32 %v4645, %v4641
        %v4647 = vrot.slane %v4646, 4
        %v4649 = vshll.u32 %v4310, 16
        %v4651 = vrot.slane %v4649, 5
        %v4652 = vsel %vm878, %v4647, %v4651
        %v4654 = vshrl.u32 %v4311, 16
        %v4656 = vrot.slane %v4654, 4
        %v4657 = vshll.u32 %v4311, 16
        %v4659 = vrot.slane %v4657, 5
        %v4660 = vor.u32 %v4656, %v4659
        %v4661 = vrot.slane %v4660, 4
        %v4663 = vshll.u32 %v4312, 16
        %v4665 = vrot.slane %v4663, 5
        %v4666 = vsel %vm878, %v4661, %v4665
        %v4667 = vshrl.u32 %v4312, 16
        %v4669 = vrot.slane %v4667, 4
        %v4670 = vor.u32 %v4669, %v4665
        %v4671 = vrot.slane %v4670, 4
        %v4673 = vshll.u32 %v4313, 16
        %v4675 = vrot.slane %v4673, 5
        %v4676 = vsel %vm878, %v4671, %v4675
        %v4678 = vshrl.u32 %v4314, 16
        %v4680 = vrot.slane %v4678, 4
        %v4681 = vshll.u32 %v4314, 16
        %v4683 = vrot.slane %v4681, 5
        %v4684 = vor.u32 %v4680, %v4683
        %v4685 = vrot.slane %v4684, 4
        %v4687 = vshll.u32 %v4315, 16
        %v4689 = vrot.slane %v4687, 5
        %v4690 = vsel %vm878, %v4685, %v4689
        %v4691 = vshrl.u32 %v4315, 16
        %v4693 = vrot.slane %v4691, 4
        %v4694 = vor.u32 %v4693, %v4689
        %v4695 = vrot.slane %v4694, 4
        %v4697 = vshll.u32 %v4316, 16
        %v4699 = vrot.slane %v4697, 5
        %v4700 = vsel %vm878, %v4695, %v4699
        %s4701 = scalar_lea.vmem %s1, 112
        %v4702 = vld [vmem:[%s4701] sm:$0xf]
        %v4703 = vld [vmem:[%s4701 + $0x4] sm:$0xf]
        %v4704 = vld [vmem:[%s4701 + $0x8] sm:$0xf]
        %v4705 = vld [vmem:[%s4701 + $0xc] sm:$0xf]
        %v4706 = vunpack.c.l.b16 %v4330
        %v4707 = vunpack.c.l.b16 %v4340
        %v4708 = vunpack.c.l.b16 %v4354
        %v4709 = vunpack.c.l.b16 %v4364
        %v4710 = vunpack.c.l.b16 %v4378
        %v4711 = vunpack.c.l.b16 %v4388
        %v4712 = vunpack.c.l.b16 %v4402
        %v4713 = vunpack.c.l.b16 %v4412
        %v4714 = vunpack.c.l.b16 %v4426
        %v4715 = vunpack.c.l.b16 %v4436
        %v4716 = vunpack.c.l.b16 %v4450
        %v4717 = vunpack.c.l.b16 %v4460
        %v4718 = vunpack.c.l.b16 %v4474
        %v4719 = vunpack.c.l.b16 %v4484
        %v4720 = vunpack.c.l.b16 %v4498
        %v4721 = vunpack.c.l.b16 %v4508
        %v4722 = vunpack.c.l.b16 %v4522
        %v4723 = vunpack.c.l.b16 %v4532
        %v4724 = vunpack.c.l.b16 %v4546
        %v4725 = vunpack.c.l.b16 %v4556
        %v4726 = vunpack.c.l.b16 %v4570
        %v4727 = vunpack.c.l.b16 %v4580
        %v4728 = vunpack.c.l.b16 %v4594
        %v4729 = vunpack.c.l.b16 %v4604
        %v4730 = vunpack.c.l.b16 %v4618
        %v4731 = vunpack.c.l.b16 %v4628
        %v4732 = vunpack.c.l.b16 %v4642
        %v4733 = vunpack.c.l.b16 %v4652
        %v4734 = vunpack.c.l.b16 %v4666
        %v4735 = vunpack.c.l.b16 %v4676
        %v4736 = vunpack.c.l.b16 %v4690
        %v4737 = vunpack.c.l.b16 %v4700
        %v4738 = vpack.c.b16 %v4707, %v4706
        %v4739 = vpack.c.b16 %v4709, %v4708
        %v4740 = vpack.c.b16 %v4711, %v4710
        %v4741 = vpack.c.b16 %v4713, %v4712
        %v4742 = vpack.c.b16 %v4715, %v4714
        %v4743 = vpack.c.b16 %v4717, %v4716
        %v4744 = vpack.c.b16 %v4719, %v4718
        %v4745 = vpack.c.b16 %v4721, %v4720
        %v4746 = vpack.c.b16 %v4723, %v4722
        %v4747 = vpack.c.b16 %v4725, %v4724
        %v4748 = vpack.c.b16 %v4727, %v4726
        %v4749 = vpack.c.b16 %v4729, %v4728
        %v4750 = vpack.c.b16 %v4731, %v4730
        %v4751 = vpack.c.b16 %v4733, %v4732
        %v4752 = vpack.c.b16 %v4735, %v4734
        %v4753 = vpack.c.b16 %v4737, %v4736
        %v4758 = vunpack.c.l.b16 %v4702
        %v4759 = vunpack.c.l.b16 %v4703
        %v4760 = vunpack.c.l.b16 %v4704
        %v4761 = vunpack.c.l.b16 %v4705
        %v4762 = vpack.c.b16 %v4759, %v4758
        %v4763 = vpack.c.b16 %v4761, %v4760
        %v4767 = vsel %vm1328, %v4738, 0
        %v4770 = vsel %vm1328, %v4739, 0
        %v4773 = vsel %vm1328, %v4740, 0
        %v4776 = vsel %vm1328, %v4741, 0
        %v4779 = vsel %vm1328, %v4742, 0
        %v4782 = vsel %vm1328, %v4743, 0
        %v4785 = vsel %vm1328, %v4744, 0
        %v4788 = vsel %vm1328, %v4745, 0
        %v4791 = vsel %vm1328, %v4746, 0
        %v4794 = vsel %vm1328, %v4747, 0
        %v4797 = vsel %vm1328, %v4748, 0
        %v4800 = vsel %vm1328, %v4749, 0
        %v4803 = vsel %vm1328, %v4750, 0
        %v4806 = vsel %vm1328, %v4751, 0
        %v4809 = vsel %vm1328, %v4752, 0
        %v4812 = vsel %vm1328, %v4753, 0
        %4814 = vmatprep.subr.bf16.mxu0 0
        %4815 = vmatpush1.bf16.msra.mxu0 0
        %4816 = vmatprep.subr.bf16.mxu0 0
        %4817 = vmatpush1.bf16.msra.mxu0 0
        %4818 = vmatprep.subr.bf16.mxu0 0
        %4819 = vmatpush1.bf16.msra.mxu0 0
        %4820 = vmatprep.subr.bf16.mxu0 0
        %4821 = vmatpush1.bf16.msra.mxu0 0
        %4822 = vmatprep.subr.bf16.mxu0 0
        %4823 = vmatpush1.bf16.msra.mxu0 0
        %4824 = vmatprep.subr.bf16.mxu0 0
        %4825 = vmatpush1.bf16.msra.mxu0 0
        %4826 = vmatprep.subr.bf16.mxu0 0
        %4827 = vmatpush1.bf16.msra.mxu0 %v4763
        %4828 = vmatprep.subr.bf16.mxu0 0
        %4829 = vmatpush1.bf16.msra.mxu0 %v4762
        %4830 = vmatprep.subr.bf16.mxu0 0
        %4831 = vmatpush2.bf16.msra.mxu0 0
        %4832 = vmatprep.subr.bf16.mxu0 0
        %4833 = vmatpush2.bf16.msra.mxu0 0
        %4834 = vmatprep.subr.bf16.mxu0 0
        %4835 = vmatpush2.bf16.msra.mxu0 0
        %4836 = vmatprep.subr.bf16.mxu0 0
        %4837 = vmatpush2.bf16.msra.mxu0 0
        %4838 = vmatprep.subr.bf16.mxu0 0
        %4839 = vmatpush2.bf16.msra.mxu0 0
        %4840 = vmatprep.subr.bf16.mxu0 0
        %4841 = vmatpush2.bf16.msra.mxu0 0
        %4842 = vmatprep.subr.bf16.mxu0 0
        %4843 = vmatpush2.bf16.msra.mxu0 0
        %4844 = vmatprep.subr.bf16.mxu0 0
        %4845 = vmatpush2.bf16.msra.mxu0 0
        %4846 = vmatprep.mubr.bf16.mxu0 0
        %4847 = vmatmul.mubr.bf16.gmra.mxu0 %v4767
        %v4848 = vpop.f32.mrf.mxu0
        %v4849 = vadd.f32 0.0, %v4848
        %v4850 = vpop.f32.mrf.mxu0
        %v4851 = vpop.f32.mrf.mxu0
        %v4852 = vadd.f32 0.0, %v4851
        %v4853 = vpop.f32.mrf.mxu0
        %4854 = vmatprep.mubr.bf16.mxu0 0
        %4855 = vmatmul.mubr.bf16.gmra.mxu0 %v4770
        %v4856 = vpop.f32.mrf.mxu0
        %v4857 = vadd.f32 0.0, %v4856
        %v4858 = vpop.f32.mrf.mxu0
        %v4859 = vpop.f32.mrf.mxu0
        %v4860 = vadd.f32 0.0, %v4859
        %v4861 = vpop.f32.mrf.mxu0
        %4862 = vmatprep.mubr.bf16.mxu0 0
        %4863 = vmatmul.mubr.bf16.gmra.mxu0 %v4773
        %v4864 = vpop.f32.mrf.mxu0
        %v4865 = vadd.f32 0.0, %v4864
        %v4866 = vpop.f32.mrf.mxu0
        %v4867 = vpop.f32.mrf.mxu0
        %v4868 = vadd.f32 0.0, %v4867
        %v4869 = vpop.f32.mrf.mxu0
        %4870 = vmatprep.mubr.bf16.mxu0 0
        %4871 = vmatmul.mubr.bf16.gmra.mxu0 %v4776
        %v4872 = vpop.f32.mrf.mxu0
        %v4873 = vadd.f32 0.0, %v4872
        %v4874 = vpop.f32.mrf.mxu0
        %v4875 = vpop.f32.mrf.mxu0
        %v4876 = vadd.f32 0.0, %v4875
        %v4877 = vpop.f32.mrf.mxu0
        %4878 = vmatprep.mubr.bf16.mxu0 0
        %4879 = vmatmul.mubr.bf16.gmra.mxu0 %v4779
        %v4880 = vpop.f32.mrf.mxu0
        %v4881 = vadd.f32 0.0, %v4880
        %v4882 = vpop.f32.mrf.mxu0
        %v4883 = vpop.f32.mrf.mxu0
        %v4884 = vadd.f32 0.0, %v4883
        %v4885 = vpop.f32.mrf.mxu0
        %4886 = vmatprep.mubr.bf16.mxu0 0
        %4887 = vmatmul.mubr.bf16.gmra.mxu0 %v4782
        %v4888 = vpop.f32.mrf.mxu0
        %v4889 = vadd.f32 0.0, %v4888
        %v4890 = vpop.f32.mrf.mxu0
        %v4891 = vpop.f32.mrf.mxu0
        %v4892 = vadd.f32 0.0, %v4891
        %v4893 = vpop.f32.mrf.mxu0
        %4894 = vmatprep.mubr.bf16.mxu0 0
        %4895 = vmatmul.mubr.bf16.gmra.mxu0 %v4785
        %v4896 = vpop.f32.mrf.mxu0
        %v4897 = vadd.f32 0.0, %v4896
        %v4898 = vpop.f32.mrf.mxu0
        %v4899 = vpop.f32.mrf.mxu0
        %v4900 = vadd.f32 0.0, %v4899
        %v4901 = vpop.f32.mrf.mxu0
        %4902 = vmatprep.mubr.bf16.mxu0 0
        %4903 = vmatmul.mubr.bf16.gmra.mxu0 %v4788
        %v4904 = vpop.f32.mrf.mxu0
        %v4905 = vadd.f32 0.0, %v4904
        %v4906 = vpop.f32.mrf.mxu0
        %v4907 = vpop.f32.mrf.mxu0
        %v4908 = vadd.f32 0.0, %v4907
        %v4909 = vpop.f32.mrf.mxu0
        %4910 = vmatprep.mubr.bf16.mxu0 0
        %4911 = vmatmul.mubr.bf16.gmra.mxu0 %v4791
        %v4912 = vpop.f32.mrf.mxu0
        %v4913 = vadd.f32 0.0, %v4912
        %v4914 = vpop.f32.mrf.mxu0
        %v4915 = vpop.f32.mrf.mxu0
        %v4916 = vadd.f32 0.0, %v4915
        %v4917 = vpop.f32.mrf.mxu0
        %4918 = vmatprep.mubr.bf16.mxu0 0
        %4919 = vmatmul.mubr.bf16.gmra.mxu0 %v4794
        %v4920 = vpop.f32.mrf.mxu0
        %v4921 = vadd.f32 0.0, %v4920
        %v4922 = vpop.f32.mrf.mxu0
        %v4923 = vpop.f32.mrf.mxu0
        %v4924 = vadd.f32 0.0, %v4923
        %v4925 = vpop.f32.mrf.mxu0
        %4926 = vmatprep.mubr.bf16.mxu0 0
        %4927 = vmatmul.mubr.bf16.gmra.mxu0 %v4797
        %v4928 = vpop.f32.mrf.mxu0
        %v4929 = vadd.f32 0.0, %v4928
        %v4930 = vpop.f32.mrf.mxu0
        %v4931 = vpop.f32.mrf.mxu0
        %v4932 = vadd.f32 0.0, %v4931
        %v4933 = vpop.f32.mrf.mxu0
        %4934 = vmatprep.mubr.bf16.mxu0 0
        %4935 = vmatmul.mubr.bf16.gmra.mxu0 %v4800
        %v4936 = vpop.f32.mrf.mxu0
        %v4937 = vadd.f32 0.0, %v4936
        %v4938 = vpop.f32.mrf.mxu0
        %v4939 = vpop.f32.mrf.mxu0
        %v4940 = vadd.f32 0.0, %v4939
        %v4941 = vpop.f32.mrf.mxu0
        %4942 = vmatprep.mubr.bf16.mxu0 0
        %4943 = vmatmul.mubr.bf16.gmra.mxu0 %v4803
        %v4944 = vpop.f32.mrf.mxu0
        %v4945 = vadd.f32 0.0, %v4944
        %v4946 = vpop.f32.mrf.mxu0
        %v4947 = vpop.f32.mrf.mxu0
        %v4948 = vadd.f32 0.0, %v4947
        %v4949 = vpop.f32.mrf.mxu0
        %4950 = vmatprep.mubr.bf16.mxu0 0
        %4951 = vmatmul.mubr.bf16.gmra.mxu0 %v4806
        %v4952 = vpop.f32.mrf.mxu0
        %v4953 = vadd.f32 0.0, %v4952
        %v4954 = vpop.f32.mrf.mxu0
        %v4955 = vpop.f32.mrf.mxu0
        %v4956 = vadd.f32 0.0, %v4955
        %v4957 = vpop.f32.mrf.mxu0
        %4958 = vmatprep.mubr.bf16.mxu0 0
        %4959 = vmatmul.mubr.bf16.gmra.mxu0 %v4809
        %v4960 = vpop.f32.mrf.mxu0
        %v4961 = vadd.f32 0.0, %v4960
        %v4962 = vpop.f32.mrf.mxu0
        %v4963 = vpop.f32.mrf.mxu0
        %v4964 = vadd.f32 0.0, %v4963
        %v4965 = vpop.f32.mrf.mxu0
        %4966 = vmatprep.mubr.bf16.mxu0 0
        %4967 = vmatmul.mubr.bf16.gmra.mxu0 %v4812
        %v4968 = vpop.f32.mrf.mxu0
        %v4969 = vadd.f32 0.0, %v4968
        %v4970 = vpop.f32.mrf.mxu0
        %v4971 = vpop.f32.mrf.mxu0
        %v4972 = vadd.f32 0.0, %v4971
        %v4973 = vpop.f32.mrf.mxu0
        %4974 = vdwg.mxu0
        %v4975 = vadd.f32 %v4237, %v4849
        %v4976 = vadd.f32 %v4238, %v4852
        %v4977 = vadd.f32 %v4239, %v4857
        %v4978 = vadd.f32 %v4240, %v4860
        %v4979 = vadd.f32 %v4241, %v4865
        %v4980 = vadd.f32 %v4242, %v4868
        %v4981 = vadd.f32 %v4243, %v4873
        %v4982 = vadd.f32 %v4244, %v4876
        %v4983 = vadd.f32 %v4245, %v4881
        %v4984 = vadd.f32 %v4246, %v4884
        %v4985 = vadd.f32 %v4247, %v4889
        %v4986 = vadd.f32 %v4248, %v4892
        %v4987 = vadd.f32 %v4249, %v4897
        %v4988 = vadd.f32 %v4250, %v4900
        %v4989 = vadd.f32 %v4251, %v4905
        %v4990 = vadd.f32 %v4252, %v4908
        %v4991 = vadd.f32 %v4253, %v4913
        %v4992 = vadd.f32 %v4254, %v4916
        %v4993 = vadd.f32 %v4255, %v4921
        %v4994 = vadd.f32 %v4256, %v4924
        %v4995 = vadd.f32 %v4257, %v4929
        %v4996 = vadd.f32 %v4258, %v4932
        %v4997 = vadd.f32 %v4259, %v4937
        %v4998 = vadd.f32 %v4260, %v4940
        %v4999 = vadd.f32 %v4261, %v4945
        %v5000 = vadd.f32 %v4262, %v4948
        %v5001 = vadd.f32 %v4263, %v4953
        %v5002 = vadd.f32 %v4264, %v4956
        %v5003 = vadd.f32 %v4265, %v4961
        %v5004 = vadd.f32 %v4266, %v4964
        %v5005 = vadd.f32 %v4267, %v4969
        %v5006 = vadd.f32 %v4268, %v4972
        %v5007 = vld [vmem:[%s3898] sm:$0xe]
        %v5008 = vld [vmem:[%s3898 + $0xc] sm:$0xe]
        %v5009 = vld [vmem:[%s3898 + $0x18] sm:$0xe]
        %v5010 = vld [vmem:[%s3898 + $0x24] sm:$0xe]
        %v5011 = vld [vmem:[%s3898 + $0x30] sm:$0xe]
        %v5012 = vld [vmem:[%s3898 + $0x3c] sm:$0xe]
        %v5013 = vld [vmem:[%s3898 + $0x48] sm:$0xe]
        %v5014 = vld [vmem:[%s3898 + $0x54] sm:$0xe]
        %v5015 = vld [vmem:[%s3898 + $0x60] sm:$0xe]
        %v5016 = vld [vmem:[%s3898 + $0x6c] sm:$0xe]
        %v5017 = vld [vmem:[%s3898 + $0x78] sm:$0xe]
        %v5018 = vld [vmem:[%s3898 + $0x84] sm:$0xe]
        %v5019 = vld [vmem:[%s3898 + $0x90] sm:$0xe]
        %v5020 = vld [vmem:[%s3898 + $0x9c] sm:$0xe]
        %v5021 = vld [vmem:[%s3898 + $0xa8] sm:$0xe]
        %v5022 = vld [vmem:[%s3898 + $0xb4] sm:$0xe]
        %v5071 = vrot.slane %v5007, 5
        %v5072 = vrot.slane %v5071, 4
        %v5073 = vrot.slane %v4270, 5
        %v5074 = vsel %vm1889, %v5072, %v5073
        %v5075 = vrot.slane %v5073, 4
        %v5076 = vrot.slane %v4271, 5
        %v5077 = vsel %vm1889, %v5075, %v5076
        %v5078 = vrot.slane %v5008, 5
        %v5079 = vrot.slane %v5078, 4
        %v5080 = vrot.slane %v4273, 5
        %v5081 = vsel %vm1889, %v5079, %v5080
        %v5082 = vrot.slane %v5080, 4
        %v5083 = vrot.slane %v4274, 5
        %v5084 = vsel %vm1889, %v5082, %v5083
        %v5085 = vrot.slane %v5009, 5
        %v5086 = vrot.slane %v5085, 4
        %v5087 = vrot.slane %v4276, 5
        %v5088 = vsel %vm1889, %v5086, %v5087
        %v5089 = vrot.slane %v5087, 4
        %v5090 = vrot.slane %v4277, 5
        %v5091 = vsel %vm1889, %v5089, %v5090
        %v5092 = vrot.slane %v5010, 5
        %v5093 = vrot.slane %v5092, 4
        %v5094 = vrot.slane %v4279, 5
        %v5095 = vsel %vm1889, %v5093, %v5094
        %v5096 = vrot.slane %v5094, 4
        %v5097 = vrot.slane %v4280, 5
        %v5098 = vsel %vm1889, %v5096, %v5097
        %v5099 = vrot.slane %v5011, 5
        %v5100 = vrot.slane %v5099, 4
        %v5101 = vrot.slane %v4282, 5
        %v5102 = vsel %vm1889, %v5100, %v5101
        %v5103 = vrot.slane %v5101, 4
        %v5104 = vrot.slane %v4283, 5
        %v5105 = vsel %vm1889, %v5103, %v5104
        %v5106 = vrot.slane %v5012, 5
        %v5107 = vrot.slane %v5106, 4
        %v5108 = vrot.slane %v4285, 5
        %v5109 = vsel %vm1889, %v5107, %v5108
        %v5110 = vrot.slane %v5108, 4
        %v5111 = vrot.slane %v4286, 5
        %v5112 = vsel %vm1889, %v5110, %v5111
        %v5113 = vrot.slane %v5013, 5
        %v5114 = vrot.slane %v5113, 4
        %v5115 = vrot.slane %v4288, 5
        %v5116 = vsel %vm1889, %v5114, %v5115
        %v5117 = vrot.slane %v5115, 4
        %v5118 = vrot.slane %v4289, 5
        %v5119 = vsel %vm1889, %v5117, %v5118
        %v5120 = vrot.slane %v5014, 5
        %v5121 = vrot.slane %v5120, 4
        %v5122 = vrot.slane %v4291, 5
        %v5123 = vsel %vm1889, %v5121, %v5122
        %v5124 = vrot.slane %v5122, 4
        %v5125 = vrot.slane %v4292, 5
        %v5126 = vsel %vm1889, %v5124, %v5125
        %v5127 = vrot.slane %v5015, 5
        %v5128 = vrot.slane %v5127, 4
        %v5129 = vrot.slane %v4294, 5
        %v5130 = vsel %vm1889, %v5128, %v5129
        %v5131 = vrot.slane %v5129, 4
        %v5132 = vrot.slane %v4295, 5
        %v5133 = vsel %vm1889, %v5131, %v5132
        %v5134 = vrot.slane %v5016, 5
        %v5135 = vrot.slane %v5134, 4
        %v5136 = vrot.slane %v4297, 5
        %v5137 = vsel %vm1889, %v5135, %v5136
        %v5138 = vrot.slane %v5136, 4
        %v5139 = vrot.slane %v4298, 5
        %v5140 = vsel %vm1889, %v5138, %v5139
        %v5141 = vrot.slane %v5017, 5
        %v5142 = vrot.slane %v5141, 4
        %v5143 = vrot.slane %v4300, 5
        %v5144 = vsel %vm1889, %v5142, %v5143
        %v5145 = vrot.slane %v5143, 4
        %v5146 = vrot.slane %v4301, 5
        %v5147 = vsel %vm1889, %v5145, %v5146
        %v5148 = vrot.slane %v5018, 5
        %v5149 = vrot.slane %v5148, 4
        %v5150 = vrot.slane %v4303, 5
        %v5151 = vsel %vm1889, %v5149, %v5150
        %v5152 = vrot.slane %v5150, 4
        %v5153 = vrot.slane %v4304, 5
        %v5154 = vsel %vm1889, %v5152, %v5153
        %v5155 = vrot.slane %v5019, 5
        %v5156 = vrot.slane %v5155, 4
        %v5157 = vrot.slane %v4306, 5
        %v5158 = vsel %vm1889, %v5156, %v5157
        %v5159 = vrot.slane %v5157, 4
        %v5160 = vrot.slane %v4307, 5
        %v5161 = vsel %vm1889, %v5159, %v5160
        %v5162 = vrot.slane %v5020, 5
        %v5163 = vrot.slane %v5162, 4
        %v5164 = vrot.slane %v4309, 5
        %v5165 = vsel %vm1889, %v5163, %v5164
        %v5166 = vrot.slane %v5164, 4
        %v5167 = vrot.slane %v4310, 5
        %v5168 = vsel %vm1889, %v5166, %v5167
        %v5169 = vrot.slane %v5021, 5
        %v5170 = vrot.slane %v5169, 4
        %v5171 = vrot.slane %v4312, 5
        %v5172 = vsel %vm1889, %v5170, %v5171
        %v5173 = vrot.slane %v5171, 4
        %v5174 = vrot.slane %v4313, 5
        %v5175 = vsel %vm1889, %v5173, %v5174
        %v5176 = vrot.slane %v5022, 5
        %v5177 = vrot.slane %v5176, 4
        %v5178 = vrot.slane %v4315, 5
        %v5179 = vsel %vm1889, %v5177, %v5178
        %v5180 = vrot.slane %v5178, 4
        %v5181 = vrot.slane %v4316, 5
        %v5182 = vsel %vm1889, %v5180, %v5181
        %s5183 = scalar_lea.vmem %s1, 128
        %v5184 = vld [vmem:[%s5183] sm:$0xf]
        %v5185 = vld [vmem:[%s5183 + $0x4] sm:$0xf]
        %v5186 = vld [vmem:[%s5183 + $0x8] sm:$0xf]
        %v5187 = vld [vmem:[%s5183 + $0xc] sm:$0xf]
        %v5188 = vunpack.c.l.b16 %v5074
        %v5189 = vunpack.c.l.b16 %v5077
        %v5190 = vunpack.c.l.b16 %v5081
        %v5191 = vunpack.c.l.b16 %v5084
        %v5192 = vunpack.c.l.b16 %v5088
        %v5193 = vunpack.c.l.b16 %v5091
        %v5194 = vunpack.c.l.b16 %v5095
        %v5195 = vunpack.c.l.b16 %v5098
        %v5196 = vunpack.c.l.b16 %v5102
        %v5197 = vunpack.c.l.b16 %v5105
        %v5198 = vunpack.c.l.b16 %v5109
        %v5199 = vunpack.c.l.b16 %v5112
        %v5200 = vunpack.c.l.b16 %v5116
        %v5201 = vunpack.c.l.b16 %v5119
        %v5202 = vunpack.c.l.b16 %v5123
        %v5203 = vunpack.c.l.b16 %v5126
        %v5204 = vunpack.c.l.b16 %v5130
        %v5205 = vunpack.c.l.b16 %v5133
        %v5206 = vunpack.c.l.b16 %v5137
        %v5207 = vunpack.c.l.b16 %v5140
        %v5208 = vunpack.c.l.b16 %v5144
        %v5209 = vunpack.c.l.b16 %v5147
        %v5210 = vunpack.c.l.b16 %v5151
        %v5211 = vunpack.c.l.b16 %v5154
        %v5212 = vunpack.c.l.b16 %v5158
        %v5213 = vunpack.c.l.b16 %v5161
        %v5214 = vunpack.c.l.b16 %v5165
        %v5215 = vunpack.c.l.b16 %v5168
        %v5216 = vunpack.c.l.b16 %v5172
        %v5217 = vunpack.c.l.b16 %v5175
        %v5218 = vunpack.c.l.b16 %v5179
        %v5219 = vunpack.c.l.b16 %v5182
        %v5220 = vpack.c.b16 %v5189, %v5188
        %v5221 = vpack.c.b16 %v5191, %v5190
        %v5222 = vpack.c.b16 %v5193, %v5192
        %v5223 = vpack.c.b16 %v5195, %v5194
        %v5224 = vpack.c.b16 %v5197, %v5196
        %v5225 = vpack.c.b16 %v5199, %v5198
        %v5226 = vpack.c.b16 %v5201, %v5200
        %v5227 = vpack.c.b16 %v5203, %v5202
        %v5228 = vpack.c.b16 %v5205, %v5204
        %v5229 = vpack.c.b16 %v5207, %v5206
        %v5230 = vpack.c.b16 %v5209, %v5208
        %v5231 = vpack.c.b16 %v5211, %v5210
        %v5232 = vpack.c.b16 %v5213, %v5212
        %v5233 = vpack.c.b16 %v5215, %v5214
        %v5234 = vpack.c.b16 %v5217, %v5216
        %v5235 = vpack.c.b16 %v5219, %v5218
        %v5240 = vunpack.c.l.b16 %v5184
        %v5241 = vunpack.c.l.b16 %v5185
        %v5242 = vunpack.c.l.b16 %v5186
        %v5243 = vunpack.c.l.b16 %v5187
        %v5244 = vpack.c.b16 %v5241, %v5240
        %v5245 = vpack.c.b16 %v5243, %v5242
        %v5249 = vsel %vm1328, %v5220, 0
        %v5252 = vsel %vm1328, %v5221, 0
        %v5255 = vsel %vm1328, %v5222, 0
        %v5258 = vsel %vm1328, %v5223, 0
        %v5261 = vsel %vm1328, %v5224, 0
        %v5264 = vsel %vm1328, %v5225, 0
        %v5267 = vsel %vm1328, %v5226, 0
        %v5270 = vsel %vm1328, %v5227, 0
        %v5273 = vsel %vm1328, %v5228, 0
        %v5276 = vsel %vm1328, %v5229, 0
        %v5279 = vsel %vm1328, %v5230, 0
        %v5282 = vsel %vm1328, %v5231, 0
        %v5285 = vsel %vm1328, %v5232, 0
        %v5288 = vsel %vm1328, %v5233, 0
        %v5291 = vsel %vm1328, %v5234, 0
        %v5294 = vsel %vm1328, %v5235, 0
        %5296 = vmatprep.subr.bf16.mxu0 0
        %5297 = vmatpush1.bf16.msra.mxu0 0
        %5298 = vmatprep.subr.bf16.mxu0 0
        %5299 = vmatpush1.bf16.msra.mxu0 0
        %5300 = vmatprep.subr.bf16.mxu0 0
        %5301 = vmatpush1.bf16.msra.mxu0 0
        %5302 = vmatprep.subr.bf16.mxu0 0
        %5303 = vmatpush1.bf16.msra.mxu0 0
        %5304 = vmatprep.subr.bf16.mxu0 0
        %5305 = vmatpush1.bf16.msra.mxu0 0
        %5306 = vmatprep.subr.bf16.mxu0 0
        %5307 = vmatpush1.bf16.msra.mxu0 0
        %5308 = vmatprep.subr.bf16.mxu0 0
        %5309 = vmatpush1.bf16.msra.mxu0 %v5245
        %5310 = vmatprep.subr.bf16.mxu0 0
        %5311 = vmatpush1.bf16.msra.mxu0 %v5244
        %5312 = vmatprep.subr.bf16.mxu0 0
        %5313 = vmatpush2.bf16.msra.mxu0 0
        %5314 = vmatprep.subr.bf16.mxu0 0
        %5315 = vmatpush2.bf16.msra.mxu0 0
        %5316 = vmatprep.subr.bf16.mxu0 0
        %5317 = vmatpush2.bf16.msra.mxu0 0
        %5318 = vmatprep.subr.bf16.mxu0 0
        %5319 = vmatpush2.bf16.msra.mxu0 0
        %5320 = vmatprep.subr.bf16.mxu0 0
        %5321 = vmatpush2.bf16.msra.mxu0 0
        %5322 = vmatprep.subr.bf16.mxu0 0
        %5323 = vmatpush2.bf16.msra.mxu0 0
        %5324 = vmatprep.subr.bf16.mxu0 0
        %5325 = vmatpush2.bf16.msra.mxu0 0
        %5326 = vmatprep.subr.bf16.mxu0 0
        %5327 = vmatpush2.bf16.msra.mxu0 0
        %5328 = vmatprep.mubr.bf16.mxu0 0
        %5329 = vmatmul.mubr.bf16.gmra.mxu0 %v5249
        %v5330 = vpop.f32.mrf.mxu0
        %v5331 = vadd.f32 0.0, %v5330
        %v5332 = vpop.f32.mrf.mxu0
        %v5333 = vpop.f32.mrf.mxu0
        %v5334 = vadd.f32 0.0, %v5333
        %v5335 = vpop.f32.mrf.mxu0
        %5336 = vmatprep.mubr.bf16.mxu0 0
        %5337 = vmatmul.mubr.bf16.gmra.mxu0 %v5252
        %v5338 = vpop.f32.mrf.mxu0
        %v5339 = vadd.f32 0.0, %v5338
        %v5340 = vpop.f32.mrf.mxu0
        %v5341 = vpop.f32.mrf.mxu0
        %v5342 = vadd.f32 0.0, %v5341
        %v5343 = vpop.f32.mrf.mxu0
        %5344 = vmatprep.mubr.bf16.mxu0 0
        %5345 = vmatmul.mubr.bf16.gmra.mxu0 %v5255
        %v5346 = vpop.f32.mrf.mxu0
        %v5347 = vadd.f32 0.0, %v5346
        %v5348 = vpop.f32.mrf.mxu0
        %v5349 = vpop.f32.mrf.mxu0
        %v5350 = vadd.f32 0.0, %v5349
        %v5351 = vpop.f32.mrf.mxu0
        %5352 = vmatprep.mubr.bf16.mxu0 0
        %5353 = vmatmul.mubr.bf16.gmra.mxu0 %v5258
        %v5354 = vpop.f32.mrf.mxu0
        %v5355 = vadd.f32 0.0, %v5354
        %v5356 = vpop.f32.mrf.mxu0
        %v5357 = vpop.f32.mrf.mxu0
        %v5358 = vadd.f32 0.0, %v5357
        %v5359 = vpop.f32.mrf.mxu0
        %5360 = vmatprep.mubr.bf16.mxu0 0
        %5361 = vmatmul.mubr.bf16.gmra.mxu0 %v5261
        %v5362 = vpop.f32.mrf.mxu0
        %v5363 = vadd.f32 0.0, %v5362
        %v5364 = vpop.f32.mrf.mxu0
        %v5365 = vpop.f32.mrf.mxu0
        %v5366 = vadd.f32 0.0, %v5365
        %v5367 = vpop.f32.mrf.mxu0
        %5368 = vmatprep.mubr.bf16.mxu0 0
        %5369 = vmatmul.mubr.bf16.gmra.mxu0 %v5264
        %v5370 = vpop.f32.mrf.mxu0
        %v5371 = vadd.f32 0.0, %v5370
        %v5372 = vpop.f32.mrf.mxu0
        %v5373 = vpop.f32.mrf.mxu0
        %v5374 = vadd.f32 0.0, %v5373
        %v5375 = vpop.f32.mrf.mxu0
        %5376 = vmatprep.mubr.bf16.mxu0 0
        %5377 = vmatmul.mubr.bf16.gmra.mxu0 %v5267
        %v5378 = vpop.f32.mrf.mxu0
        %v5379 = vadd.f32 0.0, %v5378
        %v5380 = vpop.f32.mrf.mxu0
        %v5381 = vpop.f32.mrf.mxu0
        %v5382 = vadd.f32 0.0, %v5381
        %v5383 = vpop.f32.mrf.mxu0
        %5384 = vmatprep.mubr.bf16.mxu0 0
        %5385 = vmatmul.mubr.bf16.gmra.mxu0 %v5270
        %v5386 = vpop.f32.mrf.mxu0
        %v5387 = vadd.f32 0.0, %v5386
        %v5388 = vpop.f32.mrf.mxu0
        %v5389 = vpop.f32.mrf.mxu0
        %v5390 = vadd.f32 0.0, %v5389
        %v5391 = vpop.f32.mrf.mxu0
        %5392 = vmatprep.mubr.bf16.mxu0 0
        %5393 = vmatmul.mubr.bf16.gmra.mxu0 %v5273
        %v5394 = vpop.f32.mrf.mxu0
        %v5395 = vadd.f32 0.0, %v5394
        %v5396 = vpop.f32.mrf.mxu0
        %v5397 = vpop.f32.mrf.mxu0
        %v5398 = vadd.f32 0.0, %v5397
        %v5399 = vpop.f32.mrf.mxu0
        %5400 = vmatprep.mubr.bf16.mxu0 0
        %5401 = vmatmul.mubr.bf16.gmra.mxu0 %v5276
        %v5402 = vpop.f32.mrf.mxu0
        %v5403 = vadd.f32 0.0, %v5402
        %v5404 = vpop.f32.mrf.mxu0
        %v5405 = vpop.f32.mrf.mxu0
        %v5406 = vadd.f32 0.0, %v5405
        %v5407 = vpop.f32.mrf.mxu0
        %5408 = vmatprep.mubr.bf16.mxu0 0
        %5409 = vmatmul.mubr.bf16.gmra.mxu0 %v5279
        %v5410 = vpop.f32.mrf.mxu0
        %v5411 = vadd.f32 0.0, %v5410
        %v5412 = vpop.f32.mrf.mxu0
        %v5413 = vpop.f32.mrf.mxu0
        %v5414 = vadd.f32 0.0, %v5413
        %v5415 = vpop.f32.mrf.mxu0
        %5416 = vmatprep.mubr.bf16.mxu0 0
        %5417 = vmatmul.mubr.bf16.gmra.mxu0 %v5282
        %v5418 = vpop.f32.mrf.mxu0
        %v5419 = vadd.f32 0.0, %v5418
        %v5420 = vpop.f32.mrf.mxu0
        %v5421 = vpop.f32.mrf.mxu0
        %v5422 = vadd.f32 0.0, %v5421
        %v5423 = vpop.f32.mrf.mxu0
        %5424 = vmatprep.mubr.bf16.mxu0 0
        %5425 = vmatmul.mubr.bf16.gmra.mxu0 %v5285
        %v5426 = vpop.f32.mrf.mxu0
        %v5427 = vadd.f32 0.0, %v5426
        %v5428 = vpop.f32.mrf.mxu0
        %v5429 = vpop.f32.mrf.mxu0
        %v5430 = vadd.f32 0.0, %v5429
        %v5431 = vpop.f32.mrf.mxu0
        %5432 = vmatprep.mubr.bf16.mxu0 0
        %5433 = vmatmul.mubr.bf16.gmra.mxu0 %v5288
        %v5434 = vpop.f32.mrf.mxu0
        %v5435 = vadd.f32 0.0, %v5434
        %v5436 = vpop.f32.mrf.mxu0
        %v5437 = vpop.f32.mrf.mxu0
        %v5438 = vadd.f32 0.0, %v5437
        %v5439 = vpop.f32.mrf.mxu0
        %5440 = vmatprep.mubr.bf16.mxu0 0
        %5441 = vmatmul.mubr.bf16.gmra.mxu0 %v5291
        %v5442 = vpop.f32.mrf.mxu0
        %v5443 = vadd.f32 0.0, %v5442
        %v5444 = vpop.f32.mrf.mxu0
        %v5445 = vpop.f32.mrf.mxu0
        %v5446 = vadd.f32 0.0, %v5445
        %v5447 = vpop.f32.mrf.mxu0
        %5448 = vmatprep.mubr.bf16.mxu0 0
        %5449 = vmatmul.mubr.bf16.gmra.mxu0 %v5294
        %v5450 = vpop.f32.mrf.mxu0
        %v5451 = vadd.f32 0.0, %v5450
        %v5452 = vpop.f32.mrf.mxu0
        %v5453 = vpop.f32.mrf.mxu0
        %v5454 = vadd.f32 0.0, %v5453
        %v5455 = vpop.f32.mrf.mxu0
        %5456 = vdwg.mxu0
        %v5457 = vadd.f32 %v4975, %v5331
        %v5458 = vadd.f32 %v4976, %v5334
        %v5459 = vadd.f32 %v4977, %v5339
        %v5460 = vadd.f32 %v4978, %v5342
        %v5461 = vadd.f32 %v4979, %v5347
        %v5462 = vadd.f32 %v4980, %v5350
        %v5463 = vadd.f32 %v4981, %v5355
        %v5464 = vadd.f32 %v4982, %v5358
        %v5465 = vadd.f32 %v4983, %v5363
        %v5466 = vadd.f32 %v4984, %v5366
        %v5467 = vadd.f32 %v4985, %v5371
        %v5468 = vadd.f32 %v4986, %v5374
        %v5469 = vadd.f32 %v4987, %v5379
        %v5470 = vadd.f32 %v4988, %v5382
        %v5471 = vadd.f32 %v4989, %v5387
        %v5472 = vadd.f32 %v4990, %v5390
        %v5473 = vadd.f32 %v4991, %v5395
        %v5474 = vadd.f32 %v4992, %v5398
        %v5475 = vadd.f32 %v4993, %v5403
        %v5476 = vadd.f32 %v4994, %v5406
        %v5477 = vadd.f32 %v4995, %v5411
        %v5478 = vadd.f32 %v4996, %v5414
        %v5479 = vadd.f32 %v4997, %v5419
        %v5480 = vadd.f32 %v4998, %v5422
        %v5481 = vadd.f32 %v4999, %v5427
        %v5482 = vadd.f32 %v5000, %v5430
        %v5483 = vadd.f32 %v5001, %v5435
        %v5484 = vadd.f32 %v5002, %v5438
        %v5485 = vadd.f32 %v5003, %v5443
        %v5486 = vadd.f32 %v5004, %v5446
        %v5487 = vadd.f32 %v5005, %v5451
        %v5488 = vadd.f32 %v5006, %v5454
        %v5489 = vld [vmem:[%s2] sm:$0x1]
        %v5491 = vlaneseq
        %v5492 = vshrl.u32 %v5491, 7
        %v5493 = vsub.s32 0, %v5492
        %v5494 = vrot.slane %v5489, %v5493
        %v5496 = vadd.f32 %v5457, %v5494
        %v5497 = vadd.f32 %v5458, %v5494
        %v5498 = vadd.f32 %v5459, %v5494
        %v5499 = vadd.f32 %v5460, %v5494
        %v5500 = vadd.f32 %v5461, %v5494
        %v5501 = vadd.f32 %v5462, %v5494
        %v5502 = vadd.f32 %v5463, %v5494
        %v5503 = vadd.f32 %v5464, %v5494
        %v5504 = vadd.f32 %v5465, %v5494
        %v5505 = vadd.f32 %v5466, %v5494
        %v5506 = vadd.f32 %v5467, %v5494
        %v5507 = vadd.f32 %v5468, %v5494
        %v5508 = vadd.f32 %v5469, %v5494
        %v5509 = vadd.f32 %v5470, %v5494
        %v5510 = vadd.f32 %v5471, %v5494
        %v5511 = vadd.f32 %v5472, %v5494
        %v5512 = vadd.f32 %v5473, %v5494
        %v5513 = vadd.f32 %v5474, %v5494
        %v5514 = vadd.f32 %v5475, %v5494
        %v5515 = vadd.f32 %v5476, %v5494
        %v5516 = vadd.f32 %v5477, %v5494
        %v5517 = vadd.f32 %v5478, %v5494
        %v5518 = vadd.f32 %v5479, %v5494
        %v5519 = vadd.f32 %v5480, %v5494
        %v5520 = vadd.f32 %v5481, %v5494
        %v5521 = vadd.f32 %v5482, %v5494
        %v5522 = vadd.f32 %v5483, %v5494
        %v5523 = vadd.f32 %v5484, %v5494
        %v5524 = vadd.f32 %v5485, %v5494
        %v5525 = vadd.f32 %v5486, %v5494
        %v5526 = vadd.f32 %v5487, %v5494
        %v5527 = vadd.f32 %v5488, %v5494
        %v5528 = vmax.f32 %v5496, 0.0
        %v5529 = vmax.f32 %v5497, 0.0
        %v5530 = vmax.f32 %v5498, 0.0
        %v5531 = vmax.f32 %v5499, 0.0
        %v5532 = vmax.f32 %v5500, 0.0
        %v5533 = vmax.f32 %v5501, 0.0
        %v5534 = vmax.f32 %v5502, 0.0
        %v5535 = vmax.f32 %v5503, 0.0
        %v5536 = vmax.f32 %v5504, 0.0
        %v5537 = vmax.f32 %v5505, 0.0
        %v5538 = vmax.f32 %v5506, 0.0
        %v5539 = vmax.f32 %v5507, 0.0
        %v5540 = vmax.f32 %v5508, 0.0
        %v5541 = vmax.f32 %v5509, 0.0
        %v5542 = vmax.f32 %v5510, 0.0
        %v5543 = vmax.f32 %v5511, 0.0
        %v5544 = vmax.f32 %v5512, 0.0
        %v5545 = vmax.f32 %v5513, 0.0
        %v5546 = vmax.f32 %v5514, 0.0
        %v5547 = vmax.f32 %v5515, 0.0
        %v5548 = vmax.f32 %v5516, 0.0
        %v5549 = vmax.f32 %v5517, 0.0
        %v5550 = vmax.f32 %v5518, 0.0
        %v5551 = vmax.f32 %v5519, 0.0
        %v5552 = vmax.f32 %v5520, 0.0
        %v5553 = vmax.f32 %v5521, 0.0
        %v5554 = vmax.f32 %v5522, 0.0
        %v5555 = vmax.f32 %v5523, 0.0
        %v5556 = vmax.f32 %v5524, 0.0
        %v5557 = vmax.f32 %v5525, 0.0
        %v5558 = vmax.f32 %v5526, 0.0
        %v5559 = vmax.f32 %v5527, 0.0
        %v5560 = vld [vmem:[%s3] sm:$0x1]
        %s5561 = sld [smem:[#allocation3]]
        %v5562 = vstv %s5561
        %vm5563 = vcmask 64512
        %v5565 = vsel %vm5563, %v5560, 0
        %v5568 = vsel %vm5563, %v5528, 0
        %v5571 = vsel %vm5563, %v5529, 0
        %v5574 = vsel %vm5563, %v5530, 0
        %v5577 = vsel %vm5563, %v5531, 0
        %v5580 = vsel %vm5563, %v5532, 0
        %v5583 = vsel %vm5563, %v5533, 0
        %v5586 = vsel %vm5563, %v5534, 0
        %v5589 = vsel %vm5563, %v5535, 0
        %v5592 = vsel %vm5563, %v5536, 0
        %v5595 = vsel %vm5563, %v5537, 0
        %v5598 = vsel %vm5563, %v5538, 0
        %v5601 = vsel %vm5563, %v5539, 0
        %v5604 = vsel %vm5563, %v5540, 0
        %v5607 = vsel %vm5563, %v5541, 0
        %v5610 = vsel %vm5563, %v5542, 0
        %v5613 = vsel %vm5563, %v5543, 0
        %v5616 = vsel %vm5563, %v5544, 0
        %v5619 = vsel %vm5563, %v5545, 0
        %v5622 = vsel %vm5563, %v5546, 0
        %v5625 = vsel %vm5563, %v5547, 0
        %v5628 = vsel %vm5563, %v5548, 0
        %v5631 = vsel %vm5563, %v5549, 0
        %v5634 = vsel %vm5563, %v5550, 0
        %v5637 = vsel %vm5563, %v5551, 0
        %v5640 = vsel %vm5563, %v5552, 0
        %v5643 = vsel %vm5563, %v5553, 0
        %v5646 = vsel %vm5563, %v5554, 0
        %v5649 = vsel %vm5563, %v5555, 0
        %v5652 = vsel %vm5563, %v5556, 0
        %v5655 = vsel %vm5563, %v5557, 0
        %v5658 = vsel %vm5563, %v5558, 0
        %v5661 = vsel %vm5563, %v5559, 0
        %5663 = vmatprep.subr.mxu0 0.0
        %5664 = vmatpush1.xpose.msra.mxu0 %v5613
        %5665 = vmatprep.subr.mxu0 0.0
        %5666 = vmatpush1.xpose.msra.mxu0 %v5610
        %5667 = vmatprep.subr.mxu0 0.0
        %5668 = vmatpush1.xpose.msra.mxu0 %v5607
        %5669 = vmatprep.subr.mxu0 0.0
        %5670 = vmatpush1.xpose.msra.mxu0 %v5604
        %5671 = vmatprep.subr.mxu0 0.0
        %5672 = vmatpush1.xpose.msra.mxu0 %v5601
        %5673 = vmatprep.subr.mxu0 0.0
        %5674 = vmatpush1.xpose.msra.mxu0 %v5598
        %5675 = vmatprep.subr.mxu0 0.0
        %5676 = vmatpush1.xpose.msra.mxu0 %v5595
        %5677 = vmatprep.subr.mxu0 0.0
        %5678 = vmatpush1.xpose.msra.mxu0 %v5592
        %5679 = vmatprep.subr.mxu0 0.0
        %5680 = vmatpush1.xpose.msra.mxu0 %v5589
        %5681 = vmatprep.subr.mxu0 0.0
        %5682 = vmatpush1.xpose.msra.mxu0 %v5586
        %5683 = vmatprep.subr.mxu0 0.0
        %5684 = vmatpush1.xpose.msra.mxu0 %v5583
        %5685 = vmatprep.subr.mxu0 0.0
        %5686 = vmatpush1.xpose.msra.mxu0 %v5580
        %5687 = vmatprep.subr.mxu0 0.0
        %5688 = vmatpush1.xpose.msra.mxu0 %v5577
        %5689 = vmatprep.subr.mxu0 0.0
        %5690 = vmatpush1.xpose.msra.mxu0 %v5574
        %5691 = vmatprep.subr.mxu0 0.0
        %5692 = vmatpush1.xpose.msra.mxu0 %v5571
        %5693 = vmatprep.subr.mxu0 0.0
        %5694 = vmatpush1.xpose.msra.mxu0 %v5568
        %5695 = vmatprep.subr.mxu0 0.0
        %5696 = vmatpush2.xpose.msra.mxu0 %v5661
        %5697 = vmatprep.subr.mxu0 0.0
        %5698 = vmatpush2.xpose.msra.mxu0 %v5658
        %5699 = vmatprep.subr.mxu0 0.0
        %5700 = vmatpush2.xpose.msra.mxu0 %v5655
        %5701 = vmatprep.subr.mxu0 0.0
        %5702 = vmatpush2.xpose.msra.mxu0 %v5652
        %5703 = vmatprep.subr.mxu0 0.0
        %5704 = vmatpush2.xpose.msra.mxu0 %v5649
        %5705 = vmatprep.subr.mxu0 0.0
        %5706 = vmatpush2.xpose.msra.mxu0 %v5646
        %5707 = vmatprep.subr.mxu0 0.0
        %5708 = vmatpush2.xpose.msra.mxu0 %v5643
        %5709 = vmatprep.subr.mxu0 0.0
        %5710 = vmatpush2.xpose.msra.mxu0 %v5640
        %5711 = vmatprep.subr.mxu0 0.0
        %5712 = vmatpush2.xpose.msra.mxu0 %v5637
        %5713 = vmatprep.subr.mxu0 0.0
        %5714 = vmatpush2.xpose.msra.mxu0 %v5634
        %5715 = vmatprep.subr.mxu0 0.0
        %5716 = vmatpush2.xpose.msra.mxu0 %v5631
        %5717 = vmatprep.subr.mxu0 0.0
        %5718 = vmatpush2.xpose.msra.mxu0 %v5628
        %5719 = vmatprep.subr.mxu0 0.0
        %5720 = vmatpush2.xpose.msra.mxu0 %v5625
        %5721 = vmatprep.subr.mxu0 0.0
        %5722 = vmatpush2.xpose.msra.mxu0 %v5622
        %5723 = vmatprep.subr.mxu0 0.0
        %5724 = vmatpush2.xpose.msra.mxu0 %v5619
        %5725 = vmatprep.subr.mxu0 0.0
        %5726 = vmatpush2.xpose.msra.mxu0 %v5616
        %5727 = vmatprep.mubr.f32.mxu0 0.0
        %5728 = vmatmul.mubr.f32.gmra.mxu0 %v5565
        %v5729 = vpop.f32.mrf.mxu0
        %v5730 = vadd.f32 %v5562, %v5729
        %v5731 = vpop.f32.mrf.mxu0
        %v5732 = vadd.f32 %v5562, %v5731
        %5733 = vdwg.mxu0
        %v5736 = vcombine.low %v5730, %v5732
        %v5738 = vunpack.c.l.s4 1966171168
        %v5739 = vunpack.c.0.s8 %v5738
        %v5740 = vlaneseq
        %v5741 = vshrl.u32 %v5740, 7
        %v5742 = vsub.s32 %v5739, %v5741
        %v5743 = vrot.slane %v5736, %v5742
        %v5745 = vunpack.c.l.s4 1966171168
        %v5746 = vunpack.c.0.s8 %v5745
        %v5747 = vlaneseq
        %v5748 = vshrl.u32 %v5747, 7
        %v5749 = vsub.s32 %v5746, %v5748
        %v5750 = vrot.slane %v5743, %v5749
        %v5752 = vlaneseq
        %vm5753 = vcmp.ge.s32.totalorder %v5752, 0
        %vm5754 = vcmp.lt.s32.totalorder %v5752, 256
        %vm5755 = vmand %vm5753, %vm5754
        %5756 = vst.msk [vmem:[%s243] sm:$0x3] %vm5755, %v5750
        %s5757 = sand.u32 %s141, 1
        %s5758 = scalar_lea.sflag [#allocation6], %s5757
        %s5759 = sand.u32 %s141, 1
        %s5760 = smul.addr %s5759, 2
        %s5761 = scalar_lea.vmem [#allocation7], %s5760
        // Predicated region
        $region45: #{tpu_custom_call.1} parent=39 // pred_check
          %p5762 = pneg %p151
        $region46: #{tpu_custom_call.1} parent=39 // pred_check_branch
          %5764 = sbr.rel (%p5762) target = $region48
        $region47: #{tpu_custom_call.1} parent=39 // pred_region
          %s5766 = ssub.s32 32, 32
          %5767 = vsyncadd %s5758, %s5766
          %s5768 = smul.addr %s23, 2
          %s5769 = smul.addr %s5768, 16
          %s5770 = scalar_lea.hbm %s5, %s5769
          %s5772 = sshll.u32 %s5761, 4
          %s5773 = int_to_ptr.vmem [resolvable:$true] %s5772
          %5775 = dma.vmem_to_hbm [thread:$0]  %s5773, 32, %s5770, %s5758
        $region48: #{tpu_custom_call.1} parent=39 // pred_fallthru
          _
      $region40: #{tpu_custom_call.1} parent=5 // pred_fallthru
        _
      %p5776 = scmp.le.s32.totalorder 2, %s18
      // Predicated region
      $region49: #{tpu_custom_call.1} parent=5 // pred_check
        %p5777 = pneg %p5776
      $region50: #{tpu_custom_call.1} parent=5 // pred_check_branch
        %5779 = sbr.rel (%p5777) target = $region52
      $region51: #{tpu_custom_call.1} parent=5 // pred_region
        %s5780 = ssub.s32 %s18, 2
        // Predicated region
        $region53: #{tpu_custom_call.1} parent=51 // pred_check
          %p5781 = pneg %p157
        $region54: #{tpu_custom_call.1} parent=51 // pred_check_branch
          %5783 = sbr.rel (%p5781) target = $region56
        $region55: #{tpu_custom_call.1} parent=51 // pred_region
          %s5784 = sand.u32 %s142, 1
          %s5785 = scalar_lea.sflag [#allocation6], %s5784
          %s5786 = sand.u32 %s142, 1
          %s5787 = smul.addr %s5786, 2
          %s5788 = scalar_lea.vmem [#allocation7], %s5787
          %5789 = dma.done %s5785, 32
        $region56: #{tpu_custom_call.1} parent=51 // pred_fallthru
          _
      $region52: #{tpu_custom_call.1} parent=5 // pred_fallthru
        _
    $region6: #{tpu_custom_call.1} parent=1 // loop_footer
      %s22 = sadd.s32 1, %s18
    $region7: #{tpu_custom_call.1} parent=1 // loop_footer_branch
      %17 = sbr.rel target = $region3
    $region8: #{tpu_custom_call.1} parent=1 // loop_exit
      _
    %5790 = vsyncpa [#allocation5], 1
    %s5791 = scalar_lea.sflag [#allocation5], 1
    %5792 = vsyncpa %s5791, 1
    %5793 = vsyncpa [#allocation6], 1
    %s5794 = scalar_lea.sflag [#allocation6], 1
    %5795 = vsyncpa %s5794, 1

</llo_original>
